<compile_context>
chip_gen: v7x
topology: tpu7x:2x2x1
jax: 0.10.0
libtpu: 0.0.40
codegen_flags: <defaults>
</compile_context>

<pallas_src>
import functools

import jax
import jax.numpy as jnp
from jax.experimental import pallas as pl
from jax.experimental.pallas import tpu as pltpu


_VMEM_LIMIT = 48 * 1024 * 1024  # leave headroom for v7x's 64 MiB physical VMEM


# ----------------------------------------------------------------------------
# Small helpers
# ----------------------------------------------------------------------------
def _round_up(x, m):
    return (x + m - 1) // m * m


def _out_size(h, k, s, p):
    return (h + 2 * p - k) // s + 1


def _pick_tile(n, cap, mult):
    """Largest tile <= cap that divides n and is a multiple of `mult`.

    Falls back to the full extent `n` (a full-dim block is always legal)."""
    if n <= cap:
        return n
    t = (cap // mult) * mult
    while t >= mult:
        if n % t == 0:
            return t
        t -= mult
    return n


# ----------------------------------------------------------------------------
# Pallas kernels
# ----------------------------------------------------------------------------
def _matmul_stats_kernel(p_ref, w_ref, z_ref, sum_ref, sq_ref):
    """Pass 1: im2col conv matmul tile + per-channel batch-stat accumulation.

    p_ref:   (tm, K)   bf16 im2col patch tile
    w_ref:   (K, Cp)   bf16 weight (resident across the M grid axis)
    z_ref:   (tm, Cp)  f32 pre-BN conv output tile
    sum_ref: (1, Cp)   f32 running per-channel sum   (resident accumulator)
    sq_ref:  (1, Cp)   f32 running per-channel sumsq (resident accumulator)
    """
    i = pl.program_id(0)
    z = jnp.dot(p_ref[...], w_ref[...], preferred_element_type=jnp.float32)
    z_ref[...] = z

    @pl.when(i == 0)
    def _():
        sum_ref[...] = jnp.zeros_like(sum_ref)
        sq_ref[...] = jnp.zeros_like(sq_ref)

    sum_ref[...] += jnp.sum(z, axis=0, keepdims=True)
    sq_ref[...] += jnp.sum(z * z, axis=0, keepdims=True)


def _bn_relu_kernel(z_ref, scale_ref, bias_ref, o_ref):
    """Pass 2: y = relu(z * scale + bias) with pre-folded per-channel scale/bias."""
    o_ref[...] = jnp.maximum(
        z_ref[...] * scale_ref[...] + bias_ref[...], 0.0
    ).astype(o_ref.dtype)


def _maxpool_kernel(w_ref, o_ref):
    """Max over the 9 window taps.  w_ref: (KK, tf) -> o_ref: (1, tf)."""
    kk = w_ref.shape[0]
    acc = w_ref[0:1, :]
    for t in range(1, kk):          # small fixed unroll (KK = 9), pure VPU max
        acc = jnp.maximum(acc, w_ref[t:t + 1, :])
    o_ref[...] = acc


# ----------------------------------------------------------------------------
# pallas_call wrappers
# ----------------------------------------------------------------------------
def conv_bn_relu(patches_bf16, w2d_bf16, gamma_p, beta_p, *, eps=1e-3,
                 tile_m_cap=512):
    """Fused (im2col) conv + training-mode BatchNorm + ReLU, two Pallas passes."""
    M, K = patches_bf16.shape
    Cp = w2d_bf16.shape[1]
    tm = _pick_tile(M, tile_m_cap, 8)
    grid = (M // tm,)

    # ---- pass 1: matmul + batch-stat accumulation (reduction over M tiles) ----
    z, s1, s2 = pl.pallas_call(
        _matmul_stats_kernel,
        out_shape=(
            jax.ShapeDtypeStruct((M, Cp), jnp.float32),
            jax.ShapeDtypeStruct((1, Cp), jnp.float32),
            jax.ShapeDtypeStruct((1, Cp), jnp.float32),
        ),
        grid=grid,
        in_specs=[
            pl.BlockSpec((tm, K), lambda i: (i, 0)),
            pl.BlockSpec((K, Cp), lambda i: (0, 0)),
        ],
        out_specs=(
            pl.BlockSpec((tm, Cp), lambda i: (i, 0)),
            pl.BlockSpec((1, Cp), lambda i: (0, 0)),
            pl.BlockSpec((1, Cp), lambda i: (0, 0)),
        ),
        compiler_params=pltpu.CompilerParams(
            dimension_semantics=("arbitrary",),
            vmem_limit_bytes=_VMEM_LIMIT),
    )(patches_bf16, w2d_bf16)

    # ---- tiny per-channel fold in plain JAX (O(Cout) work) ----
    mean = s1 / M
    var = jnp.maximum(s2 / M - mean * mean, 0.0)   # biased variance, f32
    inv = jax.lax.rsqrt(var + eps)
    scale = gamma_p.reshape(1, -1) * inv
    bias = beta_p.reshape(1, -1) - mean * scale

    # ---- pass 2: normalize + ReLU, fully parallel over M tiles ----
    out = pl.pallas_call(
        _bn_relu_kernel,
        out_shape=jax.ShapeDtypeStruct((M, Cp), jnp.float32),
        grid=grid,
        in_specs=[
            pl.BlockSpec((tm, Cp), lambda i: (i, 0)),
            pl.BlockSpec((1, Cp), lambda i: (0, 0)),
            pl.BlockSpec((1, Cp), lambda i: (0, 0)),
        ],
        out_specs=pl.BlockSpec((tm, Cp), lambda i: (i, 0)),
        compiler_params=pltpu.CompilerParams(
            dimension_semantics=("parallel",),
            vmem_limit_bytes=_VMEM_LIMIT),
    )(z, scale, bias)
    return out


def maxpool_reduce(windows):
    """Tiled elementwise max over the 9 taps.  windows: (9, M, C) -> (M, C)."""
    KK, M, C = windows.shape
    F = M * C
    wflat = windows.reshape(KK, F)             # lane-dense flat layout
    tf = _pick_tile(F, 64 * 1024, 128)
    grid = (F // tf,)
    out = pl.pallas_call(
        _maxpool_kernel,
        out_shape=jax.ShapeDtypeStruct((1, F), jnp.float32),
        grid=grid,
        in_specs=[pl.BlockSpec((KK, tf), lambda i: (0, i))],
        out_specs=pl.BlockSpec((1, tf), lambda i: (0, i)),
        compiler_params=pltpu.CompilerParams(
            dimension_semantics=("parallel",),
            vmem_limit_bytes=_VMEM_LIMIT),
    )(wflat)
    return out.reshape(M, C)


# ----------------------------------------------------------------------------
# Glue: im2col / window extraction (plain JAX data movement)
# ----------------------------------------------------------------------------
# TODO(synk): eliminate the im2col / pool-window HBM materialization by
# reading the 9 strided taps of the padded NHWC input directly inside the
# kernels via manual DMA (memory_space=pl.ANY); kept as XLA glue here.
def im2col(x_nhwc, kh, kw, stride, padding, dtype=jnp.bfloat16):
    N, H, W, C = x_nhwc.shape
    Ho = _out_size(H, kh, stride, padding)
    Wo = _out_size(W, kw, stride, padding)
    xp = jnp.pad(x_nhwc, ((0, 0), (padding, padding), (padding, padding), (0, 0)))
    xp = xp.astype(dtype)                      # bf16 early: halves patch traffic
    cols = []
    for i in range(kh):
        for j in range(kw):
            sl = jax.lax.slice(
                xp, (0, i, j, 0),
                (N, i + (Ho - 1) * stride + 1, j + (Wo - 1) * stride + 1, C),
                (1, stride, stride, 1))
            cols.append(sl)                    # (N, Ho, Wo, C)
    patches = jnp.concatenate(cols, axis=-1).reshape(N * Ho * Wo, kh * kw * C)
    return patches, (N, Ho, Wo)


def pool_windows(x_nhwc, k, stride, padding):
    N, H, W, C = x_nhwc.shape
    Ho = _out_size(H, k, stride, padding)
    Wo = _out_size(W, k, stride, padding)
    xp = jnp.pad(x_nhwc, ((0, 0), (padding, padding), (padding, padding), (0, 0)),
                 constant_values=-jnp.inf)     # max_pool2d pads with -inf
    wins = []
    for i in range(k):
        for j in range(k):
            sl = jax.lax.slice(
                xp, (0, i, j, 0),
                (N, i + (Ho - 1) * stride + 1, j + (Wo - 1) * stride + 1, C),
                (1, stride, stride, 1))
            wins.append(sl.reshape(N * Ho * Wo, C))
    return jnp.stack(wins, axis=0), (N, Ho, Wo)


def basic_conv2d(x_nhwc, params, *, k, stride, padding, cout, eps=1e-3):
    """Conv2d(bias=False) + BatchNorm2d(eps=1e-3, batch stats) + ReLU."""
    patches, (N, Ho, Wo) = im2col(x_nhwc, k, k, stride, padding)
    out_p = conv_bn_relu(patches, params["w2d"], params["gamma_p"],
                         params["beta_p"], eps=eps)
    return out_p[:, :cout].reshape(N, Ho, Wo, cout)   # drop lane padding


# ----------------------------------------------------------------------------
# InceptionB forward
# ----------------------------------------------------------------------------
def inception_b_forward(x_nchw, params, *, kernel_size=3, stride=2, padding=1):
    x = jnp.transpose(x_nchw, (0, 2, 3, 1))               # NCHW -> NHWC
    C = x.shape[-1]

    # branch3x3: BasicConv2d(in, 384, k, stride, padding)
    b3x3 = basic_conv2d(x, params["b3x3"], k=kernel_size, stride=stride,
                        padding=padding, cout=384)

    # branch3x3dbl: 1x1 -> 3x3(pad 1) -> 3x3(stride, padding)
    d = basic_conv2d(x, params["dbl1"], k=1, stride=1, padding=0, cout=64)
    d = basic_conv2d(d, params["dbl2"], k=3, stride=1, padding=1, cout=96)
    d = basic_conv2d(d, params["dbl3"], k=3, stride=stride, padding=padding,
                     cout=96)

    # branch_pool: max_pool2d(k=3, stride=self.stride, padding=1)
    wins, (N, Ho, Wo) = pool_windows(x, 3, stride, 1)
    bpool = maxpool_reduce(wins).reshape(N, Ho, Wo, C)

    out = jnp.concatenate([b3x3, d, bpool], axis=-1)       # channel concat
    return jnp.transpose(out, (0, 3, 1, 2))                 # NHWC -> NCHW


# ----------------------------------------------------------------------------
# Parameter init (synthetic; shapes follow the module __init__).  Weights are
# pre-transformed to (K, Cout_pad) bf16 and BN params pre-padded once, here,
# outside the per-step forward.
# ----------------------------------------------------------------------------
def _prepare_basic_conv(w, gamma, beta, *, cin, cout, k):
    cout_p = _round_up(cout, 128)
    # PyTorch weight (Cout, Cin, KH, KW) -> (KH, KW, Cin, Cout) -> (K, Cout)
    w2d = jnp.transpose(w, (2, 3, 1, 0)).reshape(k * k * cin, cout)
    w2d = jnp.pad(w2d, ((0, 0), (0, cout_p - cout))).astype(jnp.bfloat16)
    gamma_p = jnp.pad(gamma, (0, cout_p - cout)).astype(jnp.float32)
    beta_p = jnp.pad(beta, (0, cout_p - cout)).astype(jnp.float32)
    return {"w2d": w2d, "gamma_p": gamma_p, "beta_p": beta_p}


def init_basic_conv(key, cin, cout, k):
    k1, k2, k3 = jax.random.split(key, 3)
    w = 0.1 * jax.random.normal(k1, (cout, cin, k, k), jnp.float32)
    gamma = 1.0 + 0.1 * jax.random.normal(k2, (cout,), jnp.float32)
    beta = 0.1 * jax.random.normal(k3, (cout,), jnp.float32)
    return _prepare_basic_conv(w, gamma, beta, cin=cin, cout=cout, k=k)


def init_inception_b(key, in_channels, kernel_size=3):
    k1, k2, k3, k4 = jax.random.split(key, 4)
    return {
        "b3x3": init_basic_conv(k1, in_channels, 384, kernel_size),
        "dbl1": init_basic_conv(k2, in_channels, 64, 1),
        "dbl2": init_basic_conv(k3, 64, 96, 3),
        "dbl3": init_basic_conv(k4, 96, 96, 3),
    }


# TODO(synk): running BN statistics (running_mean/var) are not updated; only
# training-mode batch-stat normalization (matching the reference forward) is
# implemented.


if __name__ == "__main__":
    N, C, H, W = 2, 4, 16, 16
    kernel_size, stride, padding = 3, 2, 1   # padding=1 so the branches concat

    key = jax.random.PRNGKey(0)
    kx, kp = jax.random.split(key)
    x = jax.random.normal(kx, (N, C, H, W), jnp.float32)
    params = init_inception_b(kp, C, kernel_size)

    fwd = jax.jit(functools.partial(inception_b_forward,
                                    kernel_size=kernel_size,
                                    stride=stride, padding=padding))
    out = fwd(x, params)
    out = jax.block_until_ready(out)

    Ho = (H + 2 * padding - kernel_size) // stride + 1
    expected = (N, 384 + 96 + C, Ho, Ho)
    assert out.shape == expected, (out.shape, expected)
    assert bool(jnp.all(jnp.isfinite(out)))
    print("KERNEL_OK")
</pallas_src>

<mosaic_0001>
module attributes {stable_mosaic.version = 11 : i64} {
  func.func @_maxpool_kernel(%arg0: i32, %arg1: memref<9x512xf32, #tpu.memory_space<vmem>>, %arg2: memref<1x512xf32, #tpu.memory_space<vmem>>) attributes {dimension_semantics = [#tpu.dimension_semantics<parallel>], iteration_bounds = array<i64: 1>, scalar_prefetch = 0 : i64, scratch_operands = 0 : i64, tpu.core_type = #tpu.core_type<tc>, window_params = [{transform_indices = @transform_0, window_bounds = array<i64: 9, 512>}, {transform_indices = @transform_1, window_bounds = array<i64: 1, 512>}]} {
    %c0 = arith.constant 0 : index
    %c0_0 = arith.constant 0 : index
    %0 = vector.load %arg1[%c0, %c0_0] : memref<9x512xf32, #tpu.memory_space<vmem>>, vector<1x512xf32>
    %c1 = arith.constant 1 : index
    %c0_1 = arith.constant 0 : index
    %1 = vector.load %arg1[%c1, %c0_1] : memref<9x512xf32, #tpu.memory_space<vmem>>, vector<1x512xf32>
    %2 = arith.maximumf %0, %1 : vector<1x512xf32>
    %c2 = arith.constant 2 : index
    %c0_2 = arith.constant 0 : index
    %3 = vector.load %arg1[%c2, %c0_2] : memref<9x512xf32, #tpu.memory_space<vmem>>, vector<1x512xf32>
    %4 = arith.maximumf %2, %3 : vector<1x512xf32>
    %c3 = arith.constant 3 : index
    %c0_3 = arith.constant 0 : index
    %5 = vector.load %arg1[%c3, %c0_3] : memref<9x512xf32, #tpu.memory_space<vmem>>, vector<1x512xf32>
    %6 = arith.maximumf %4, %5 : vector<1x512xf32>
    %c4 = arith.constant 4 : index
    %c0_4 = arith.constant 0 : index
    %7 = vector.load %arg1[%c4, %c0_4] : memref<9x512xf32, #tpu.memory_space<vmem>>, vector<1x512xf32>
    %8 = arith.maximumf %6, %7 : vector<1x512xf32>
    %c5 = arith.constant 5 : index
    %c0_5 = arith.constant 0 : index
    %9 = vector.load %arg1[%c5, %c0_5] : memref<9x512xf32, #tpu.memory_space<vmem>>, vector<1x512xf32>
    %10 = arith.maximumf %8, %9 : vector<1x512xf32>
    %c6 = arith.constant 6 : index
    %c0_6 = arith.constant 0 : index
    %11 = vector.load %arg1[%c6, %c0_6] : memref<9x512xf32, #tpu.memory_space<vmem>>, vector<1x512xf32>
    %12 = arith.maximumf %10, %11 : vector<1x512xf32>
    %c7 = arith.constant 7 : index
    %c0_7 = arith.constant 0 : index
    %13 = vector.load %arg1[%c7, %c0_7] : memref<9x512xf32, #tpu.memory_space<vmem>>, vector<1x512xf32>
    %14 = arith.maximumf %12, %13 : vector<1x512xf32>
    %c8 = arith.constant 8 : index
    %c0_8 = arith.constant 0 : index
    %15 = vector.load %arg1[%c8, %c0_8] : memref<9x512xf32, #tpu.memory_space<vmem>>, vector<1x512xf32>
    %16 = arith.maximumf %14, %15 : vector<1x512xf32>
    %c0_9 = arith.constant 0 : index
    %c0_10 = arith.constant 0 : index
    %17 = vector.load %arg2[%c0_9, %c0_10] : memref<1x512xf32, #tpu.memory_space<vmem>>, vector<1x512xf32>
    tpu.vector_store %arg2[%c0_9, %c0_10], %16 {strides = array<i32>} : memref<1x512xf32, #tpu.memory_space<vmem>>, vector<1x512xf32>,
    return
  }
  func.func @transform_0(%arg0: i32) -> (i32, i32) {
    %c0_i32 = arith.constant 0 : i32
    %c0_i32_0 = arith.constant 0 : i32
    return %c0_i32, %arg0 : i32, i32
  }
  func.func @transform_1(%arg0: i32) -> (i32, i32) {
    %c0_i32 = arith.constant 0 : i32
    %c0_i32_0 = arith.constant 0 : i32
    return %c0_i32, %arg0 : i32, i32
  }
}

module attributes {stable_mosaic.version = 11 : i64} {
  func.func @_matmul_stats_kernel(%arg0: i32, %arg1: memref<512x4xbf16, #tpu.memory_space<vmem>>, %arg2: memref<4x128xbf16, #tpu.memory_space<vmem>>, %arg3: memref<512x128xf32, #tpu.memory_space<vmem>>, %arg4: memref<1x128xf32, #tpu.memory_space<vmem>>, %arg5: memref<1x128xf32, #tpu.memory_space<vmem>>) attributes {dimension_semantics = [#tpu.dimension_semantics<arbitrary>], iteration_bounds = array<i64: 1>, scalar_prefetch = 0 : i64, scratch_operands = 0 : i64, tpu.core_type = #tpu.core_type<tc>, window_params = [{transform_indices = @transform_0, window_bounds = array<i64: 512, 4>}, {pipeline_mode = #tpu.pipeline_mode<synchronous>, transform_indices = @transform_1, window_bounds = array<i64: 4, 128>}, {transform_indices = @transform_2, window_bounds = array<i64: 512, 128>}, {pipeline_mode = #tpu.pipeline_mode<synchronous>, transform_indices = @transform_3, window_bounds = array<i64: 1, 128>}, {pipeline_mode = #tpu.pipeline_mode<synchronous>, transform_indices = @transform_4, window_bounds = array<i64: 1, 128>}]} {
    %c0 = arith.constant 0 : index
    %c0_0 = arith.constant 0 : index
    %0 = vector.load %arg1[%c0, %c0_0] : memref<512x4xbf16, #tpu.memory_space<vmem>>, vector<512x4xbf16>
    %c0_1 = arith.constant 0 : index
    %c0_2 = arith.constant 0 : index
    %1 = vector.load %arg2[%c0_1, %c0_2] : memref<4x128xbf16, #tpu.memory_space<vmem>>, vector<4x128xbf16>
    %cst = arith.constant dense<0.000000e+00> : vector<512x128xf32>
    %2 = tpu.matmul %0, %1, %cst {dimension_numbers = #tpu.dot_dimension_numbers<[1], [0], [0], [1], [0, 0, 1, 1], [], []>} : vector<512x4xbf16>, vector<4x128xbf16>, vector<512x128xf32> -> vector<512x128xf32>
    %c0_3 = arith.constant 0 : index
    %c0_4 = arith.constant 0 : index
    %3 = vector.load %arg3[%c0_3, %c0_4] : memref<512x128xf32, #tpu.memory_space<vmem>>, vector<512x128xf32>
    tpu.vector_store %arg3[%c0_3, %c0_4], %2 {strides = array<i32>} : memref<512x128xf32, #tpu.memory_space<vmem>>, vector<512x128xf32>,
    %c0_i32 = arith.constant 0 : i32
    %4 = arith.cmpi eq, %arg0, %c0_i32 : i32
    %5 = arith.extui %4 : i1 to i32
    %c0_i32_5 = arith.constant 0 : i32
    %6 = arith.cmpi ne, %5, %c0_i32_5 : i32
    scf.if %6 {
      %cst_16 = arith.constant 0.000000e+00 : f32
      %18 = vector.broadcast %cst_16 : f32 to vector<1x128xf32>
      %c0_17 = arith.constant 0 : index
      %c0_18 = arith.constant 0 : index
      %19 = vector.load %arg4[%c0_17, %c0_18] : memref<1x128xf32, #tpu.memory_space<vmem>>, vector<1x128xf32>
      tpu.vector_store %arg4[%c0_17, %c0_18], %18 {strides = array<i32>} : memref<1x128xf32, #tpu.memory_space<vmem>>, vector<1x128xf32>,
      %cst_19 = arith.constant 0.000000e+00 : f32
      %20 = vector.broadcast %cst_19 : f32 to vector<1x128xf32>
      %c0_20 = arith.constant 0 : index
      %c0_21 = arith.constant 0 : index
      %21 = vector.load %arg5[%c0_20, %c0_21] : memref<1x128xf32, #tpu.memory_space<vmem>>, vector<1x128xf32>
      tpu.vector_store %arg5[%c0_20, %c0_21], %20 {strides = array<i32>} : memref<1x128xf32, #tpu.memory_space<vmem>>, vector<1x128xf32>,
    } else {
    }
    %c0_6 = arith.constant 0 : index
    %c0_7 = arith.constant 0 : index
    %7 = vector.load %arg4[%c0_6, %c0_7] : memref<1x128xf32, #tpu.memory_space<vmem>>, vector<1x128xf32>
    %cst_8 = arith.constant dense<0.000000e+00> : vector<128xf32>
    %8 = vector.multi_reduction <add>, %2, %cst_8 [0] : vector<512x128xf32> to vector<128xf32>
    %9 = vector.shape_cast %8 : vector<128xf32> to vector<1x128xf32>
    %10 = arith.addf %7, %9 : vector<1x128xf32>
    %c0_9 = arith.constant 0 : index
    %c0_10 = arith.constant 0 : index
    %11 = vector.load %arg4[%c0_9, %c0_10] : memref<1x128xf32, #tpu.memory_space<vmem>>, vector<1x128xf32>
    tpu.vector_store %arg4[%c0_9, %c0_10], %10 {strides = array<i32>} : memref<1x128xf32, #tpu.memory_space<vmem>>, vector<1x128xf32>,
    %c0_11 = arith.constant 0 : index
    %c0_12 = arith.constant 0 : index
    %12 = vector.load %arg5[%c0_11, %c0_12] : memref<1x128xf32, #tpu.memory_space<vmem>>, vector<1x128xf32>
    %13 = arith.mulf %2, %2 : vector<512x128xf32>
    %cst_13 = arith.constant dense<0.000000e+00> : vector<128xf32>
    %14 = vector.multi_reduction <add>, %13, %cst_13 [0] : vector<512x128xf32> to vector<128xf32>
    %15 = vector.shape_cast %14 : vector<128xf32> to vector<1x128xf32>
    %16 = arith.addf %12, %15 : vector<1x128xf32>
    %c0_14 = arith.constant 0 : index
    %c0_15 = arith.constant 0 : index
    %17 = vector.load %arg5[%c0_14, %c0_15] : memref<1x128xf32, #tpu.memory_space<vmem>>, vector<1x128xf32>
    tpu.vector_store %arg5[%c0_14, %c0_15], %16 {strides = array<i32>} : memref<1x128xf32, #tpu.memory_space<vmem>>, vector<1x128xf32>,
    return
  }
  func.func @transform_0(%arg0: i32) -> (i32, i32) {
    %c0_i32 = arith.constant 0 : i32
    %c0_i32_0 = arith.constant 0 : i32
    return %arg0, %c0_i32 : i32, i32
  }
  func.func @transform_1(%arg0: i32) -> (i32, i32) {
    %c0_i32 = arith.constant 0 : i32
    %c0_i32_0 = arith.constant 0 : i32
    %c0_i32_1 = arith.constant 0 : i32
    return %c0_i32, %c0_i32_0 : i32, i32
  }
  func.func @transform_2(%arg0: i32) -> (i32, i32) {
    %c0_i32 = arith.constant 0 : i32
    %c0_i32_0 = arith.constant 0 : i32
    return %arg0, %c0_i32 : i32, i32
  }
  func.func @transform_3(%arg0: i32) -> (i32, i32) {
    %c0_i32 = arith.constant 0 : i32
    %c0_i32_0 = arith.constant 0 : i32
    %c0_i32_1 = arith.constant 0 : i32
    return %c0_i32, %c0_i32_0 : i32, i32
  }
  func.func @transform_4(%arg0: i32) -> (i32, i32) {
    %c0_i32 = arith.constant 0 : i32
    %c0_i32_0 = arith.constant 0 : i32
    %c0_i32_1 = arith.constant 0 : i32
    return %c0_i32, %c0_i32_0 : i32, i32
  }
}

module attributes {stable_mosaic.version = 11 : i64} {
  func.func @_bn_relu_kernel(%arg0: i32, %arg1: memref<512x128xf32, #tpu.memory_space<vmem>>, %arg2: memref<1x128xf32, #tpu.memory_space<vmem>>, %arg3: memref<1x128xf32, #tpu.memory_space<vmem>>, %arg4: memref<512x128xf32, #tpu.memory_space<vmem>>) attributes {dimension_semantics = [#tpu.dimension_semantics<parallel>], iteration_bounds = array<i64: 1>, scalar_prefetch = 0 : i64, scratch_operands = 0 : i64, tpu.core_type = #tpu.core_type<tc>, window_params = [{transform_indices = @transform_0, window_bounds = array<i64: 512, 128>}, {pipeline_mode = #tpu.pipeline_mode<synchronous>, transform_indices = @transform_1, window_bounds = array<i64: 1, 128>}, {pipeline_mode = #tpu.pipeline_mode<synchronous>, transform_indices = @transform_2, window_bounds = array<i64: 1, 128>}, {transform_indices = @transform_3, window_bounds = array<i64: 512, 128>}]} {
    %c0 = arith.constant 0 : index
    %c0_0 = arith.constant 0 : index
    %0 = vector.load %arg1[%c0, %c0_0] : memref<512x128xf32, #tpu.memory_space<vmem>>, vector<512x128xf32>
    %c0_1 = arith.constant 0 : index
    %c0_2 = arith.constant 0 : index
    %1 = vector.load %arg2[%c0_1, %c0_2] : memref<1x128xf32, #tpu.memory_space<vmem>>, vector<1x128xf32>
    %2 = vector.broadcast %1 : vector<1x128xf32> to vector<512x128xf32>
    %3 = arith.mulf %0, %2 : vector<512x128xf32>
    %c0_3 = arith.constant 0 : index
    %c0_4 = arith.constant 0 : index
    %4 = vector.load %arg3[%c0_3, %c0_4] : memref<1x128xf32, #tpu.memory_space<vmem>>, vector<1x128xf32>
    %5 = vector.broadcast %4 : vector<1x128xf32> to vector<512x128xf32>
    %6 = arith.addf %3, %5 : vector<512x128xf32>
    %cst = arith.constant 0.000000e+00 : f32
    %7 = vector.broadcast %cst : f32 to vector<512x128xf32>
    %8 = arith.maximumf %6, %7 : vector<512x128xf32>
    %c0_5 = arith.constant 0 : index
    %c0_6 = arith.constant 0 : index
    %9 = vector.load %arg4[%c0_5, %c0_6] : memref<512x128xf32, #tpu.memory_space<vmem>>, vector<512x128xf32>
    tpu.vector_store %arg4[%c0_5, %c0_6], %8 {strides = array<i32>} : memref<512x128xf32, #tpu.memory_space<vmem>>, vector<512x128xf32>,
    return
  }
  func.func @transform_0(%arg0: i32) -> (i32, i32) {
    %c0_i32 = arith.constant 0 : i32
    %c0_i32_0 = arith.constant 0 : i32
    return %arg0, %c0_i32 : i32, i32
  }
  func.func @transform_1(%arg0: i32) -> (i32, i32) {
    %c0_i32 = arith.constant 0 : i32
    %c0_i32_0 = arith.constant 0 : i32
    %c0_i32_1 = arith.constant 0 : i32
    return %c0_i32, %c0_i32_0 : i32, i32
  }
  func.func @transform_2(%arg0: i32) -> (i32, i32) {
    %c0_i32 = arith.constant 0 : i32
    %c0_i32_0 = arith.constant 0 : i32
    %c0_i32_1 = arith.constant 0 : i32
    return %c0_i32, %c0_i32_0 : i32, i32
  }
  func.func @transform_3(%arg0: i32) -> (i32, i32) {
    %c0_i32 = arith.constant 0 : i32
    %c0_i32_0 = arith.constant 0 : i32
    return %arg0, %c0_i32 : i32, i32
  }
}

module attributes {stable_mosaic.version = 11 : i64} {
  func.func @_matmul_stats_kernel(%arg0: i32, %arg1: memref<512x576xbf16, #tpu.memory_space<vmem>>, %arg2: memref<576x128xbf16, #tpu.memory_space<vmem>>, %arg3: memref<512x128xf32, #tpu.memory_space<vmem>>, %arg4: memref<1x128xf32, #tpu.memory_space<vmem>>, %arg5: memref<1x128xf32, #tpu.memory_space<vmem>>) attributes {dimension_semantics = [#tpu.dimension_semantics<arbitrary>], iteration_bounds = array<i64: 1>, scalar_prefetch = 0 : i64, scratch_operands = 0 : i64, tpu.core_type = #tpu.core_type<tc>, window_params = [{transform_indices = @transform_0, window_bounds = array<i64: 512, 576>}, {pipeline_mode = #tpu.pipeline_mode<synchronous>, transform_indices = @transform_1, window_bounds = array<i64: 576, 128>}, {transform_indices = @transform_2, window_bounds = array<i64: 512, 128>}, {pipeline_mode = #tpu.pipeline_mode<synchronous>, transform_indices = @transform_3, window_bounds = array<i64: 1, 128>}, {pipeline_mode = #tpu.pipeline_mode<synchronous>, transform_indices = @transform_4, window_bounds = array<i64: 1, 128>}]} {
    %c0 = arith.constant 0 : index
    %c0_0 = arith.constant 0 : index
    %0 = vector.load %arg1[%c0, %c0_0] : memref<512x576xbf16, #tpu.memory_space<vmem>>, vector<512x576xbf16>
    %c0_1 = arith.constant 0 : index
    %c0_2 = arith.constant 0 : index
    %1 = vector.load %arg2[%c0_1, %c0_2] : memref<576x128xbf16, #tpu.memory_space<vmem>>, vector<576x128xbf16>
    %cst = arith.constant dense<0.000000e+00> : vector<512x128xf32>
    %2 = tpu.matmul %0, %1, %cst {dimension_numbers = #tpu.dot_dimension_numbers<[1], [0], [0], [1], [0, 0, 1, 1], [], []>} : vector<512x576xbf16>, vector<576x128xbf16>, vector<512x128xf32> -> vector<512x128xf32>
    %c0_3 = arith.constant 0 : index
    %c0_4 = arith.constant 0 : index
    %3 = vector.load %arg3[%c0_3, %c0_4] : memref<512x128xf32, #tpu.memory_space<vmem>>, vector<512x128xf32>
    tpu.vector_store %arg3[%c0_3, %c0_4], %2 {strides = array<i32>} : memref<512x128xf32, #tpu.memory_space<vmem>>, vector<512x128xf32>,
    %c0_i32 = arith.constant 0 : i32
    %4 = arith.cmpi eq, %arg0, %c0_i32 : i32
    %5 = arith.extui %4 : i1 to i32
    %c0_i32_5 = arith.constant 0 : i32
    %6 = arith.cmpi ne, %5, %c0_i32_5 : i32
    scf.if %6 {
      %cst_16 = arith.constant 0.000000e+00 : f32
      %18 = vector.broadcast %cst_16 : f32 to vector<1x128xf32>
      %c0_17 = arith.constant 0 : index
      %c0_18 = arith.constant 0 : index
      %19 = vector.load %arg4[%c0_17, %c0_18] : memref<1x128xf32, #tpu.memory_space<vmem>>, vector<1x128xf32>
      tpu.vector_store %arg4[%c0_17, %c0_18], %18 {strides = array<i32>} : memref<1x128xf32, #tpu.memory_space<vmem>>, vector<1x128xf32>,
      %cst_19 = arith.constant 0.000000e+00 : f32
      %20 = vector.broadcast %cst_19 : f32 to vector<1x128xf32>
      %c0_20 = arith.constant 0 : index
      %c0_21 = arith.constant 0 : index
      %21 = vector.load %arg5[%c0_20, %c0_21] : memref<1x128xf32, #tpu.memory_space<vmem>>, vector<1x128xf32>
      tpu.vector_store %arg5[%c0_20, %c0_21], %20 {strides = array<i32>} : memref<1x128xf32, #tpu.memory_space<vmem>>, vector<1x128xf32>,
    } else {
    }
    %c0_6 = arith.constant 0 : index
    %c0_7 = arith.constant 0 : index
    %7 = vector.load %arg4[%c0_6, %c0_7] : memref<1x128xf32, #tpu.memory_space<vmem>>, vector<1x128xf32>
    %cst_8 = arith.constant dense<0.000000e+00> : vector<128xf32>
    %8 = vector.multi_reduction <add>, %2, %cst_8 [0] : vector<512x128xf32> to vector<128xf32>
    %9 = vector.shape_cast %8 : vector<128xf32> to vector<1x128xf32>
    %10 = arith.addf %7, %9 : vector<1x128xf32>
    %c0_9 = arith.constant 0 : index
    %c0_10 = arith.constant 0 : index
    %11 = vector.load %arg4[%c0_9, %c0_10] : memref<1x128xf32, #tpu.memory_space<vmem>>, vector<1x128xf32>
    tpu.vector_store %arg4[%c0_9, %c0_10], %10 {strides = array<i32>} : memref<1x128xf32, #tpu.memory_space<vmem>>, vector<1x128xf32>,
    %c0_11 = arith.constant 0 : index
    %c0_12 = arith.constant 0 : index
    %12 = vector.load %arg5[%c0_11, %c0_12] : memref<1x128xf32, #tpu.memory_space<vmem>>, vector<1x128xf32>
    %13 = arith.mulf %2, %2 : vector<512x128xf32>
    %cst_13 = arith.constant dense<0.000000e+00> : vector<128xf32>
    %14 = vector.multi_reduction <add>, %13, %cst_13 [0] : vector<512x128xf32> to vector<128xf32>
    %15 = vector.shape_cast %14 : vector<128xf32> to vector<1x128xf32>
    %16 = arith.addf %12, %15 : vector<1x128xf32>
    %c0_14 = arith.constant 0 : index
    %c0_15 = arith.constant 0 : index
    %17 = vector.load %arg5[%c0_14, %c0_15] : memref<1x128xf32, #tpu.memory_space<vmem>>, vector<1x128xf32>
    tpu.vector_store %arg5[%c0_14, %c0_15], %16 {strides = array<i32>} : memref<1x128xf32, #tpu.memory_space<vmem>>, vector<1x128xf32>,
    return
  }
  func.func @transform_0(%arg0: i32) -> (i32, i32) {
    %c0_i32 = arith.constant 0 : i32
    %c0_i32_0 = arith.constant 0 : i32
    return %arg0, %c0_i32 : i32, i32
  }
  func.func @transform_1(%arg0: i32) -> (i32, i32) {
    %c0_i32 = arith.constant 0 : i32
    %c0_i32_0 = arith.constant 0 : i32
    %c0_i32_1 = arith.constant 0 : i32
    return %c0_i32, %c0_i32_0 : i32, i32
  }
  func.func @transform_2(%arg0: i32) -> (i32, i32) {
    %c0_i32 = arith.constant 0 : i32
    %c0_i32_0 = arith.constant 0 : i32
    return %arg0, %c0_i32 : i32, i32
  }
  func.func @transform_3(%arg0: i32) -> (i32, i32) {
    %c0_i32 = arith.constant 0 : i32
    %c0_i32_0 = arith.constant 0 : i32
    %c0_i32_1 = arith.constant 0 : i32
    return %c0_i32, %c0_i32_0 : i32, i32
  }
  func.func @transform_4(%arg0: i32) -> (i32, i32) {
    %c0_i32 = arith.constant 0 : i32
    %c0_i32_0 = arith.constant 0 : i32
    %c0_i32_1 = arith.constant 0 : i32
    return %c0_i32, %c0_i32_0 : i32, i32
  }
}

module attributes {stable_mosaic.version = 11 : i64} {
  func.func @_matmul_stats_kernel(%arg0: i32, %arg1: memref<128x864xbf16, #tpu.memory_space<vmem>>, %arg2: memref<864x128xbf16, #tpu.memory_space<vmem>>, %arg3: memref<128x128xf32, #tpu.memory_space<vmem>>, %arg4: memref<1x128xf32, #tpu.memory_space<vmem>>, %arg5: memref<1x128xf32, #tpu.memory_space<vmem>>) attributes {dimension_semantics = [#tpu.dimension_semantics<arbitrary>], iteration_bounds = array<i64: 1>, scalar_prefetch = 0 : i64, scratch_operands = 0 : i64, tpu.core_type = #tpu.core_type<tc>, window_params = [{transform_indices = @transform_0, window_bounds = array<i64: 128, 864>}, {pipeline_mode = #tpu.pipeline_mode<synchronous>, transform_indices = @transform_1, window_bounds = array<i64: 864, 128>}, {transform_indices = @transform_2, window_bounds = array<i64: 128, 128>}, {pipeline_mode = #tpu.pipeline_mode<synchronous>, transform_indices = @transform_3, window_bounds = array<i64: 1, 128>}, {pipeline_mode = #tpu.pipeline_mode<synchronous>, transform_indices = @transform_4, window_bounds = array<i64: 1, 128>}]} {
    %c0 = arith.constant 0 : index
    %c0_0 = arith.constant 0 : index
    %0 = vector.load %arg1[%c0, %c0_0] : memref<128x864xbf16, #tpu.memory_space<vmem>>, vector<128x864xbf16>
    %c0_1 = arith.constant 0 : index
    %c0_2 = arith.constant 0 : index
    %1 = vector.load %arg2[%c0_1, %c0_2] : memref<864x128xbf16, #tpu.memory_space<vmem>>, vector<864x128xbf16>
    %cst = arith.constant dense<0.000000e+00> : vector<128x128xf32>
    %2 = tpu.matmul %0, %1, %cst {dimension_numbers = #tpu.dot_dimension_numbers<[1], [0], [0], [1], [0, 0, 1, 1], [], []>} : vector<128x864xbf16>, vector<864x128xbf16>, vector<128x128xf32> -> vector<128x128xf32>
    %c0_3 = arith.constant 0 : index
    %c0_4 = arith.constant 0 : index
    %3 = vector.load %arg3[%c0_3, %c0_4] : memref<128x128xf32, #tpu.memory_space<vmem>>, vector<128x128xf32>
    tpu.vector_store %arg3[%c0_3, %c0_4], %2 {strides = array<i32>} : memref<128x128xf32, #tpu.memory_space<vmem>>, vector<128x128xf32>,
    %c0_i32 = arith.constant 0 : i32
    %4 = arith.cmpi eq, %arg0, %c0_i32 : i32
    %5 = arith.extui %4 : i1 to i32
    %c0_i32_5 = arith.constant 0 : i32
    %6 = arith.cmpi ne, %5, %c0_i32_5 : i32
    scf.if %6 {
      %cst_16 = arith.constant 0.000000e+00 : f32
      %18 = vector.broadcast %cst_16 : f32 to vector<1x128xf32>
      %c0_17 = arith.constant 0 : index
      %c0_18 = arith.constant 0 : index
      %19 = vector.load %arg4[%c0_17, %c0_18] : memref<1x128xf32, #tpu.memory_space<vmem>>, vector<1x128xf32>
      tpu.vector_store %arg4[%c0_17, %c0_18], %18 {strides = array<i32>} : memref<1x128xf32, #tpu.memory_space<vmem>>, vector<1x128xf32>,
      %cst_19 = arith.constant 0.000000e+00 : f32
      %20 = vector.broadcast %cst_19 : f32 to vector<1x128xf32>
      %c0_20 = arith.constant 0 : index
      %c0_21 = arith.constant 0 : index
      %21 = vector.load %arg5[%c0_20, %c0_21] : memref<1x128xf32, #tpu.memory_space<vmem>>, vector<1x128xf32>
      tpu.vector_store %arg5[%c0_20, %c0_21], %20 {strides = array<i32>} : memref<1x128xf32, #tpu.memory_space<vmem>>, vector<1x128xf32>,
    } else {
    }
    %c0_6 = arith.constant 0 : index
    %c0_7 = arith.constant 0 : index
    %7 = vector.load %arg4[%c0_6, %c0_7] : memref<1x128xf32, #tpu.memory_space<vmem>>, vector<1x128xf32>
    %cst_8 = arith.constant dense<0.000000e+00> : vector<128xf32>
    %8 = vector.multi_reduction <add>, %2, %cst_8 [0] : vector<128x128xf32> to vector<128xf32>
    %9 = vector.shape_cast %8 : vector<128xf32> to vector<1x128xf32>
    %10 = arith.addf %7, %9 : vector<1x128xf32>
    %c0_9 = arith.constant 0 : index
    %c0_10 = arith.constant 0 : index
    %11 = vector.load %arg4[%c0_9, %c0_10] : memref<1x128xf32, #tpu.memory_space<vmem>>, vector<1x128xf32>
    tpu.vector_store %arg4[%c0_9, %c0_10], %10 {strides = array<i32>} : memref<1x128xf32, #tpu.memory_space<vmem>>, vector<1x128xf32>,
    %c0_11 = arith.constant 0 : index
    %c0_12 = arith.constant 0 : index
    %12 = vector.load %arg5[%c0_11, %c0_12] : memref<1x128xf32, #tpu.memory_space<vmem>>, vector<1x128xf32>
    %13 = arith.mulf %2, %2 : vector<128x128xf32>
    %cst_13 = arith.constant dense<0.000000e+00> : vector<128xf32>
    %14 = vector.multi_reduction <add>, %13, %cst_13 [0] : vector<128x128xf32> to vector<128xf32>
    %15 = vector.shape_cast %14 : vector<128xf32> to vector<1x128xf32>
    %16 = arith.addf %12, %15 : vector<1x128xf32>
    %c0_14 = arith.constant 0 : index
    %c0_15 = arith.constant 0 : index
    %17 = vector.load %arg5[%c0_14, %c0_15] : memref<1x128xf32, #tpu.memory_space<vmem>>, vector<1x128xf32>
    tpu.vector_store %arg5[%c0_14, %c0_15], %16 {strides = array<i32>} : memref<1x128xf32, #tpu.memory_space<vmem>>, vector<1x128xf32>,
    return
  }
  func.func @transform_0(%arg0: i32) -> (i32, i32) {
    %c0_i32 = arith.constant 0 : i32
    %c0_i32_0 = arith.constant 0 : i32
    return %arg0, %c0_i32 : i32, i32
  }
  func.func @transform_1(%arg0: i32) -> (i32, i32) {
    %c0_i32 = arith.constant 0 : i32
    %c0_i32_0 = arith.constant 0 : i32
    %c0_i32_1 = arith.constant 0 : i32
    return %c0_i32, %c0_i32_0 : i32, i32
  }
  func.func @transform_2(%arg0: i32) -> (i32, i32) {
    %c0_i32 = arith.constant 0 : i32
    %c0_i32_0 = arith.constant 0 : i32
    return %arg0, %c0_i32 : i32, i32
  }
  func.func @transform_3(%arg0: i32) -> (i32, i32) {
    %c0_i32 = arith.constant 0 : i32
    %c0_i32_0 = arith.constant 0 : i32
    %c0_i32_1 = arith.constant 0 : i32
    return %c0_i32, %c0_i32_0 : i32, i32
  }
  func.func @transform_4(%arg0: i32) -> (i32, i32) {
    %c0_i32 = arith.constant 0 : i32
    %c0_i32_0 = arith.constant 0 : i32
    %c0_i32_1 = arith.constant 0 : i32
    return %c0_i32, %c0_i32_0 : i32, i32
  }
}

module attributes {stable_mosaic.version = 11 : i64} {
  func.func @_bn_relu_kernel(%arg0: i32, %arg1: memref<128x128xf32, #tpu.memory_space<vmem>>, %arg2: memref<1x128xf32, #tpu.memory_space<vmem>>, %arg3: memref<1x128xf32, #tpu.memory_space<vmem>>, %arg4: memref<128x128xf32, #tpu.memory_space<vmem>>) attributes {dimension_semantics = [#tpu.dimension_semantics<parallel>], iteration_bounds = array<i64: 1>, scalar_prefetch = 0 : i64, scratch_operands = 0 : i64, tpu.core_type = #tpu.core_type<tc>, window_params = [{transform_indices = @transform_0, window_bounds = array<i64: 128, 128>}, {pipeline_mode = #tpu.pipeline_mode<synchronous>, transform_indices = @transform_1, window_bounds = array<i64: 1, 128>}, {pipeline_mode = #tpu.pipeline_mode<synchronous>, transform_indices = @transform_2, window_bounds = array<i64: 1, 128>}, {transform_indices = @transform_3, window_bounds = array<i64: 128, 128>}]} {
    %c0 = arith.constant 0 : index
    %c0_0 = arith.constant 0 : index
    %0 = vector.load %arg1[%c0, %c0_0] : memref<128x128xf32, #tpu.memory_space<vmem>>, vector<128x128xf32>
    %c0_1 = arith.constant 0 : index
    %c0_2 = arith.constant 0 : index
    %1 = vector.load %arg2[%c0_1, %c0_2] : memref<1x128xf32, #tpu.memory_space<vmem>>, vector<1x128xf32>
    %2 = vector.broadcast %1 : vector<1x128xf32> to vector<128x128xf32>
    %3 = arith.mulf %0, %2 : vector<128x128xf32>
    %c0_3 = arith.constant 0 : index
    %c0_4 = arith.constant 0 : index
    %4 = vector.load %arg3[%c0_3, %c0_4] : memref<1x128xf32, #tpu.memory_space<vmem>>, vector<1x128xf32>
    %5 = vector.broadcast %4 : vector<1x128xf32> to vector<128x128xf32>
    %6 = arith.addf %3, %5 : vector<128x128xf32>
    %cst = arith.constant 0.000000e+00 : f32
    %7 = vector.broadcast %cst : f32 to vector<128x128xf32>
    %8 = arith.maximumf %6, %7 : vector<128x128xf32>
    %c0_5 = arith.constant 0 : index
    %c0_6 = arith.constant 0 : index
    %9 = vector.load %arg4[%c0_5, %c0_6] : memref<128x128xf32, #tpu.memory_space<vmem>>, vector<128x128xf32>
    tpu.vector_store %arg4[%c0_5, %c0_6], %8 {strides = array<i32>} : memref<128x128xf32, #tpu.memory_space<vmem>>, vector<128x128xf32>,
    return
  }
  func.func @transform_0(%arg0: i32) -> (i32, i32) {
    %c0_i32 = arith.constant 0 : i32
    %c0_i32_0 = arith.constant 0 : i32
    return %arg0, %c0_i32 : i32, i32
  }
  func.func @transform_1(%arg0: i32) -> (i32, i32) {
    %c0_i32 = arith.constant 0 : i32
    %c0_i32_0 = arith.constant 0 : i32
    %c0_i32_1 = arith.constant 0 : i32
    return %c0_i32, %c0_i32_0 : i32, i32
  }
  func.func @transform_2(%arg0: i32) -> (i32, i32) {
    %c0_i32 = arith.constant 0 : i32
    %c0_i32_0 = arith.constant 0 : i32
    %c0_i32_1 = arith.constant 0 : i32
    return %c0_i32, %c0_i32_0 : i32, i32
  }
  func.func @transform_3(%arg0: i32) -> (i32, i32) {
    %c0_i32 = arith.constant 0 : i32
    %c0_i32_0 = arith.constant 0 : i32
    return %arg0, %c0_i32 : i32, i32
  }
}

module attributes {stable_mosaic.version = 11 : i64} {
  func.func @_matmul_stats_kernel(%arg0: i32, %arg1: memref<128x36xbf16, #tpu.memory_space<vmem>>, %arg2: memref<36x384xbf16, #tpu.memory_space<vmem>>, %arg3: memref<128x384xf32, #tpu.memory_space<vmem>>, %arg4: memref<1x384xf32, #tpu.memory_space<vmem>>, %arg5: memref<1x384xf32, #tpu.memory_space<vmem>>) attributes {dimension_semantics = [#tpu.dimension_semantics<arbitrary>], iteration_bounds = array<i64: 1>, scalar_prefetch = 0 : i64, scratch_operands = 0 : i64, tpu.core_type = #tpu.core_type<tc>, window_params = [{transform_indices = @transform_0, window_bounds = array<i64: 128, 36>}, {pipeline_mode = #tpu.pipeline_mode<synchronous>, transform_indices = @transform_1, window_bounds = array<i64: 36, 384>}, {transform_indices = @transform_2, window_bounds = array<i64: 128, 384>}, {pipeline_mode = #tpu.pipeline_mode<synchronous>, transform_indices = @transform_3, window_bounds = array<i64: 1, 384>}, {pipeline_mode = #tpu.pipeline_mode<synchronous>, transform_indices = @transform_4, window_bounds = array<i64: 1, 384>}]} {
    %c0 = arith.constant 0 : index
    %c0_0 = arith.constant 0 : index
    %0 = vector.load %arg1[%c0, %c0_0] : memref<128x36xbf16, #tpu.memory_space<vmem>>, vector<128x36xbf16>
    %c0_1 = arith.constant 0 : index
    %c0_2 = arith.constant 0 : index
    %1 = vector.load %arg2[%c0_1, %c0_2] : memref<36x384xbf16, #tpu.memory_space<vmem>>, vector<36x384xbf16>
    %cst = arith.constant dense<0.000000e+00> : vector<128x384xf32>
    %2 = tpu.matmul %0, %1, %cst {dimension_numbers = #tpu.dot_dimension_numbers<[1], [0], [0], [1], [0, 0, 1, 1], [], []>} : vector<128x36xbf16>, vector<36x384xbf16>, vector<128x384xf32> -> vector<128x384xf32>
    %c0_3 = arith.constant 0 : index
    %c0_4 = arith.constant 0 : index
    %3 = vector.load %arg3[%c0_3, %c0_4] : memref<128x384xf32, #tpu.memory_space<vmem>>, vector<128x384xf32>
    tpu.vector_store %arg3[%c0_3, %c0_4], %2 {strides = array<i32>} : memref<128x384xf32, #tpu.memory_space<vmem>>, vector<128x384xf32>,
    %c0_i32 = arith.constant 0 : i32
    %4 = arith.cmpi eq, %arg0, %c0_i32 : i32
    %5 = arith.extui %4 : i1 to i32
    %c0_i32_5 = arith.constant 0 : i32
    %6 = arith.cmpi ne, %5, %c0_i32_5 : i32
    scf.if %6 {
      %cst_16 = arith.constant 0.000000e+00 : f32
      %18 = vector.broadcast %cst_16 : f32 to vector<1x384xf32>
      %c0_17 = arith.constant 0 : index
      %c0_18 = arith.constant 0 : index
      %19 = vector.load %arg4[%c0_17, %c0_18] : memref<1x384xf32, #tpu.memory_space<vmem>>, vector<1x384xf32>
      tpu.vector_store %arg4[%c0_17, %c0_18], %18 {strides = array<i32>} : memref<1x384xf32, #tpu.memory_space<vmem>>, vector<1x384xf32>,
      %cst_19 = arith.constant 0.000000e+00 : f32
      %20 = vector.broadcast %cst_19 : f32 to vector<1x384xf32>
      %c0_20 = arith.constant 0 : index
      %c0_21 = arith.constant 0 : index
      %21 = vector.load %arg5[%c0_20, %c0_21] : memref<1x384xf32, #tpu.memory_space<vmem>>, vector<1x384xf32>
      tpu.vector_store %arg5[%c0_20, %c0_21], %20 {strides = array<i32>} : memref<1x384xf32, #tpu.memory_space<vmem>>, vector<1x384xf32>,
    } else {
    }
    %c0_6 = arith.constant 0 : index
    %c0_7 = arith.constant 0 : index
    %7 = vector.load %arg4[%c0_6, %c0_7] : memref<1x384xf32, #tpu.memory_space<vmem>>, vector<1x384xf32>
    %cst_8 = arith.constant dense<0.000000e+00> : vector<384xf32>
    %8 = vector.multi_reduction <add>, %2, %cst_8 [0] : vector<128x384xf32> to vector<384xf32>
    %9 = vector.shape_cast %8 : vector<384xf32> to vector<1x384xf32>
    %10 = arith.addf %7, %9 : vector<1x384xf32>
    %c0_9 = arith.constant 0 : index
    %c0_10 = arith.constant 0 : index
    %11 = vector.load %arg4[%c0_9, %c0_10] : memref<1x384xf32, #tpu.memory_space<vmem>>, vector<1x384xf32>
    tpu.vector_store %arg4[%c0_9, %c0_10], %10 {strides = array<i32>} : memref<1x384xf32, #tpu.memory_space<vmem>>, vector<1x384xf32>,
    %c0_11 = arith.constant 0 : index
    %c0_12 = arith.constant 0 : index
    %12 = vector.load %arg5[%c0_11, %c0_12] : memref<1x384xf32, #tpu.memory_space<vmem>>, vector<1x384xf32>
    %13 = arith.mulf %2, %2 : vector<128x384xf32>
    %cst_13 = arith.constant dense<0.000000e+00> : vector<384xf32>
    %14 = vector.multi_reduction <add>, %13, %cst_13 [0] : vector<128x384xf32> to vector<384xf32>
    %15 = vector.shape_cast %14 : vector<384xf32> to vector<1x384xf32>
    %16 = arith.addf %12, %15 : vector<1x384xf32>
    %c0_14 = arith.constant 0 : index
    %c0_15 = arith.constant 0 : index
    %17 = vector.load %arg5[%c0_14, %c0_15] : memref<1x384xf32, #tpu.memory_space<vmem>>, vector<1x384xf32>
    tpu.vector_store %arg5[%c0_14, %c0_15], %16 {strides = array<i32>} : memref<1x384xf32, #tpu.memory_space<vmem>>, vector<1x384xf32>,
    return
  }
  func.func @transform_0(%arg0: i32) -> (i32, i32) {
    %c0_i32 = arith.constant 0 : i32
    %c0_i32_0 = arith.constant 0 : i32
    return %arg0, %c0_i32 : i32, i32
  }
  func.func @transform_1(%arg0: i32) -> (i32, i32) {
    %c0_i32 = arith.constant 0 : i32
    %c0_i32_0 = arith.constant 0 : i32
    %c0_i32_1 = arith.constant 0 : i32
    return %c0_i32, %c0_i32_0 : i32, i32
  }
  func.func @transform_2(%arg0: i32) -> (i32, i32) {
    %c0_i32 = arith.constant 0 : i32
    %c0_i32_0 = arith.constant 0 : i32
    return %arg0, %c0_i32 : i32, i32
  }
  func.func @transform_3(%arg0: i32) -> (i32, i32) {
    %c0_i32 = arith.constant 0 : i32
    %c0_i32_0 = arith.constant 0 : i32
    %c0_i32_1 = arith.constant 0 : i32
    return %c0_i32, %c0_i32_0 : i32, i32
  }
  func.func @transform_4(%arg0: i32) -> (i32, i32) {
    %c0_i32 = arith.constant 0 : i32
    %c0_i32_0 = arith.constant 0 : i32
    %c0_i32_1 = arith.constant 0 : i32
    return %c0_i32, %c0_i32_0 : i32, i32
  }
}

module attributes {stable_mosaic.version = 11 : i64} {
  func.func @_bn_relu_kernel(%arg0: i32, %arg1: memref<128x384xf32, #tpu.memory_space<vmem>>, %arg2: memref<1x384xf32, #tpu.memory_space<vmem>>, %arg3: memref<1x384xf32, #tpu.memory_space<vmem>>, %arg4: memref<128x384xf32, #tpu.memory_space<vmem>>) attributes {dimension_semantics = [#tpu.dimension_semantics<parallel>], iteration_bounds = array<i64: 1>, scalar_prefetch = 0 : i64, scratch_operands = 0 : i64, tpu.core_type = #tpu.core_type<tc>, window_params = [{transform_indices = @transform_0, window_bounds = array<i64: 128, 384>}, {pipeline_mode = #tpu.pipeline_mode<synchronous>, transform_indices = @transform_1, window_bounds = array<i64: 1, 384>}, {pipeline_mode = #tpu.pipeline_mode<synchronous>, transform_indices = @transform_2, window_bounds = array<i64: 1, 384>}, {transform_indices = @transform_3, window_bounds = array<i64: 128, 384>}]} {
    %c0 = arith.constant 0 : index
    %c0_0 = arith.constant 0 : index
    %0 = vector.load %arg1[%c0, %c0_0] : memref<128x384xf32, #tpu.memory_space<vmem>>, vector<128x384xf32>
    %c0_1 = arith.constant 0 : index
    %c0_2 = arith.constant 0 : index
    %1 = vector.load %arg2[%c0_1, %c0_2] : memref<1x384xf32, #tpu.memory_space<vmem>>, vector<1x384xf32>
    %2 = vector.broadcast %1 : vector<1x384xf32> to vector<128x384xf32>
    %3 = arith.mulf %0, %2 : vector<128x384xf32>
    %c0_3 = arith.constant 0 : index
    %c0_4 = arith.constant 0 : index
    %4 = vector.load %arg3[%c0_3, %c0_4] : memref<1x384xf32, #tpu.memory_space<vmem>>, vector<1x384xf32>
    %5 = vector.broadcast %4 : vector<1x384xf32> to vector<128x384xf32>
    %6 = arith.addf %3, %5 : vector<128x384xf32>
    %cst = arith.constant 0.000000e+00 : f32
    %7 = vector.broadcast %cst : f32 to vector<128x384xf32>
    %8 = arith.maximumf %6, %7 : vector<128x384xf32>
    %c0_5 = arith.constant 0 : index
    %c0_6 = arith.constant 0 : index
    %9 = vector.load %arg4[%c0_5, %c0_6] : memref<128x384xf32, #tpu.memory_space<vmem>>, vector<128x384xf32>
    tpu.vector_store %arg4[%c0_5, %c0_6], %8 {strides = array<i32>} : memref<128x384xf32, #tpu.memory_space<vmem>>, vector<128x384xf32>,
    return
  }
  func.func @transform_0(%arg0: i32) -> (i32, i32) {
    %c0_i32 = arith.constant 0 : i32
    %c0_i32_0 = arith.constant 0 : i32
    return %arg0, %c0_i32 : i32, i32
  }
  func.func @transform_1(%arg0: i32) -> (i32, i32) {
    %c0_i32 = arith.constant 0 : i32
    %c0_i32_0 = arith.constant 0 : i32
    %c0_i32_1 = arith.constant 0 : i32
    return %c0_i32, %c0_i32_0 : i32, i32
  }
  func.func @transform_2(%arg0: i32) -> (i32, i32) {
    %c0_i32 = arith.constant 0 : i32
    %c0_i32_0 = arith.constant 0 : i32
    %c0_i32_1 = arith.constant 0 : i32
    return %c0_i32, %c0_i32_0 : i32, i32
  }
  func.func @transform_3(%arg0: i32) -> (i32, i32) {
    %c0_i32 = arith.constant 0 : i32
    %c0_i32_0 = arith.constant 0 : i32
    return %arg0, %c0_i32 : i32, i32
  }
}

</mosaic_0001>

<llo_original>
// kernel: inception_b_forward.17
$region0: #{inception_b_forward.17}
  #allocation0 [shape = 'u32[]', space=smem, size = 0x4, offset = 0x4, fixed_abs, tag = 'smem constant byte address 0x4 - core index']
  #allocation1 [shape = 'u32[144,128]{1,0:T(1,128)}', space=vmem, size = 0x12000, scoped, tag = 'internal scratch']
  %s0 = inlined_call_operand.vmem [shape: f32[9,512], index: 0, kind: input, shape index: {}]
  %s1 = inlined_call_operand.vmem [shape: f32[1,512], index: 1, kind: output, shape index: {}]
  %s2 = sld [smem:[#allocation0]]
  $region14: #{inception_b_forward.17} parent=0
    _
  %s4 = ssub.s32 1, %s2
  %s5 = scalar_select 0, %s4, %s2
  // Predicated region
  $region2: #{inception_b_forward.17} parent=0 // pred_check
    _
  $region3: #{inception_b_forward.17} parent=0 // pred_check_branch
    %7 = sbr.rel (0) target = $region5
  $region4: #{inception_b_forward.17} parent=0 // pred_region
    _
  $region5: #{inception_b_forward.17} parent=0 // pred_fallthru
    _
  %v8 = vld [vmem:[%s0] ss:$8 sm:$0xf]
  %s9 = scalar_lea.vmem %s0, 1
  %v10 = vld [vmem:[%s9] ss:$8 sm:$0xf]
  %v11 = vmax.f32 %v8, %v10
  %s12 = scalar_lea.vmem %s0, 2
  %v13 = vld [vmem:[%s12] ss:$8 sm:$0xf]
  %v14 = vmax.f32 %v11, %v13
  %s15 = scalar_lea.vmem %s0, 3
  %v16 = vld [vmem:[%s15] ss:$8 sm:$0xf]
  %v17 = vmax.f32 %v14, %v16
  %s18 = scalar_lea.vmem %s0, 4
  %v19 = vld [vmem:[%s18] ss:$8 sm:$0xf]
  %v20 = vmax.f32 %v17, %v19
  %s21 = scalar_lea.vmem %s0, 5
  %v22 = vld [vmem:[%s21] ss:$8 sm:$0xf]
  %v23 = vmax.f32 %v20, %v22
  %s24 = scalar_lea.vmem %s0, 6
  %v25 = vld [vmem:[%s24] ss:$8 sm:$0xf]
  %v26 = vmax.f32 %v23, %v25
  %s27 = scalar_lea.vmem %s0, 7
  %v28 = vld [vmem:[%s27] ss:$8 sm:$0xf]
  %v29 = vmax.f32 %v26, %v28
  %s30 = scalar_lea.vmem %s0, 32
  %v31 = vld [vmem:[%s30] ss:$8 sm:$0xf]
  %v32 = vmax.f32 %v29, %v31
  %v33 = vlaneseq
  %vm34 = vcmp.ge.s32.totalorder %v33, 0
  %vm35 = vcmp.lt.s32.totalorder %v33, 512
  %vm36 = vmand %vm34, %vm35
  %37 = vst.msk [vmem:[%s1] sm:$0xf] %vm36, %v32
  // Predicated region
  $region6: #{inception_b_forward.17} parent=0 // pred_check
    _
  $region7: #{inception_b_forward.17} parent=0 // pred_check_branch
    %39 = sbr.rel (0) target = $region9
  $region8: #{inception_b_forward.17} parent=0 // pred_region
    _
  $region9: #{inception_b_forward.17} parent=0 // pred_fallthru
    _
  // Predicated region
  $region10: #{inception_b_forward.17} parent=0 // pred_check
    _
  $region11: #{inception_b_forward.17} parent=0 // pred_check_branch
    %41 = sbr.rel (0) target = $region13
  $region12: #{inception_b_forward.17} parent=0 // pred_region
    _
  $region13: #{inception_b_forward.17} parent=0 // pred_fallthru
    _

// kernel: inception_b_forward.12
$region0: #{inception_b_forward.12}
  #allocation0 [shape = 'u32[]', space=smem, size = 0x4, offset = 0x4, fixed_abs, tag = 'smem constant byte address 0x4 - core index']
  #allocation1 [shape = 'u32[144,128]{1,0:T(1,128)}', space=vmem, size = 0x12000, scoped, tag = 'internal scratch']
  %s0 = inlined_call_operand.vmem [shape: f32[512,128], index: 0, kind: input, shape index: {}]
  %s1 = inlined_call_operand.vmem [shape: f32[1,128], index: 1, kind: input, shape index: {}]
  %s2 = inlined_call_operand.vmem [shape: f32[1,128], index: 2, kind: input, shape index: {}]
  %s3 = inlined_call_operand.vmem [shape: f32[512,128], index: 3, kind: output, shape index: {}]
  %s4 = sld [smem:[#allocation0]]
  $region22: #{inception_b_forward.12} parent=0
    _
  %s6 = ssub.s32 1, %s4
  %s7 = scalar_select 0, %s6, %s4
  // Predicated region
  $region2: #{inception_b_forward.12} parent=0 // pred_check
    _
  $region3: #{inception_b_forward.12} parent=0 // pred_check_branch
    %9 = sbr.rel (0) target = $region5
  $region4: #{inception_b_forward.12} parent=0 // pred_region
    _
  $region5: #{inception_b_forward.12} parent=0 // pred_fallthru
    _
  // Predicated region
  $region6: #{inception_b_forward.12} parent=0 // pred_check
    _
  $region7: #{inception_b_forward.12} parent=0 // pred_check_branch
    %11 = sbr.rel (0) target = $region9
  $region8: #{inception_b_forward.12} parent=0 // pred_region
    _
  $region9: #{inception_b_forward.12} parent=0 // pred_fallthru
    _
  // Predicated region
  $region10: #{inception_b_forward.12} parent=0 // pred_check
    _
  $region11: #{inception_b_forward.12} parent=0 // pred_check_branch
    %13 = sbr.rel (0) target = $region13
  $region12: #{inception_b_forward.12} parent=0 // pred_region
    _
  $region13: #{inception_b_forward.12} parent=0 // pred_fallthru
    _
  %v14 = vld [vmem:[%s0] sm:$0xff]
  %v15 = vld [vmem:[%s0 + $0x8] sm:$0xff]
  %v16 = vld [vmem:[%s0 + $0x10] sm:$0xff]
  %v17 = vld [vmem:[%s0 + $0x18] sm:$0xff]
  %v18 = vld [vmem:[%s0 + $0x20] sm:$0xff]
  %v19 = vld [vmem:[%s0 + $0x28] sm:$0xff]
  %v20 = vld [vmem:[%s0 + $0x30] sm:$0xff]
  %v21 = vld [vmem:[%s0 + $0x38] sm:$0xff]
  %v22 = vld [vmem:[%s0 + $0x40] sm:$0xff]
  %v23 = vld [vmem:[%s0 + $0x48] sm:$0xff]
  %v24 = vld [vmem:[%s0 + $0x50] sm:$0xff]
  %v25 = vld [vmem:[%s0 + $0x58] sm:$0xff]
  %v26 = vld [vmem:[%s0 + $0x60] sm:$0xff]
  %v27 = vld [vmem:[%s0 + $0x68] sm:$0xff]
  %v28 = vld [vmem:[%s0 + $0x70] sm:$0xff]
  %v29 = vld [vmem:[%s0 + $0x78] sm:$0xff]
  %v30 = vld [vmem:[%s0 + $0x80] sm:$0xff]
  %v31 = vld [vmem:[%s0 + $0x88] sm:$0xff]
  %v32 = vld [vmem:[%s0 + $0x90] sm:$0xff]
  %v33 = vld [vmem:[%s0 + $0x98] sm:$0xff]
  %v34 = vld [vmem:[%s0 + $0xa0] sm:$0xff]
  %v35 = vld [vmem:[%s0 + $0xa8] sm:$0xff]
  %v36 = vld [vmem:[%s0 + $0xb0] sm:$0xff]
  %v37 = vld [vmem:[%s0 + $0xb8] sm:$0xff]
  %v38 = vld [vmem:[%s0 + $0xc0] sm:$0xff]
  %v39 = vld [vmem:[%s0 + $0xc8] sm:$0xff]
  %v40 = vld [vmem:[%s0 + $0xd0] sm:$0xff]
  %v41 = vld [vmem:[%s0 + $0xd8] sm:$0xff]
  %v42 = vld [vmem:[%s0 + $0xe0] sm:$0xff]
  %v43 = vld [vmem:[%s0 + $0xe8] sm:$0xff]
  %v44 = vld [vmem:[%s0 + $0xf0] sm:$0xff]
  %v45 = vld [vmem:[%s0 + $0xf8] sm:$0xff]
  %v46 = vld [vmem:[%s0 + $0x100] sm:$0xff]
  %v47 = vld [vmem:[%s0 + $0x108] sm:$0xff]
  %v48 = vld [vmem:[%s0 + $0x110] sm:$0xff]
  %v49 = vld [vmem:[%s0 + $0x118] sm:$0xff]
  %v50 = vld [vmem:[%s0 + $0x120] sm:$0xff]
  %v51 = vld [vmem:[%s0 + $0x128] sm:$0xff]
  %v52 = vld [vmem:[%s0 + $0x130] sm:$0xff]
  %v53 = vld [vmem:[%s0 + $0x138] sm:$0xff]
  %v54 = vld [vmem:[%s0 + $0x140] sm:$0xff]
  %v55 = vld [vmem:[%s0 + $0x148] sm:$0xff]
  %v56 = vld [vmem:[%s0 + $0x150] sm:$0xff]
  %v57 = vld [vmem:[%s0 + $0x158] sm:$0xff]
  %v58 = vld [vmem:[%s0 + $0x160] sm:$0xff]
  %v59 = vld [vmem:[%s0 + $0x168] sm:$0xff]
  %v60 = vld [vmem:[%s0 + $0x170] sm:$0xff]
  %v61 = vld [vmem:[%s0 + $0x178] sm:$0xff]
  %v62 = vld [vmem:[%s0 + $0x180] sm:$0xff]
  %v63 = vld [vmem:[%s0 + $0x188] sm:$0xff]
  %v64 = vld [vmem:[%s0 + $0x190] sm:$0xff]
  %v65 = vld [vmem:[%s0 + $0x198] sm:$0xff]
  %v66 = vld [vmem:[%s0 + $0x1a0] sm:$0xff]
  %v67 = vld [vmem:[%s0 + $0x1a8] sm:$0xff]
  %v68 = vld [vmem:[%s0 + $0x1b0] sm:$0xff]
  %v69 = vld [vmem:[%s0 + $0x1b8] sm:$0xff]
  %v70 = vld [vmem:[%s0 + $0x1c0] sm:$0xff]
  %v71 = vld [vmem:[%s0 + $0x1c8] sm:$0xff]
  %v72 = vld [vmem:[%s0 + $0x1d0] sm:$0xff]
  %v73 = vld [vmem:[%s0 + $0x1d8] sm:$0xff]
  %v74 = vld [vmem:[%s0 + $0x1e0] sm:$0xff]
  %v75 = vld [vmem:[%s0 + $0x1e8] sm:$0xff]
  %v76 = vld [vmem:[%s0 + $0x1f0] sm:$0xff]
  %v77 = vld [vmem:[%s0 + $0x1f8] sm:$0xff]
  %v78 = vld [vmem:[%s1] sm:$0x1]
  %v80 = vlaneseq
  %v81 = vshrl.u32 %v80, 7
  %v82 = vsub.s32 0, %v81
  %v83 = vrot.slane %v78, %v82
  %v85 = vmul.f32 %v14, %v83
  %v86 = vmul.f32 %v15, %v83
  %v87 = vmul.f32 %v16, %v83
  %v88 = vmul.f32 %v17, %v83
  %v89 = vmul.f32 %v18, %v83
  %v90 = vmul.f32 %v19, %v83
  %v91 = vmul.f32 %v20, %v83
  %v92 = vmul.f32 %v21, %v83
  %v93 = vmul.f32 %v22, %v83
  %v94 = vmul.f32 %v23, %v83
  %v95 = vmul.f32 %v24, %v83
  %v96 = vmul.f32 %v25, %v83
  %v97 = vmul.f32 %v26, %v83
  %v98 = vmul.f32 %v27, %v83
  %v99 = vmul.f32 %v28, %v83
  %v100 = vmul.f32 %v29, %v83
  %v101 = vmul.f32 %v30, %v83
  %v102 = vmul.f32 %v31, %v83
  %v103 = vmul.f32 %v32, %v83
  %v104 = vmul.f32 %v33, %v83
  %v105 = vmul.f32 %v34, %v83
  %v106 = vmul.f32 %v35, %v83
  %v107 = vmul.f32 %v36, %v83
  %v108 = vmul.f32 %v37, %v83
  %v109 = vmul.f32 %v38, %v83
  %v110 = vmul.f32 %v39, %v83
  %v111 = vmul.f32 %v40, %v83
  %v112 = vmul.f32 %v41, %v83
  %v113 = vmul.f32 %v42, %v83
  %v114 = vmul.f32 %v43, %v83
  %v115 = vmul.f32 %v44, %v83
  %v116 = vmul.f32 %v45, %v83
  %v117 = vmul.f32 %v46, %v83
  %v118 = vmul.f32 %v47, %v83
  %v119 = vmul.f32 %v48, %v83
  %v120 = vmul.f32 %v49, %v83
  %v121 = vmul.f32 %v50, %v83
  %v122 = vmul.f32 %v51, %v83
  %v123 = vmul.f32 %v52, %v83
  %v124 = vmul.f32 %v53, %v83
  %v125 = vmul.f32 %v54, %v83
  %v126 = vmul.f32 %v55, %v83
  %v127 = vmul.f32 %v56, %v83
  %v128 = vmul.f32 %v57, %v83
  %v129 = vmul.f32 %v58, %v83
  %v130 = vmul.f32 %v59, %v83
  %v131 = vmul.f32 %v60, %v83
  %v132 = vmul.f32 %v61, %v83
  %v133 = vmul.f32 %v62, %v83
  %v134 = vmul.f32 %v63, %v83
  %v135 = vmul.f32 %v64, %v83
  %v136 = vmul.f32 %v65, %v83
  %v137 = vmul.f32 %v66, %v83
  %v138 = vmul.f32 %v67, %v83
  %v139 = vmul.f32 %v68, %v83
  %v140 = vmul.f32 %v69, %v83
  %v141 = vmul.f32 %v70, %v83
  %v142 = vmul.f32 %v71, %v83
  %v143 = vmul.f32 %v72, %v83
  %v144 = vmul.f32 %v73, %v83
  %v145 = vmul.f32 %v74, %v83
  %v146 = vmul.f32 %v75, %v83
  %v147 = vmul.f32 %v76, %v83
  %v148 = vmul.f32 %v77, %v83
  %v149 = vld [vmem:[%s2] sm:$0x1]
  %v151 = vlaneseq
  %v152 = vshrl.u32 %v151, 7
  %v153 = vsub.s32 0, %v152
  %v154 = vrot.slane %v149, %v153
  %v156 = vadd.f32 %v85, %v154
  %v157 = vadd.f32 %v86, %v154
  %v158 = vadd.f32 %v87, %v154
  %v159 = vadd.f32 %v88, %v154
  %v160 = vadd.f32 %v89, %v154
  %v161 = vadd.f32 %v90, %v154
  %v162 = vadd.f32 %v91, %v154
  %v163 = vadd.f32 %v92, %v154
  %v164 = vadd.f32 %v93, %v154
  %v165 = vadd.f32 %v94, %v154
  %v166 = vadd.f32 %v95, %v154
  %v167 = vadd.f32 %v96, %v154
  %v168 = vadd.f32 %v97, %v154
  %v169 = vadd.f32 %v98, %v154
  %v170 = vadd.f32 %v99, %v154
  %v171 = vadd.f32 %v100, %v154
  %v172 = vadd.f32 %v101, %v154
  %v173 = vadd.f32 %v102, %v154
  %v174 = vadd.f32 %v103, %v154
  %v175 = vadd.f32 %v104, %v154
  %v176 = vadd.f32 %v105, %v154
  %v177 = vadd.f32 %v106, %v154
  %v178 = vadd.f32 %v107, %v154
  %v179 = vadd.f32 %v108, %v154
  %v180 = vadd.f32 %v109, %v154
  %v181 = vadd.f32 %v110, %v154
  %v182 = vadd.f32 %v111, %v154
  %v183 = vadd.f32 %v112, %v154
  %v184 = vadd.f32 %v113, %v154
  %v185 = vadd.f32 %v114, %v154
  %v186 = vadd.f32 %v115, %v154
  %v187 = vadd.f32 %v116, %v154
  %v188 = vadd.f32 %v117, %v154
  %v189 = vadd.f32 %v118, %v154
  %v190 = vadd.f32 %v119, %v154
  %v191 = vadd.f32 %v120, %v154
  %v192 = vadd.f32 %v121, %v154
  %v193 = vadd.f32 %v122, %v154
  %v194 = vadd.f32 %v123, %v154
  %v195 = vadd.f32 %v124, %v154
  %v196 = vadd.f32 %v125, %v154
  %v197 = vadd.f32 %v126, %v154
  %v198 = vadd.f32 %v127, %v154
  %v199 = vadd.f32 %v128, %v154
  %v200 = vadd.f32 %v129, %v154
  %v201 = vadd.f32 %v130, %v154
  %v202 = vadd.f32 %v131, %v154
  %v203 = vadd.f32 %v132, %v154
  %v204 = vadd.f32 %v133, %v154
  %v205 = vadd.f32 %v134, %v154
  %v206 = vadd.f32 %v135, %v154
  %v207 = vadd.f32 %v136, %v154
  %v208 = vadd.f32 %v137, %v154
  %v209 = vadd.f32 %v138, %v154
  %v210 = vadd.f32 %v139, %v154
  %v211 = vadd.f32 %v140, %v154
  %v212 = vadd.f32 %v141, %v154
  %v213 = vadd.f32 %v142, %v154
  %v214 = vadd.f32 %v143, %v154
  %v215 = vadd.f32 %v144, %v154
  %v216 = vadd.f32 %v145, %v154
  %v217 = vadd.f32 %v146, %v154
  %v218 = vadd.f32 %v147, %v154
  %v219 = vadd.f32 %v148, %v154
  %v220 = vmax.f32 %v156, 0.0
  %v221 = vmax.f32 %v157, 0.0
  %v222 = vmax.f32 %v158, 0.0
  %v223 = vmax.f32 %v159, 0.0
  %v224 = vmax.f32 %v160, 0.0
  %v225 = vmax.f32 %v161, 0.0
  %v226 = vmax.f32 %v162, 0.0
  %v227 = vmax.f32 %v163, 0.0
  %v228 = vmax.f32 %v164, 0.0
  %v229 = vmax.f32 %v165, 0.0
  %v230 = vmax.f32 %v166, 0.0
  %v231 = vmax.f32 %v167, 0.0
  %v232 = vmax.f32 %v168, 0.0
  %v233 = vmax.f32 %v169, 0.0
  %v234 = vmax.f32 %v170, 0.0
  %v235 = vmax.f32 %v171, 0.0
  %v236 = vmax.f32 %v172, 0.0
  %v237 = vmax.f32 %v173, 0.0
  %v238 = vmax.f32 %v174, 0.0
  %v239 = vmax.f32 %v175, 0.0
  %v240 = vmax.f32 %v176, 0.0
  %v241 = vmax.f32 %v177, 0.0
  %v242 = vmax.f32 %v178, 0.0
  %v243 = vmax.f32 %v179, 0.0
  %v244 = vmax.f32 %v180, 0.0
  %v245 = vmax.f32 %v181, 0.0
  %v246 = vmax.f32 %v182, 0.0
  %v247 = vmax.f32 %v183, 0.0
  %v248 = vmax.f32 %v184, 0.0
  %v249 = vmax.f32 %v185, 0.0
  %v250 = vmax.f32 %v186, 0.0
  %v251 = vmax.f32 %v187, 0.0
  %v252 = vmax.f32 %v188, 0.0
  %v253 = vmax.f32 %v189, 0.0
  %v254 = vmax.f32 %v190, 0.0
  %v255 = vmax.f32 %v191, 0.0
  %v256 = vmax.f32 %v192, 0.0
  %v257 = vmax.f32 %v193, 0.0
  %v258 = vmax.f32 %v194, 0.0
  %v259 = vmax.f32 %v195, 0.0
  %v260 = vmax.f32 %v196, 0.0
  %v261 = vmax.f32 %v197, 0.0
  %v262 = vmax.f32 %v198, 0.0
  %v263 = vmax.f32 %v199, 0.0
  %v264 = vmax.f32 %v200, 0.0
  %v265 = vmax.f32 %v201, 0.0
  %v266 = vmax.f32 %v202, 0.0
  %v267 = vmax.f32 %v203, 0.0
  %v268 = vmax.f32 %v204, 0.0
  %v269 = vmax.f32 %v205, 0.0
  %v270 = vmax.f32 %v206, 0.0
  %v271 = vmax.f32 %v207, 0.0
  %v272 = vmax.f32 %v208, 0.0
  %v273 = vmax.f32 %v209, 0.0
  %v274 = vmax.f32 %v210, 0.0
  %v275 = vmax.f32 %v211, 0.0
  %v276 = vmax.f32 %v212, 0.0
  %v277 = vmax.f32 %v213, 0.0
  %v278 = vmax.f32 %v214, 0.0
  %v279 = vmax.f32 %v215, 0.0
  %v280 = vmax.f32 %v216, 0.0
  %v281 = vmax.f32 %v217, 0.0
  %v282 = vmax.f32 %v218, 0.0
  %v283 = vmax.f32 %v219, 0.0
  %284 = vst [vmem:[%s3] sm:$0xff] %v220
  %285 = vst [vmem:[%s3 + $0x8] sm:$0xff] %v221
  %286 = vst [vmem:[%s3 + $0x10] sm:$0xff] %v222
  %287 = vst [vmem:[%s3 + $0x18] sm:$0xff] %v223
  %288 = vst [vmem:[%s3 + $0x20] sm:$0xff] %v224
  %289 = vst [vmem:[%s3 + $0x28] sm:$0xff] %v225
  %290 = vst [vmem:[%s3 + $0x30] sm:$0xff] %v226
  %291 = vst [vmem:[%s3 + $0x38] sm:$0xff] %v227
  %292 = vst [vmem:[%s3 + $0x40] sm:$0xff] %v228
  %293 = vst [vmem:[%s3 + $0x48] sm:$0xff] %v229
  %294 = vst [vmem:[%s3 + $0x50] sm:$0xff] %v230
  %295 = vst [vmem:[%s3 + $0x58] sm:$0xff] %v231
  %296 = vst [vmem:[%s3 + $0x60] sm:$0xff] %v232
  %297 = vst [vmem:[%s3 + $0x68] sm:$0xff] %v233
  %298 = vst [vmem:[%s3 + $0x70] sm:$0xff] %v234
  %299 = vst [vmem:[%s3 + $0x78] sm:$0xff] %v235
  %300 = vst [vmem:[%s3 + $0x80] sm:$0xff] %v236
  %301 = vst [vmem:[%s3 + $0x88] sm:$0xff] %v237
  %302 = vst [vmem:[%s3 + $0x90] sm:$0xff] %v238
  %303 = vst [vmem:[%s3 + $0x98] sm:$0xff] %v239
  %304 = vst [vmem:[%s3 + $0xa0] sm:$0xff] %v240
  %305 = vst [vmem:[%s3 + $0xa8] sm:$0xff] %v241
  %306 = vst [vmem:[%s3 + $0xb0] sm:$0xff] %v242
  %307 = vst [vmem:[%s3 + $0xb8] sm:$0xff] %v243
  %308 = vst [vmem:[%s3 + $0xc0] sm:$0xff] %v244
  %309 = vst [vmem:[%s3 + $0xc8] sm:$0xff] %v245
  %310 = vst [vmem:[%s3 + $0xd0] sm:$0xff] %v246
  %311 = vst [vmem:[%s3 + $0xd8] sm:$0xff] %v247
  %312 = vst [vmem:[%s3 + $0xe0] sm:$0xff] %v248
  %313 = vst [vmem:[%s3 + $0xe8] sm:$0xff] %v249
  %314 = vst [vmem:[%s3 + $0xf0] sm:$0xff] %v250
  %315 = vst [vmem:[%s3 + $0xf8] sm:$0xff] %v251
  %316 = vst [vmem:[%s3 + $0x100] sm:$0xff] %v252
  %317 = vst [vmem:[%s3 + $0x108] sm:$0xff] %v253
  %318 = vst [vmem:[%s3 + $0x110] sm:$0xff] %v254
  %319 = vst [vmem:[%s3 + $0x118] sm:$0xff] %v255
  %320 = vst [vmem:[%s3 + $0x120] sm:$0xff] %v256
  %321 = vst [vmem:[%s3 + $0x128] sm:$0xff] %v257
  %322 = vst [vmem:[%s3 + $0x130] sm:$0xff] %v258
  %323 = vst [vmem:[%s3 + $0x138] sm:$0xff] %v259
  %324 = vst [vmem:[%s3 + $0x140] sm:$0xff] %v260
  %325 = vst [vmem:[%s3 + $0x148] sm:$0xff] %v261
  %326 = vst [vmem:[%s3 + $0x150] sm:$0xff] %v262
  %327 = vst [vmem:[%s3 + $0x158] sm:$0xff] %v263
  %328 = vst [vmem:[%s3 + $0x160] sm:$0xff] %v264
  %329 = vst [vmem:[%s3 + $0x168] sm:$0xff] %v265
  %330 = vst [vmem:[%s3 + $0x170] sm:$0xff] %v266
  %331 = vst [vmem:[%s3 + $0x178] sm:$0xff] %v267
  %332 = vst [vmem:[%s3 + $0x180] sm:$0xff] %v268
  %333 = vst [vmem:[%s3 + $0x188] sm:$0xff] %v269
  %334 = vst [vmem:[%s3 + $0x190] sm:$0xff] %v270
  %335 = vst [vmem:[%s3 + $0x198] sm:$0xff] %v271
  %336 = vst [vmem:[%s3 + $0x1a0] sm:$0xff] %v272
  %337 = vst [vmem:[%s3 + $0x1a8] sm:$0xff] %v273
  %338 = vst [vmem:[%s3 + $0x1b0] sm:$0xff] %v274
  %339 = vst [vmem:[%s3 + $0x1b8] sm:$0xff] %v275
  %340 = vst [vmem:[%s3 + $0x1c0] sm:$0xff] %v276
  %341 = vst [vmem:[%s3 + $0x1c8] sm:$0xff] %v277
  %342 = vst [vmem:[%s3 + $0x1d0] sm:$0xff] %v278
  %343 = vst [vmem:[%s3 + $0x1d8] sm:$0xff] %v279
  %344 = vst [vmem:[%s3 + $0x1e0] sm:$0xff] %v280
  %345 = vst [vmem:[%s3 + $0x1e8] sm:$0xff] %v281
  %346 = vst [vmem:[%s3 + $0x1f0] sm:$0xff] %v282
  %347 = vst [vmem:[%s3 + $0x1f8] sm:$0xff] %v283
  // Predicated region
  $region14: #{inception_b_forward.12} parent=0 // pred_check
    _
  $region15: #{inception_b_forward.12} parent=0 // pred_check_branch
    %349 = sbr.rel (0) target = $region17
  $region16: #{inception_b_forward.12} parent=0 // pred_region
    _
  $region17: #{inception_b_forward.12} parent=0 // pred_fallthru
    _
  // Predicated region
  $region18: #{inception_b_forward.12} parent=0 // pred_check
    _
  $region19: #{inception_b_forward.12} parent=0 // pred_check_branch
    %351 = sbr.rel (0) target = $region21
  $region20: #{inception_b_forward.12} parent=0 // pred_region
    _
  $region21: #{inception_b_forward.12} parent=0 // pred_fallthru
    _

// kernel: inception_b_forward.11
$region0: #{inception_b_forward.11}
  #allocation0 [shape = 'u32[]', space=smem, size = 0x4, offset = 0x4, fixed_abs, tag = 'smem constant byte address 0x4 - core index']
  #allocation1 [shape = 'u32[144,128]{1,0:T(1,128)}', space=vmem, size = 0x12000, scoped, tag = 'internal scratch']
  %s0 = inlined_call_operand.vmem [shape: bf16[512,4], index: 0, kind: input, shape index: {}]
  %s1 = inlined_call_operand.vmem [shape: bf16[4,128], index: 1, kind: input, shape index: {}]
  %s2 = inlined_call_operand.vmem [shape: f32[512,128], index: 2, kind: output, shape index: {0}]
  %s3 = inlined_call_operand.vmem [shape: f32[1,128], index: 3, kind: output, shape index: {1}]
  %s4 = inlined_call_operand.vmem [shape: f32[1,128], index: 4, kind: output, shape index: {2}]
  %5 = xla_tuple %s2, %s3, %s4
  %s6 = sld [smem:[#allocation0]]
  $region38: #{inception_b_forward.11} parent=0
    _
  %s8 = ssub.s32 1, %s6
  %s9 = scalar_select 0, %s8, %s6
  // Predicated region
  $region2: #{inception_b_forward.11} parent=0 // pred_check
    _
  $region3: #{inception_b_forward.11} parent=0 // pred_check_branch
    %11 = sbr.rel (0) target = $region5
  $region4: #{inception_b_forward.11} parent=0 // pred_region
    _
  $region5: #{inception_b_forward.11} parent=0 // pred_fallthru
    _
  // Predicated region
  $region6: #{inception_b_forward.11} parent=0 // pred_check
    _
  $region7: #{inception_b_forward.11} parent=0 // pred_check_branch
    %13 = sbr.rel (0) target = $region9
  $region8: #{inception_b_forward.11} parent=0 // pred_region
    _
  $region9: #{inception_b_forward.11} parent=0 // pred_fallthru
    _
  %v15 = vld [vmem:[%s0] sm:$0xf]
  %v16 = vld [vmem:[%s0 + $0x4] sm:$0xf]
  %v17 = vld [vmem:[%s0 + $0x8] sm:$0xf]
  %v18 = vld [vmem:[%s0 + $0xc] sm:$0xf]
  %v19 = vld [vmem:[%s0 + $0x10] sm:$0xf]
  %v20 = vld [vmem:[%s0 + $0x14] sm:$0xf]
  %v21 = vld [vmem:[%s0 + $0x18] sm:$0xf]
  %v22 = vld [vmem:[%s0 + $0x1c] sm:$0xf]
  %v23 = vld [vmem:[%s0 + $0x20] sm:$0xf]
  %v24 = vld [vmem:[%s0 + $0x24] sm:$0xf]
  %v25 = vld [vmem:[%s0 + $0x28] sm:$0xf]
  %v26 = vld [vmem:[%s0 + $0x2c] sm:$0xf]
  %v27 = vld [vmem:[%s0 + $0x30] sm:$0xf]
  %v28 = vld [vmem:[%s0 + $0x34] sm:$0xf]
  %v29 = vld [vmem:[%s0 + $0x38] sm:$0xf]
  %v30 = vld [vmem:[%s0 + $0x3c] sm:$0xf]
  %v31 = vld [vmem:[%s0 + $0x40] sm:$0xf]
  %v32 = vld [vmem:[%s0 + $0x44] sm:$0xf]
  %v33 = vld [vmem:[%s0 + $0x48] sm:$0xf]
  %v34 = vld [vmem:[%s0 + $0x4c] sm:$0xf]
  %v35 = vld [vmem:[%s0 + $0x50] sm:$0xf]
  %v36 = vld [vmem:[%s0 + $0x54] sm:$0xf]
  %v37 = vld [vmem:[%s0 + $0x58] sm:$0xf]
  %v38 = vld [vmem:[%s0 + $0x5c] sm:$0xf]
  %v39 = vld [vmem:[%s0 + $0x60] sm:$0xf]
  %v40 = vld [vmem:[%s0 + $0x64] sm:$0xf]
  %v41 = vld [vmem:[%s0 + $0x68] sm:$0xf]
  %v42 = vld [vmem:[%s0 + $0x6c] sm:$0xf]
  %v43 = vld [vmem:[%s0 + $0x70] sm:$0xf]
  %v44 = vld [vmem:[%s0 + $0x74] sm:$0xf]
  %v45 = vld [vmem:[%s0 + $0x78] sm:$0xf]
  %v46 = vld [vmem:[%s0 + $0x7c] sm:$0xf]
  %v47 = vld [vmem:[%s0 + $0x80] sm:$0xf]
  %v48 = vld [vmem:[%s0 + $0x84] sm:$0xf]
  %v49 = vld [vmem:[%s0 + $0x88] sm:$0xf]
  %v50 = vld [vmem:[%s0 + $0x8c] sm:$0xf]
  %v51 = vld [vmem:[%s0 + $0x90] sm:$0xf]
  %v52 = vld [vmem:[%s0 + $0x94] sm:$0xf]
  %v53 = vld [vmem:[%s0 + $0x98] sm:$0xf]
  %v54 = vld [vmem:[%s0 + $0x9c] sm:$0xf]
  %v55 = vld [vmem:[%s0 + $0xa0] sm:$0xf]
  %v56 = vld [vmem:[%s0 + $0xa4] sm:$0xf]
  %v57 = vld [vmem:[%s0 + $0xa8] sm:$0xf]
  %v58 = vld [vmem:[%s0 + $0xac] sm:$0xf]
  %v59 = vld [vmem:[%s0 + $0xb0] sm:$0xf]
  %v60 = vld [vmem:[%s0 + $0xb4] sm:$0xf]
  %v61 = vld [vmem:[%s0 + $0xb8] sm:$0xf]
  %v62 = vld [vmem:[%s0 + $0xbc] sm:$0xf]
  %v63 = vld [vmem:[%s0 + $0xc0] sm:$0xf]
  %v64 = vld [vmem:[%s0 + $0xc4] sm:$0xf]
  %v65 = vld [vmem:[%s0 + $0xc8] sm:$0xf]
  %v66 = vld [vmem:[%s0 + $0xcc] sm:$0xf]
  %v67 = vld [vmem:[%s0 + $0xd0] sm:$0xf]
  %v68 = vld [vmem:[%s0 + $0xd4] sm:$0xf]
  %v69 = vld [vmem:[%s0 + $0xd8] sm:$0xf]
  %v70 = vld [vmem:[%s0 + $0xdc] sm:$0xf]
  %v71 = vld [vmem:[%s0 + $0xe0] sm:$0xf]
  %v72 = vld [vmem:[%s0 + $0xe4] sm:$0xf]
  %v73 = vld [vmem:[%s0 + $0xe8] sm:$0xf]
  %v74 = vld [vmem:[%s0 + $0xec] sm:$0xf]
  %v75 = vld [vmem:[%s0 + $0xf0] sm:$0xf]
  %v76 = vld [vmem:[%s0 + $0xf4] sm:$0xf]
  %v77 = vld [vmem:[%s0 + $0xf8] sm:$0xf]
  %v78 = vld [vmem:[%s0 + $0xfc] sm:$0xf]
  %v79 = vld [vmem:[%s1] sm:$0x3]
  %v144 = vunpack.c.l.b16 %v15
  %v145 = vunpack.c.l.b16 %v16
  %v146 = vunpack.c.l.b16 %v17
  %v147 = vunpack.c.l.b16 %v18
  %v148 = vunpack.c.l.b16 %v19
  %v149 = vunpack.c.l.b16 %v20
  %v150 = vunpack.c.l.b16 %v21
  %v151 = vunpack.c.l.b16 %v22
  %v152 = vunpack.c.l.b16 %v23
  %v153 = vunpack.c.l.b16 %v24
  %v154 = vunpack.c.l.b16 %v25
  %v155 = vunpack.c.l.b16 %v26
  %v156 = vunpack.c.l.b16 %v27
  %v157 = vunpack.c.l.b16 %v28
  %v158 = vunpack.c.l.b16 %v29
  %v159 = vunpack.c.l.b16 %v30
  %v160 = vunpack.c.l.b16 %v31
  %v161 = vunpack.c.l.b16 %v32
  %v162 = vunpack.c.l.b16 %v33
  %v163 = vunpack.c.l.b16 %v34
  %v164 = vunpack.c.l.b16 %v35
  %v165 = vunpack.c.l.b16 %v36
  %v166 = vunpack.c.l.b16 %v37
  %v167 = vunpack.c.l.b16 %v38
  %v168 = vunpack.c.l.b16 %v39
  %v169 = vunpack.c.l.b16 %v40
  %v170 = vunpack.c.l.b16 %v41
  %v171 = vunpack.c.l.b16 %v42
  %v172 = vunpack.c.l.b16 %v43
  %v173 = vunpack.c.l.b16 %v44
  %v174 = vunpack.c.l.b16 %v45
  %v175 = vunpack.c.l.b16 %v46
  %v176 = vunpack.c.l.b16 %v47
  %v177 = vunpack.c.l.b16 %v48
  %v178 = vunpack.c.l.b16 %v49
  %v179 = vunpack.c.l.b16 %v50
  %v180 = vunpack.c.l.b16 %v51
  %v181 = vunpack.c.l.b16 %v52
  %v182 = vunpack.c.l.b16 %v53
  %v183 = vunpack.c.l.b16 %v54
  %v184 = vunpack.c.l.b16 %v55
  %v185 = vunpack.c.l.b16 %v56
  %v186 = vunpack.c.l.b16 %v57
  %v187 = vunpack.c.l.b16 %v58
  %v188 = vunpack.c.l.b16 %v59
  %v189 = vunpack.c.l.b16 %v60
  %v190 = vunpack.c.l.b16 %v61
  %v191 = vunpack.c.l.b16 %v62
  %v192 = vunpack.c.l.b16 %v63
  %v193 = vunpack.c.l.b16 %v64
  %v194 = vunpack.c.l.b16 %v65
  %v195 = vunpack.c.l.b16 %v66
  %v196 = vunpack.c.l.b16 %v67
  %v197 = vunpack.c.l.b16 %v68
  %v198 = vunpack.c.l.b16 %v69
  %v199 = vunpack.c.l.b16 %v70
  %v200 = vunpack.c.l.b16 %v71
  %v201 = vunpack.c.l.b16 %v72
  %v202 = vunpack.c.l.b16 %v73
  %v203 = vunpack.c.l.b16 %v74
  %v204 = vunpack.c.l.b16 %v75
  %v205 = vunpack.c.l.b16 %v76
  %v206 = vunpack.c.l.b16 %v77
  %v207 = vunpack.c.l.b16 %v78
  %v208 = vpack.c.b16 %v145, %v144
  %v209 = vpack.c.b16 %v147, %v146
  %v210 = vpack.c.b16 %v149, %v148
  %v211 = vpack.c.b16 %v151, %v150
  %v212 = vpack.c.b16 %v153, %v152
  %v213 = vpack.c.b16 %v155, %v154
  %v214 = vpack.c.b16 %v157, %v156
  %v215 = vpack.c.b16 %v159, %v158
  %v216 = vpack.c.b16 %v161, %v160
  %v217 = vpack.c.b16 %v163, %v162
  %v218 = vpack.c.b16 %v165, %v164
  %v219 = vpack.c.b16 %v167, %v166
  %v220 = vpack.c.b16 %v169, %v168
  %v221 = vpack.c.b16 %v171, %v170
  %v222 = vpack.c.b16 %v173, %v172
  %v223 = vpack.c.b16 %v175, %v174
  %v224 = vpack.c.b16 %v177, %v176
  %v225 = vpack.c.b16 %v179, %v178
  %v226 = vpack.c.b16 %v181, %v180
  %v227 = vpack.c.b16 %v183, %v182
  %v228 = vpack.c.b16 %v185, %v184
  %v229 = vpack.c.b16 %v187, %v186
  %v230 = vpack.c.b16 %v189, %v188
  %v231 = vpack.c.b16 %v191, %v190
  %v232 = vpack.c.b16 %v193, %v192
  %v233 = vpack.c.b16 %v195, %v194
  %v234 = vpack.c.b16 %v197, %v196
  %v235 = vpack.c.b16 %v199, %v198
  %v236 = vpack.c.b16 %v201, %v200
  %v237 = vpack.c.b16 %v203, %v202
  %v238 = vpack.c.b16 %v205, %v204
  %v239 = vpack.c.b16 %v207, %v206
  %vm240 = vcmask 31744
  %v242 = vsel %vm240, %v208, 0
  %v245 = vsel %vm240, %v209, 0
  %v248 = vsel %vm240, %v210, 0
  %v251 = vsel %vm240, %v211, 0
  %v254 = vsel %vm240, %v212, 0
  %v257 = vsel %vm240, %v213, 0
  %v260 = vsel %vm240, %v214, 0
  %v263 = vsel %vm240, %v215, 0
  %v266 = vsel %vm240, %v216, 0
  %v269 = vsel %vm240, %v217, 0
  %v272 = vsel %vm240, %v218, 0
  %v275 = vsel %vm240, %v219, 0
  %v278 = vsel %vm240, %v220, 0
  %v281 = vsel %vm240, %v221, 0
  %v284 = vsel %vm240, %v222, 0
  %v287 = vsel %vm240, %v223, 0
  %v290 = vsel %vm240, %v224, 0
  %v293 = vsel %vm240, %v225, 0
  %v296 = vsel %vm240, %v226, 0
  %v299 = vsel %vm240, %v227, 0
  %v302 = vsel %vm240, %v228, 0
  %v305 = vsel %vm240, %v229, 0
  %v308 = vsel %vm240, %v230, 0
  %v311 = vsel %vm240, %v231, 0
  %v314 = vsel %vm240, %v232, 0
  %v317 = vsel %vm240, %v233, 0
  %v320 = vsel %vm240, %v234, 0
  %v323 = vsel %vm240, %v235, 0
  %v326 = vsel %vm240, %v236, 0
  %v329 = vsel %vm240, %v237, 0
  %v332 = vsel %vm240, %v238, 0
  %v335 = vsel %vm240, %v239, 0
  %vm337 = vcmask 1041408
  %v339 = vsel %vm337, %v79, 0
  %341 = vmatprep.subr.bf16.mxu0 0
  %342 = vmatpush1.bf16.msra.mxu0 %v339
  %343 = vmatprep.subr.bf16.mxu0 0
  %344 = vmatpush1.bf16.msra.mxu0 0
  %345 = vmatprep.subr.bf16.mxu0 0
  %346 = vmatpush1.bf16.msra.mxu0 0
  %347 = vmatprep.subr.bf16.mxu0 0
  %348 = vmatpush1.bf16.msra.mxu0 0
  %349 = vmatprep.subr.bf16.mxu0 0
  %350 = vmatpush1.bf16.msra.mxu0 0
  %351 = vmatprep.subr.bf16.mxu0 0
  %352 = vmatpush1.bf16.msra.mxu0 0
  %353 = vmatprep.subr.bf16.mxu0 0
  %354 = vmatpush1.bf16.msra.mxu0 0
  %355 = vmatprep.subr.bf16.mxu0 0
  %356 = vmatpush1.bf16.msra.mxu0 0
  %357 = vmatprep.subr.bf16.mxu0 0
  %358 = vmatpush1.bf16.msra.mxu0 0
  %359 = vmatprep.subr.bf16.mxu0 0
  %360 = vmatpush1.bf16.msra.mxu0 0
  %361 = vmatprep.subr.bf16.mxu0 0
  %362 = vmatpush1.bf16.msra.mxu0 0
  %363 = vmatprep.subr.bf16.mxu0 0
  %364 = vmatpush1.bf16.msra.mxu0 0
  %365 = vmatprep.subr.bf16.mxu0 0
  %366 = vmatpush1.bf16.msra.mxu0 0
  %367 = vmatprep.subr.bf16.mxu0 0
  %368 = vmatpush1.bf16.msra.mxu0 0
  %369 = vmatprep.subr.bf16.mxu0 0
  %370 = vmatpush1.bf16.msra.mxu0 0
  %371 = vmatprep.subr.bf16.mxu0 0
  %372 = vmatpush1.bf16.msra.mxu0 0
  %373 = vmatprep.mubr.bf16.mxu0 0
  %374 = vmatmul.mubr.bf16.gmra.mrb[0].mxu0 %v242
  %v375 = vpop.f32.mrb[0].mxu0
  %v376 = vadd.f32 0.0, %v375
  %v377 = vpop.f32.mrb[0].mxu0
  %v378 = vpop.f32.mrb[0].mxu0
  %v379 = vadd.f32 0.0, %v378
  %v380 = vpop.f32.mrb[0].mxu0
  %381 = vmatprep.mubr.bf16.mxu0 0
  %382 = vmatmul.mubr.bf16.gmra.mrb[0].mxu0 %v245
  %v383 = vpop.f32.mrb[0].mxu0
  %v384 = vadd.f32 0.0, %v383
  %v385 = vpop.f32.mrb[0].mxu0
  %v386 = vpop.f32.mrb[0].mxu0
  %v387 = vadd.f32 0.0, %v386
  %v388 = vpop.f32.mrb[0].mxu0
  %389 = vmatprep.mubr.bf16.mxu0 0
  %390 = vmatmul.mubr.bf16.gmra.mrb[0].mxu0 %v248
  %v391 = vpop.f32.mrb[0].mxu0
  %v392 = vadd.f32 0.0, %v391
  %v393 = vpop.f32.mrb[0].mxu0
  %v394 = vpop.f32.mrb[0].mxu0
  %v395 = vadd.f32 0.0, %v394
  %v396 = vpop.f32.mrb[0].mxu0
  %397 = vmatprep.mubr.bf16.mxu0 0
  %398 = vmatmul.mubr.bf16.gmra.mrb[0].mxu0 %v251
  %v399 = vpop.f32.mrb[0].mxu0
  %v400 = vadd.f32 0.0, %v399
  %v401 = vpop.f32.mrb[0].mxu0
  %v402 = vpop.f32.mrb[0].mxu0
  %v403 = vadd.f32 0.0, %v402
  %v404 = vpop.f32.mrb[0].mxu0
  %405 = vmatprep.mubr.bf16.mxu0 0
  %406 = vmatmul.mubr.bf16.gmra.mrb[0].mxu0 %v254
  %v407 = vpop.f32.mrb[0].mxu0
  %v408 = vadd.f32 0.0, %v407
  %v409 = vpop.f32.mrb[0].mxu0
  %v410 = vpop.f32.mrb[0].mxu0
  %v411 = vadd.f32 0.0, %v410
  %v412 = vpop.f32.mrb[0].mxu0
  %413 = vmatprep.mubr.bf16.mxu0 0
  %414 = vmatmul.mubr.bf16.gmra.mrb[0].mxu0 %v257
  %v415 = vpop.f32.mrb[0].mxu0
  %v416 = vadd.f32 0.0, %v415
  %v417 = vpop.f32.mrb[0].mxu0
  %v418 = vpop.f32.mrb[0].mxu0
  %v419 = vadd.f32 0.0, %v418
  %v420 = vpop.f32.mrb[0].mxu0
  %421 = vmatprep.mubr.bf16.mxu0 0
  %422 = vmatmul.mubr.bf16.gmra.mrb[0].mxu0 %v260
  %v423 = vpop.f32.mrb[0].mxu0
  %v424 = vadd.f32 0.0, %v423
  %v425 = vpop.f32.mrb[0].mxu0
  %v426 = vpop.f32.mrb[0].mxu0
  %v427 = vadd.f32 0.0, %v426
  %v428 = vpop.f32.mrb[0].mxu0
  %429 = vmatprep.mubr.bf16.mxu0 0
  %430 = vmatmul.mubr.bf16.gmra.mrb[0].mxu0 %v263
  %v431 = vpop.f32.mrb[0].mxu0
  %v432 = vadd.f32 0.0, %v431
  %v433 = vpop.f32.mrb[0].mxu0
  %v434 = vpop.f32.mrb[0].mxu0
  %v435 = vadd.f32 0.0, %v434
  %v436 = vpop.f32.mrb[0].mxu0
  %437 = vmatprep.mubr.bf16.mxu0 0
  %438 = vmatmul.mubr.bf16.gmra.mrb[0].mxu0 %v266
  %v439 = vpop.f32.mrb[0].mxu0
  %v440 = vadd.f32 0.0, %v439
  %v441 = vpop.f32.mrb[0].mxu0
  %v442 = vpop.f32.mrb[0].mxu0
  %v443 = vadd.f32 0.0, %v442
  %v444 = vpop.f32.mrb[0].mxu0
  %445 = vmatprep.mubr.bf16.mxu0 0
  %446 = vmatmul.mubr.bf16.gmra.mrb[0].mxu0 %v269
  %v447 = vpop.f32.mrb[0].mxu0
  %v448 = vadd.f32 0.0, %v447
  %v449 = vpop.f32.mrb[0].mxu0
  %v450 = vpop.f32.mrb[0].mxu0
  %v451 = vadd.f32 0.0, %v450
  %v452 = vpop.f32.mrb[0].mxu0
  %453 = vmatprep.mubr.bf16.mxu0 0
  %454 = vmatmul.mubr.bf16.gmra.mrb[0].mxu0 %v272
  %v455 = vpop.f32.mrb[0].mxu0
  %v456 = vadd.f32 0.0, %v455
  %v457 = vpop.f32.mrb[0].mxu0
  %v458 = vpop.f32.mrb[0].mxu0
  %v459 = vadd.f32 0.0, %v458
  %v460 = vpop.f32.mrb[0].mxu0
  %461 = vmatprep.mubr.bf16.mxu0 0
  %462 = vmatmul.mubr.bf16.gmra.mrb[0].mxu0 %v275
  %v463 = vpop.f32.mrb[0].mxu0
  %v464 = vadd.f32 0.0, %v463
  %v465 = vpop.f32.mrb[0].mxu0
  %v466 = vpop.f32.mrb[0].mxu0
  %v467 = vadd.f32 0.0, %v466
  %v468 = vpop.f32.mrb[0].mxu0
  %469 = vmatprep.mubr.bf16.mxu0 0
  %470 = vmatmul.mubr.bf16.gmra.mrb[0].mxu0 %v278
  %v471 = vpop.f32.mrb[0].mxu0
  %v472 = vadd.f32 0.0, %v471
  %v473 = vpop.f32.mrb[0].mxu0
  %v474 = vpop.f32.mrb[0].mxu0
  %v475 = vadd.f32 0.0, %v474
  %v476 = vpop.f32.mrb[0].mxu0
  %477 = vmatprep.mubr.bf16.mxu0 0
  %478 = vmatmul.mubr.bf16.gmra.mrb[0].mxu0 %v281
  %v479 = vpop.f32.mrb[0].mxu0
  %v480 = vadd.f32 0.0, %v479
  %v481 = vpop.f32.mrb[0].mxu0
  %v482 = vpop.f32.mrb[0].mxu0
  %v483 = vadd.f32 0.0, %v482
  %v484 = vpop.f32.mrb[0].mxu0
  %485 = vmatprep.mubr.bf16.mxu0 0
  %486 = vmatmul.mubr.bf16.gmra.mrb[0].mxu0 %v284
  %v487 = vpop.f32.mrb[0].mxu0
  %v488 = vadd.f32 0.0, %v487
  %v489 = vpop.f32.mrb[0].mxu0
  %v490 = vpop.f32.mrb[0].mxu0
  %v491 = vadd.f32 0.0, %v490
  %v492 = vpop.f32.mrb[0].mxu0
  %493 = vmatprep.mubr.bf16.mxu0 0
  %494 = vmatmul.mubr.bf16.gmra.mrb[0].mxu0 %v287
  %v495 = vpop.f32.mrb[0].mxu0
  %v496 = vadd.f32 0.0, %v495
  %v497 = vpop.f32.mrb[0].mxu0
  %v498 = vpop.f32.mrb[0].mxu0
  %v499 = vadd.f32 0.0, %v498
  %v500 = vpop.f32.mrb[0].mxu0
  %501 = vmatprep.mubr.bf16.mxu0 0
  %502 = vmatmul.mubr.bf16.gmra.mrb[0].mxu0 %v290
  %v503 = vpop.f32.mrb[0].mxu0
  %v504 = vadd.f32 0.0, %v503
  %v505 = vpop.f32.mrb[0].mxu0
  %v506 = vpop.f32.mrb[0].mxu0
  %v507 = vadd.f32 0.0, %v506
  %v508 = vpop.f32.mrb[0].mxu0
  %509 = vmatprep.mubr.bf16.mxu0 0
  %510 = vmatmul.mubr.bf16.gmra.mrb[0].mxu0 %v293
  %v511 = vpop.f32.mrb[0].mxu0
  %v512 = vadd.f32 0.0, %v511
  %v513 = vpop.f32.mrb[0].mxu0
  %v514 = vpop.f32.mrb[0].mxu0
  %v515 = vadd.f32 0.0, %v514
  %v516 = vpop.f32.mrb[0].mxu0
  %517 = vmatprep.mubr.bf16.mxu0 0
  %518 = vmatmul.mubr.bf16.gmra.mrb[0].mxu0 %v296
  %v519 = vpop.f32.mrb[0].mxu0
  %v520 = vadd.f32 0.0, %v519
  %v521 = vpop.f32.mrb[0].mxu0
  %v522 = vpop.f32.mrb[0].mxu0
  %v523 = vadd.f32 0.0, %v522
  %v524 = vpop.f32.mrb[0].mxu0
  %525 = vmatprep.mubr.bf16.mxu0 0
  %526 = vmatmul.mubr.bf16.gmra.mrb[0].mxu0 %v299
  %v527 = vpop.f32.mrb[0].mxu0
  %v528 = vadd.f32 0.0, %v527
  %v529 = vpop.f32.mrb[0].mxu0
  %v530 = vpop.f32.mrb[0].mxu0
  %v531 = vadd.f32 0.0, %v530
  %v532 = vpop.f32.mrb[0].mxu0
  %533 = vmatprep.mubr.bf16.mxu0 0
  %534 = vmatmul.mubr.bf16.gmra.mrb[0].mxu0 %v302
  %v535 = vpop.f32.mrb[0].mxu0
  %v536 = vadd.f32 0.0, %v535
  %v537 = vpop.f32.mrb[0].mxu0
  %v538 = vpop.f32.mrb[0].mxu0
  %v539 = vadd.f32 0.0, %v538
  %v540 = vpop.f32.mrb[0].mxu0
  %541 = vmatprep.mubr.bf16.mxu0 0
  %542 = vmatmul.mubr.bf16.gmra.mrb[0].mxu0 %v305
  %v543 = vpop.f32.mrb[0].mxu0
  %v544 = vadd.f32 0.0, %v543
  %v545 = vpop.f32.mrb[0].mxu0
  %v546 = vpop.f32.mrb[0].mxu0
  %v547 = vadd.f32 0.0, %v546
  %v548 = vpop.f32.mrb[0].mxu0
  %549 = vmatprep.mubr.bf16.mxu0 0
  %550 = vmatmul.mubr.bf16.gmra.mrb[0].mxu0 %v308
  %v551 = vpop.f32.mrb[0].mxu0
  %v552 = vadd.f32 0.0, %v551
  %v553 = vpop.f32.mrb[0].mxu0
  %v554 = vpop.f32.mrb[0].mxu0
  %v555 = vadd.f32 0.0, %v554
  %v556 = vpop.f32.mrb[0].mxu0
  %557 = vmatprep.mubr.bf16.mxu0 0
  %558 = vmatmul.mubr.bf16.gmra.mrb[0].mxu0 %v311
  %v559 = vpop.f32.mrb[0].mxu0
  %v560 = vadd.f32 0.0, %v559
  %v561 = vpop.f32.mrb[0].mxu0
  %v562 = vpop.f32.mrb[0].mxu0
  %v563 = vadd.f32 0.0, %v562
  %v564 = vpop.f32.mrb[0].mxu0
  %565 = vmatprep.mubr.bf16.mxu0 0
  %566 = vmatmul.mubr.bf16.gmra.mrb[0].mxu0 %v314
  %v567 = vpop.f32.mrb[0].mxu0
  %v568 = vadd.f32 0.0, %v567
  %v569 = vpop.f32.mrb[0].mxu0
  %v570 = vpop.f32.mrb[0].mxu0
  %v571 = vadd.f32 0.0, %v570
  %v572 = vpop.f32.mrb[0].mxu0
  %573 = vmatprep.mubr.bf16.mxu0 0
  %574 = vmatmul.mubr.bf16.gmra.mrb[0].mxu0 %v317
  %v575 = vpop.f32.mrb[0].mxu0
  %v576 = vadd.f32 0.0, %v575
  %v577 = vpop.f32.mrb[0].mxu0
  %v578 = vpop.f32.mrb[0].mxu0
  %v579 = vadd.f32 0.0, %v578
  %v580 = vpop.f32.mrb[0].mxu0
  %581 = vmatprep.mubr.bf16.mxu0 0
  %582 = vmatmul.mubr.bf16.gmra.mrb[0].mxu0 %v320
  %v583 = vpop.f32.mrb[0].mxu0
  %v584 = vadd.f32 0.0, %v583
  %v585 = vpop.f32.mrb[0].mxu0
  %v586 = vpop.f32.mrb[0].mxu0
  %v587 = vadd.f32 0.0, %v586
  %v588 = vpop.f32.mrb[0].mxu0
  %589 = vmatprep.mubr.bf16.mxu0 0
  %590 = vmatmul.mubr.bf16.gmra.mrb[0].mxu0 %v323
  %v591 = vpop.f32.mrb[0].mxu0
  %v592 = vadd.f32 0.0, %v591
  %v593 = vpop.f32.mrb[0].mxu0
  %v594 = vpop.f32.mrb[0].mxu0
  %v595 = vadd.f32 0.0, %v594
  %v596 = vpop.f32.mrb[0].mxu0
  %597 = vmatprep.mubr.bf16.mxu0 0
  %598 = vmatmul.mubr.bf16.gmra.mrb[0].mxu0 %v326
  %v599 = vpop.f32.mrb[0].mxu0
  %v600 = vadd.f32 0.0, %v599
  %v601 = vpop.f32.mrb[0].mxu0
  %v602 = vpop.f32.mrb[0].mxu0
  %v603 = vadd.f32 0.0, %v602
  %v604 = vpop.f32.mrb[0].mxu0
  %605 = vmatprep.mubr.bf16.mxu0 0
  %606 = vmatmul.mubr.bf16.gmra.mrb[0].mxu0 %v329
  %v607 = vpop.f32.mrb[0].mxu0
  %v608 = vadd.f32 0.0, %v607
  %v609 = vpop.f32.mrb[0].mxu0
  %v610 = vpop.f32.mrb[0].mxu0
  %v611 = vadd.f32 0.0, %v610
  %v612 = vpop.f32.mrb[0].mxu0
  %613 = vmatprep.mubr.bf16.mxu0 0
  %614 = vmatmul.mubr.bf16.gmra.mrb[0].mxu0 %v332
  %v615 = vpop.f32.mrb[0].mxu0
  %v616 = vadd.f32 0.0, %v615
  %v617 = vpop.f32.mrb[0].mxu0
  %v618 = vpop.f32.mrb[0].mxu0
  %v619 = vadd.f32 0.0, %v618
  %v620 = vpop.f32.mrb[0].mxu0
  %621 = vmatprep.mubr.bf16.mxu0 0
  %622 = vmatmul.mubr.bf16.gmra.mrb[0].mxu0 %v335
  %v623 = vpop.f32.mrb[0].mxu0
  %v624 = vadd.f32 0.0, %v623
  %v625 = vpop.f32.mrb[0].mxu0
  %v626 = vpop.f32.mrb[0].mxu0
  %v627 = vadd.f32 0.0, %v626
  %v628 = vpop.f32.mrb[0].mxu0
  %629 = vdwg.mxu0
  %630 = vst [vmem:[%s2] sm:$0xff] %v376
  %631 = vst [vmem:[%s2 + $0x8] sm:$0xff] %v379
  %632 = vst [vmem:[%s2 + $0x10] sm:$0xff] %v384
  %633 = vst [vmem:[%s2 + $0x18] sm:$0xff] %v387
  %634 = vst [vmem:[%s2 + $0x20] sm:$0xff] %v392
  %635 = vst [vmem:[%s2 + $0x28] sm:$0xff] %v395
  %636 = vst [vmem:[%s2 + $0x30] sm:$0xff] %v400
  %637 = vst [vmem:[%s2 + $0x38] sm:$0xff] %v403
  %638 = vst [vmem:[%s2 + $0x40] sm:$0xff] %v408
  %639 = vst [vmem:[%s2 + $0x48] sm:$0xff] %v411
  %640 = vst [vmem:[%s2 + $0x50] sm:$0xff] %v416
  %641 = vst [vmem:[%s2 + $0x58] sm:$0xff] %v419
  %642 = vst [vmem:[%s2 + $0x60] sm:$0xff] %v424
  %643 = vst [vmem:[%s2 + $0x68] sm:$0xff] %v427
  %644 = vst [vmem:[%s2 + $0x70] sm:$0xff] %v432
  %645 = vst [vmem:[%s2 + $0x78] sm:$0xff] %v435
  %646 = vst [vmem:[%s2 + $0x80] sm:$0xff] %v440
  %647 = vst [vmem:[%s2 + $0x88] sm:$0xff] %v443
  %648 = vst [vmem:[%s2 + $0x90] sm:$0xff] %v448
  %649 = vst [vmem:[%s2 + $0x98] sm:$0xff] %v451
  %650 = vst [vmem:[%s2 + $0xa0] sm:$0xff] %v456
  %651 = vst [vmem:[%s2 + $0xa8] sm:$0xff] %v459
  %652 = vst [vmem:[%s2 + $0xb0] sm:$0xff] %v464
  %653 = vst [vmem:[%s2 + $0xb8] sm:$0xff] %v467
  %654 = vst [vmem:[%s2 + $0xc0] sm:$0xff] %v472
  %655 = vst [vmem:[%s2 + $0xc8] sm:$0xff] %v475
  %656 = vst [vmem:[%s2 + $0xd0] sm:$0xff] %v480
  %657 = vst [vmem:[%s2 + $0xd8] sm:$0xff] %v483
  %658 = vst [vmem:[%s2 + $0xe0] sm:$0xff] %v488
  %659 = vst [vmem:[%s2 + $0xe8] sm:$0xff] %v491
  %660 = vst [vmem:[%s2 + $0xf0] sm:$0xff] %v496
  %661 = vst [vmem:[%s2 + $0xf8] sm:$0xff] %v499
  %662 = vst [vmem:[%s2 + $0x100] sm:$0xff] %v504
  %663 = vst [vmem:[%s2 + $0x108] sm:$0xff] %v507
  %664 = vst [vmem:[%s2 + $0x110] sm:$0xff] %v512
  %665 = vst [vmem:[%s2 + $0x118] sm:$0xff] %v515
  %666 = vst [vmem:[%s2 + $0x120] sm:$0xff] %v520
  %667 = vst [vmem:[%s2 + $0x128] sm:$0xff] %v523
  %668 = vst [vmem:[%s2 + $0x130] sm:$0xff] %v528
  %669 = vst [vmem:[%s2 + $0x138] sm:$0xff] %v531
  %670 = vst [vmem:[%s2 + $0x140] sm:$0xff] %v536
  %671 = vst [vmem:[%s2 + $0x148] sm:$0xff] %v539
  %672 = vst [vmem:[%s2 + $0x150] sm:$0xff] %v544
  %673 = vst [vmem:[%s2 + $0x158] sm:$0xff] %v547
  %674 = vst [vmem:[%s2 + $0x160] sm:$0xff] %v552
  %675 = vst [vmem:[%s2 + $0x168] sm:$0xff] %v555
  %676 = vst [vmem:[%s2 + $0x170] sm:$0xff] %v560
  %677 = vst [vmem:[%s2 + $0x178] sm:$0xff] %v563
  %678 = vst [vmem:[%s2 + $0x180] sm:$0xff] %v568
  %679 = vst [vmem:[%s2 + $0x188] sm:$0xff] %v571
  %680 = vst [vmem:[%s2 + $0x190] sm:$0xff] %v576
  %681 = vst [vmem:[%s2 + $0x198] sm:$0xff] %v579
  %682 = vst [vmem:[%s2 + $0x1a0] sm:$0xff] %v584
  %683 = vst [vmem:[%s2 + $0x1a8] sm:$0xff] %v587
  %684 = vst [vmem:[%s2 + $0x1b0] sm:$0xff] %v592
  %685 = vst [vmem:[%s2 + $0x1b8] sm:$0xff] %v595
  %686 = vst [vmem:[%s2 + $0x1c0] sm:$0xff] %v600
  %687 = vst [vmem:[%s2 + $0x1c8] sm:$0xff] %v603
  %688 = vst [vmem:[%s2 + $0x1d0] sm:$0xff] %v608
  %689 = vst [vmem:[%s2 + $0x1d8] sm:$0xff] %v611
  %690 = vst [vmem:[%s2 + $0x1e0] sm:$0xff] %v616
  %691 = vst [vmem:[%s2 + $0x1e8] sm:$0xff] %v619
  %692 = vst [vmem:[%s2 + $0x1f0] sm:$0xff] %v624
  %693 = vst [vmem:[%s2 + $0x1f8] sm:$0xff] %v627
  %p694 = scmp.eq.s32.totalorder 0, 0
  // Predicated region
  $region10: #{inception_b_forward.11} parent=0 // pred_check
    %p695 = pneg %p694
  $region11: #{inception_b_forward.11} parent=0 // pred_check_branch
    %697 = sbr.rel (%p695) target = $region13
  $region12: #{inception_b_forward.11} parent=0 // pred_region
    %698 = vst [vmem:[%s3] sm:$0x1] 0.0
    %699 = vst [vmem:[%s4] sm:$0x1] 0.0
  $region13: #{inception_b_forward.11} parent=0 // pred_fallthru
    _
  %v700 = vld [vmem:[%s3] sm:$0x1]
  %v701 = vadd.f32 %v376, %v379
  %v702 = vadd.f32 %v701, %v384
  %v703 = vadd.f32 %v702, %v387
  %v704 = vadd.f32 %v703, %v392
  %v705 = vadd.f32 %v704, %v395
  %v706 = vadd.f32 %v705, %v400
  %v707 = vadd.f32 %v706, %v403
  %v708 = vadd.f32 %v707, %v408
  %v709 = vadd.f32 %v708, %v411
  %v710 = vadd.f32 %v709, %v416
  %v711 = vadd.f32 %v710, %v419
  %v712 = vadd.f32 %v711, %v424
  %v713 = vadd.f32 %v712, %v427
  %v714 = vadd.f32 %v713, %v432
  %v715 = vadd.f32 %v714, %v435
  %v716 = vadd.f32 %v715, %v440
  %v717 = vadd.f32 %v716, %v443
  %v718 = vadd.f32 %v717, %v448
  %v719 = vadd.f32 %v718, %v451
  %v720 = vadd.f32 %v719, %v456
  %v721 = vadd.f32 %v720, %v459
  %v722 = vadd.f32 %v721, %v464
  %v723 = vadd.f32 %v722, %v467
  %v724 = vadd.f32 %v723, %v472
  %v725 = vadd.f32 %v724, %v475
  %v726 = vadd.f32 %v725, %v480
  %v727 = vadd.f32 %v726, %v483
  %v728 = vadd.f32 %v727, %v488
  %v729 = vadd.f32 %v728, %v491
  %v730 = vadd.f32 %v729, %v496
  %v731 = vadd.f32 %v730, %v499
  %v732 = vadd.f32 %v731, %v504
  %v733 = vadd.f32 %v732, %v507
  %v734 = vadd.f32 %v733, %v512
  %v735 = vadd.f32 %v734, %v515
  %v736 = vadd.f32 %v735, %v520
  %v737 = vadd.f32 %v736, %v523
  %v738 = vadd.f32 %v737, %v528
  %v739 = vadd.f32 %v738, %v531
  %v740 = vadd.f32 %v739, %v536
  %v741 = vadd.f32 %v740, %v539
  %v742 = vadd.f32 %v741, %v544
  %v743 = vadd.f32 %v742, %v547
  %v744 = vadd.f32 %v743, %v552
  %v745 = vadd.f32 %v744, %v555
  %v746 = vadd.f32 %v745, %v560
  %v747 = vadd.f32 %v746, %v563
  %v748 = vadd.f32 %v747, %v568
  %v749 = vadd.f32 %v748, %v571
  %v750 = vadd.f32 %v749, %v576
  %v751 = vadd.f32 %v750, %v579
  %v752 = vadd.f32 %v751, %v584
  %v753 = vadd.f32 %v752, %v587
  %v754 = vadd.f32 %v753, %v592
  %v755 = vadd.f32 %v754, %v595
  %v756 = vadd.f32 %v755, %v600
  %v757 = vadd.f32 %v756, %v603
  %v758 = vadd.f32 %v757, %v608
  %v759 = vadd.f32 %v758, %v611
  %v760 = vadd.f32 %v759, %v616
  %v761 = vadd.f32 %v760, %v619
  %v762 = vadd.f32 %v761, %v624
  %v763 = vadd.f32 %v762, %v627
  %v764 = vrot.slane %v763, 4
  %v765 = vadd.f32 %v763, %v764
  %v766 = vrot.slane %v765, 2
  %v767 = vadd.f32 %v765, %v766
  %v768 = vrot.slane %v767, 1
  %v769 = vadd.f32 %v767, %v768
  %v770 = vadd.f32 %v700, %v769
  %771 = vst [vmem:[%s3] sm:$0x1] %v770
  %v772 = vld [vmem:[%s4] sm:$0x1]
  %v773 = vmul.f32 %v376, %v376
  %v774 = vmul.f32 %v379, %v379
  %v775 = vmul.f32 %v384, %v384
  %v776 = vmul.f32 %v387, %v387
  %v777 = vmul.f32 %v392, %v392
  %v778 = vmul.f32 %v395, %v395
  %v779 = vmul.f32 %v400, %v400
  %v780 = vmul.f32 %v403, %v403
  %v781 = vmul.f32 %v408, %v408
  %v782 = vmul.f32 %v411, %v411
  %v783 = vmul.f32 %v416, %v416
  %v784 = vmul.f32 %v419, %v419
  %v785 = vmul.f32 %v424, %v424
  %v786 = vmul.f32 %v427, %v427
  %v787 = vmul.f32 %v432, %v432
  %v788 = vmul.f32 %v435, %v435
  %v789 = vmul.f32 %v440, %v440
  %v790 = vmul.f32 %v443, %v443
  %v791 = vmul.f32 %v448, %v448
  %v792 = vmul.f32 %v451, %v451
  %v793 = vmul.f32 %v456, %v456
  %v794 = vmul.f32 %v459, %v459
  %v795 = vmul.f32 %v464, %v464
  %v796 = vmul.f32 %v467, %v467
  %v797 = vmul.f32 %v472, %v472
  %v798 = vmul.f32 %v475, %v475
  %v799 = vmul.f32 %v480, %v480
  %v800 = vmul.f32 %v483, %v483
  %v801 = vmul.f32 %v488, %v488
  %v802 = vmul.f32 %v491, %v491
  %v803 = vmul.f32 %v496, %v496
  %v804 = vmul.f32 %v499, %v499
  %v805 = vmul.f32 %v504, %v504
  %v806 = vmul.f32 %v507, %v507
  %v807 = vmul.f32 %v512, %v512
  %v808 = vmul.f32 %v515, %v515
  %v809 = vmul.f32 %v520, %v520
  %v810 = vmul.f32 %v523, %v523
  %v811 = vmul.f32 %v528, %v528
  %v812 = vmul.f32 %v531, %v531
  %v813 = vmul.f32 %v536, %v536
  %v814 = vmul.f32 %v539, %v539
  %v815 = vmul.f32 %v544, %v544
  %v816 = vmul.f32 %v547, %v547
  %v817 = vmul.f32 %v552, %v552
  %v818 = vmul.f32 %v555, %v555
  %v819 = vmul.f32 %v560, %v560
  %v820 = vmul.f32 %v563, %v563
  %v821 = vmul.f32 %v568, %v568
  %v822 = vmul.f32 %v571, %v571
  %v823 = vmul.f32 %v576, %v576
  %v824 = vmul.f32 %v579, %v579
  %v825 = vmul.f32 %v584, %v584
  %v826 = vmul.f32 %v587, %v587
  %v827 = vmul.f32 %v592, %v592
  %v828 = vmul.f32 %v595, %v595
  %v829 = vmul.f32 %v600, %v600
  %v830 = vmul.f32 %v603, %v603
  %v831 = vmul.f32 %v608, %v608
  %v832 = vmul.f32 %v611, %v611
  %v833 = vmul.f32 %v616, %v616
  %v834 = vmul.f32 %v619, %v619
  %v835 = vmul.f32 %v624, %v624
  %v836 = vmul.f32 %v627, %v627
  %v837 = vadd.f32 %v773, %v774
  %v838 = vadd.f32 %v837, %v775
  %v839 = vadd.f32 %v838, %v776
  %v840 = vadd.f32 %v839, %v777
  %v841 = vadd.f32 %v840, %v778
  %v842 = vadd.f32 %v841, %v779
  %v843 = vadd.f32 %v842, %v780
  %v844 = vadd.f32 %v843, %v781
  %v845 = vadd.f32 %v844, %v782
  %v846 = vadd.f32 %v845, %v783
  %v847 = vadd.f32 %v846, %v784
  %v848 = vadd.f32 %v847, %v785
  %v849 = vadd.f32 %v848, %v786
  %v850 = vadd.f32 %v849, %v787
  %v851 = vadd.f32 %v850, %v788
  %v852 = vadd.f32 %v851, %v789
  %v853 = vadd.f32 %v852, %v790
  %v854 = vadd.f32 %v853, %v791
  %v855 = vadd.f32 %v854, %v792
  %v856 = vadd.f32 %v855, %v793
  %v857 = vadd.f32 %v856, %v794
  %v858 = vadd.f32 %v857, %v795
  %v859 = vadd.f32 %v858, %v796
  %v860 = vadd.f32 %v859, %v797
  %v861 = vadd.f32 %v860, %v798
  %v862 = vadd.f32 %v861, %v799
  %v863 = vadd.f32 %v862, %v800
  %v864 = vadd.f32 %v863, %v801
  %v865 = vadd.f32 %v864, %v802
  %v866 = vadd.f32 %v865, %v803
  %v867 = vadd.f32 %v866, %v804
  %v868 = vadd.f32 %v867, %v805
  %v869 = vadd.f32 %v868, %v806
  %v870 = vadd.f32 %v869, %v807
  %v871 = vadd.f32 %v870, %v808
  %v872 = vadd.f32 %v871, %v809
  %v873 = vadd.f32 %v872, %v810
  %v874 = vadd.f32 %v873, %v811
  %v875 = vadd.f32 %v874, %v812
  %v876 = vadd.f32 %v875, %v813
  %v877 = vadd.f32 %v876, %v814
  %v878 = vadd.f32 %v877, %v815
  %v879 = vadd.f32 %v878, %v816
  %v880 = vadd.f32 %v879, %v817
  %v881 = vadd.f32 %v880, %v818
  %v882 = vadd.f32 %v881, %v819
  %v883 = vadd.f32 %v882, %v820
  %v884 = vadd.f32 %v883, %v821
  %v885 = vadd.f32 %v884, %v822
  %v886 = vadd.f32 %v885, %v823
  %v887 = vadd.f32 %v886, %v824
  %v888 = vadd.f32 %v887, %v825
  %v889 = vadd.f32 %v888, %v826
  %v890 = vadd.f32 %v889, %v827
  %v891 = vadd.f32 %v890, %v828
  %v892 = vadd.f32 %v891, %v829
  %v893 = vadd.f32 %v892, %v830
  %v894 = vadd.f32 %v893, %v831
  %v895 = vadd.f32 %v894, %v832
  %v896 = vadd.f32 %v895, %v833
  %v897 = vadd.f32 %v896, %v834
  %v898 = vadd.f32 %v897, %v835
  %v899 = vadd.f32 %v898, %v836
  %v900 = vrot.slane %v899, 4
  %v901 = vadd.f32 %v899, %v900
  %v902 = vrot.slane %v901, 2
  %v903 = vadd.f32 %v901, %v902
  %v904 = vrot.slane %v903, 1
  %v905 = vadd.f32 %v903, %v904
  %v906 = vadd.f32 %v772, %v905
  %907 = vst [vmem:[%s4] sm:$0x1] %v906
  // Predicated region
  $region14: #{inception_b_forward.11} parent=0 // pred_check
    _
  $region15: #{inception_b_forward.11} parent=0 // pred_check_branch
    %909 = sbr.rel (0) target = $region17
  $region16: #{inception_b_forward.11} parent=0 // pred_region
    _
  $region17: #{inception_b_forward.11} parent=0 // pred_fallthru
    _
  // Predicated region
  $region18: #{inception_b_forward.11} parent=0 // pred_check
    _
  $region19: #{inception_b_forward.11} parent=0 // pred_check_branch
    %911 = sbr.rel (0) target = $region21
  $region20: #{inception_b_forward.11} parent=0 // pred_region
    _
  $region21: #{inception_b_forward.11} parent=0 // pred_fallthru
    _
  // Predicated region
  $region22: #{inception_b_forward.11} parent=0 // pred_check
    _
  $region23: #{inception_b_forward.11} parent=0 // pred_check_branch
    %913 = sbr.rel (0) target = $region25
  $region24: #{inception_b_forward.11} parent=0 // pred_region
    _
  $region25: #{inception_b_forward.11} parent=0 // pred_fallthru
    _
  // Predicated region
  $region26: #{inception_b_forward.11} parent=0 // pred_check
    _
  $region27: #{inception_b_forward.11} parent=0 // pred_check_branch
    %915 = sbr.rel (0) target = $region29
  $region28: #{inception_b_forward.11} parent=0 // pred_region
    _
  $region29: #{inception_b_forward.11} parent=0 // pred_fallthru
    _
  // Predicated region
  $region30: #{inception_b_forward.11} parent=0 // pred_check
    _
  $region31: #{inception_b_forward.11} parent=0 // pred_check_branch
    %917 = sbr.rel (0) target = $region33
  $region32: #{inception_b_forward.11} parent=0 // pred_region
    _
  $region33: #{inception_b_forward.11} parent=0 // pred_fallthru
    _
  // Predicated region
  $region34: #{inception_b_forward.11} parent=0 // pred_check
    _
  $region35: #{inception_b_forward.11} parent=0 // pred_check_branch
    %919 = sbr.rel (0) target = $region37
  $region36: #{inception_b_forward.11} parent=0 // pred_region
    _
  $region37: #{inception_b_forward.11} parent=0 // pred_fallthru
    _

// kernel: inception_b_forward.13
$region0: #{inception_b_forward.13}
  #allocation0 [shape = 'u32[]', space=smem, size = 0x4, offset = 0x4, fixed_abs, tag = 'smem constant byte address 0x4 - core index']
  #allocation1 [shape = 'u32[144,128]{1,0:T(1,128)}', space=vmem, size = 0x12000, scoped, tag = 'internal scratch']
  %s0 = inlined_call_operand.vmem [shape: bf16[512,576], index: 0, kind: input, shape index: {}]
  %s1 = inlined_call_operand.vmem [shape: bf16[576,128], index: 1, kind: input, shape index: {}]
  %s2 = inlined_call_operand.vmem [shape: f32[512,128], index: 2, kind: output, shape index: {0}]
  %s3 = inlined_call_operand.vmem [shape: f32[1,128], index: 3, kind: output, shape index: {1}]
  %s4 = inlined_call_operand.vmem [shape: f32[1,128], index: 4, kind: output, shape index: {2}]
  %5 = xla_tuple %s2, %s3, %s4
  %s6 = sld [smem:[#allocation0]]
  $region38: #{inception_b_forward.13} parent=0
    _
  %s8 = ssub.s32 1, %s6
  %s9 = scalar_select 0, %s8, %s6
  // Predicated region
  $region2: #{inception_b_forward.13} parent=0 // pred_check
    _
  $region3: #{inception_b_forward.13} parent=0 // pred_check_branch
    %11 = sbr.rel (0) target = $region5
  $region4: #{inception_b_forward.13} parent=0 // pred_region
    _
  $region5: #{inception_b_forward.13} parent=0 // pred_fallthru
    _
  // Predicated region
  $region6: #{inception_b_forward.13} parent=0 // pred_check
    _
  $region7: #{inception_b_forward.13} parent=0 // pred_check_branch
    %13 = sbr.rel (0) target = $region9
  $region8: #{inception_b_forward.13} parent=0 // pred_region
    _
  $region9: #{inception_b_forward.13} parent=0 // pred_fallthru
    _
  %v15 = vld [vmem:[%s0] sm:$0xff]
  %v16 = vld [vmem:[%s0 + $0x8] sm:$0xff]
  %v17 = vld [vmem:[%s0 + $0x10] sm:$0xf]
  %v18 = vld [vmem:[%s0 + $0x14] sm:$0xff]
  %v19 = vld [vmem:[%s0 + $0x1c] sm:$0xff]
  %v20 = vld [vmem:[%s0 + $0x24] sm:$0xf]
  %v21 = vld [vmem:[%s0 + $0x28] sm:$0xff]
  %v22 = vld [vmem:[%s0 + $0x30] sm:$0xff]
  %v23 = vld [vmem:[%s0 + $0x38] sm:$0xf]
  %v24 = vld [vmem:[%s0 + $0x3c] sm:$0xff]
  %v25 = vld [vmem:[%s0 + $0x44] sm:$0xff]
  %v26 = vld [vmem:[%s0 + $0x4c] sm:$0xf]
  %v27 = vld [vmem:[%s0 + $0x50] sm:$0xff]
  %v28 = vld [vmem:[%s0 + $0x58] sm:$0xff]
  %v29 = vld [vmem:[%s0 + $0x60] sm:$0xf]
  %v30 = vld [vmem:[%s0 + $0x64] sm:$0xff]
  %v31 = vld [vmem:[%s0 + $0x6c] sm:$0xff]
  %v32 = vld [vmem:[%s0 + $0x74] sm:$0xf]
  %v33 = vld [vmem:[%s0 + $0x78] sm:$0xff]
  %v34 = vld [vmem:[%s0 + $0x80] sm:$0xff]
  %v35 = vld [vmem:[%s0 + $0x88] sm:$0xf]
  %v36 = vld [vmem:[%s0 + $0x8c] sm:$0xff]
  %v37 = vld [vmem:[%s0 + $0x94] sm:$0xff]
  %v38 = vld [vmem:[%s0 + $0x9c] sm:$0xf]
  %v39 = vld [vmem:[%s0 + $0xa0] sm:$0xff]
  %v40 = vld [vmem:[%s0 + $0xa8] sm:$0xff]
  %v41 = vld [vmem:[%s0 + $0xb0] sm:$0xf]
  %v42 = vld [vmem:[%s0 + $0xb4] sm:$0xff]
  %v43 = vld [vmem:[%s0 + $0xbc] sm:$0xff]
  %v44 = vld [vmem:[%s0 + $0xc4] sm:$0xf]
  %v45 = vld [vmem:[%s0 + $0xc8] sm:$0xff]
  %v46 = vld [vmem:[%s0 + $0xd0] sm:$0xff]
  %v47 = vld [vmem:[%s0 + $0xd8] sm:$0xf]
  %v48 = vld [vmem:[%s0 + $0xdc] sm:$0xff]
  %v49 = vld [vmem:[%s0 + $0xe4] sm:$0xff]
  %v50 = vld [vmem:[%s0 + $0xec] sm:$0xf]
  %v51 = vld [vmem:[%s0 + $0xf0] sm:$0xff]
  %v52 = vld [vmem:[%s0 + $0xf8] sm:$0xff]
  %v53 = vld [vmem:[%s0 + $0x100] sm:$0xf]
  %v54 = vld [vmem:[%s0 + $0x104] sm:$0xff]
  %v55 = vld [vmem:[%s0 + $0x10c] sm:$0xff]
  %v56 = vld [vmem:[%s0 + $0x114] sm:$0xf]
  %v57 = vld [vmem:[%s0 + $0x118] sm:$0xff]
  %v58 = vld [vmem:[%s0 + $0x120] sm:$0xff]
  %v59 = vld [vmem:[%s0 + $0x128] sm:$0xf]
  %v60 = vld [vmem:[%s0 + $0x12c] sm:$0xff]
  %v61 = vld [vmem:[%s0 + $0x134] sm:$0xff]
  %v62 = vld [vmem:[%s0 + $0x13c] sm:$0xf]
  %v63 = vld [vmem:[%s0 + $0x140] sm:$0xff]
  %v64 = vld [vmem:[%s0 + $0x148] sm:$0xff]
  %v65 = vld [vmem:[%s0 + $0x150] sm:$0xf]
  %v66 = vld [vmem:[%s0 + $0x154] sm:$0xff]
  %v67 = vld [vmem:[%s0 + $0x15c] sm:$0xff]
  %v68 = vld [vmem:[%s0 + $0x164] sm:$0xf]
  %v69 = vld [vmem:[%s0 + $0x168] sm:$0xff]
  %v70 = vld [vmem:[%s0 + $0x170] sm:$0xff]
  %v71 = vld [vmem:[%s0 + $0x178] sm:$0xf]
  %v72 = vld [vmem:[%s0 + $0x17c] sm:$0xff]
  %v73 = vld [vmem:[%s0 + $0x184] sm:$0xff]
  %v74 = vld [vmem:[%s0 + $0x18c] sm:$0xf]
  %v75 = vld [vmem:[%s0 + $0x190] sm:$0xff]
  %v76 = vld [vmem:[%s0 + $0x198] sm:$0xff]
  %v77 = vld [vmem:[%s0 + $0x1a0] sm:$0xf]
  %v78 = vld [vmem:[%s0 + $0x1a4] sm:$0xff]
  %v79 = vld [vmem:[%s0 + $0x1ac] sm:$0xff]
  %v80 = vld [vmem:[%s0 + $0x1b4] sm:$0xf]
  %v81 = vld [vmem:[%s0 + $0x1b8] sm:$0xff]
  %v82 = vld [vmem:[%s0 + $0x1c0] sm:$0xff]
  %v83 = vld [vmem:[%s0 + $0x1c8] sm:$0xf]
  %v84 = vld [vmem:[%s0 + $0x1cc] sm:$0xff]
  %v85 = vld [vmem:[%s0 + $0x1d4] sm:$0xff]
  %v86 = vld [vmem:[%s0 + $0x1dc] sm:$0xf]
  %v87 = vld [vmem:[%s0 + $0x1e0] sm:$0xff]
  %v88 = vld [vmem:[%s0 + $0x1e8] sm:$0xff]
  %v89 = vld [vmem:[%s0 + $0x1f0] sm:$0xf]
  %v90 = vld [vmem:[%s0 + $0x1f4] sm:$0xff]
  %v91 = vld [vmem:[%s0 + $0x1fc] sm:$0xff]
  %v92 = vld [vmem:[%s0 + $0x204] sm:$0xf]
  %v93 = vld [vmem:[%s0 + $0x208] sm:$0xff]
  %v94 = vld [vmem:[%s0 + $0x210] sm:$0xff]
  %v95 = vld [vmem:[%s0 + $0x218] sm:$0xf]
  %v96 = vld [vmem:[%s0 + $0x21c] sm:$0xff]
  %v97 = vld [vmem:[%s0 + $0x224] sm:$0xff]
  %v98 = vld [vmem:[%s0 + $0x22c] sm:$0xf]
  %v99 = vld [vmem:[%s0 + $0x230] sm:$0xff]
  %v100 = vld [vmem:[%s0 + $0x238] sm:$0xff]
  %v101 = vld [vmem:[%s0 + $0x240] sm:$0xf]
  %v102 = vld [vmem:[%s0 + $0x244] sm:$0xff]
  %v103 = vld [vmem:[%s0 + $0x24c] sm:$0xff]
  %v104 = vld [vmem:[%s0 + $0x254] sm:$0xf]
  %v105 = vld [vmem:[%s0 + $0x258] sm:$0xff]
  %v106 = vld [vmem:[%s0 + $0x260] sm:$0xff]
  %v107 = vld [vmem:[%s0 + $0x268] sm:$0xf]
  %v108 = vld [vmem:[%s0 + $0x26c] sm:$0xff]
  %v109 = vld [vmem:[%s0 + $0x274] sm:$0xff]
  %v110 = vld [vmem:[%s0 + $0x27c] sm:$0xf]
  %v111 = vld [vmem:[%s0 + $0x280] sm:$0xff]
  %v112 = vld [vmem:[%s0 + $0x288] sm:$0xff]
  %v113 = vld [vmem:[%s0 + $0x290] sm:$0xf]
  %v114 = vld [vmem:[%s0 + $0x294] sm:$0xff]
  %v115 = vld [vmem:[%s0 + $0x29c] sm:$0xff]
  %v116 = vld [vmem:[%s0 + $0x2a4] sm:$0xf]
  %v117 = vld [vmem:[%s0 + $0x2a8] sm:$0xff]
  %v118 = vld [vmem:[%s0 + $0x2b0] sm:$0xff]
  %v119 = vld [vmem:[%s0 + $0x2b8] sm:$0xf]
  %v120 = vld [vmem:[%s0 + $0x2bc] sm:$0xff]
  %v121 = vld [vmem:[%s0 + $0x2c4] sm:$0xff]
  %v122 = vld [vmem:[%s0 + $0x2cc] sm:$0xf]
  %v123 = vld [vmem:[%s0 + $0x2d0] sm:$0xff]
  %v124 = vld [vmem:[%s0 + $0x2d8] sm:$0xff]
  %v125 = vld [vmem:[%s0 + $0x2e0] sm:$0xf]
  %v126 = vld [vmem:[%s0 + $0x2e4] sm:$0xff]
  %v127 = vld [vmem:[%s0 + $0x2ec] sm:$0xff]
  %v128 = vld [vmem:[%s0 + $0x2f4] sm:$0xf]
  %v129 = vld [vmem:[%s0 + $0x2f8] sm:$0xff]
  %v130 = vld [vmem:[%s0 + $0x300] sm:$0xff]
  %v131 = vld [vmem:[%s0 + $0x308] sm:$0xf]
  %v132 = vld [vmem:[%s0 + $0x30c] sm:$0xff]
  %v133 = vld [vmem:[%s0 + $0x314] sm:$0xff]
  %v134 = vld [vmem:[%s0 + $0x31c] sm:$0xf]
  %v135 = vld [vmem:[%s0 + $0x320] sm:$0xff]
  %v136 = vld [vmem:[%s0 + $0x328] sm:$0xff]
  %v137 = vld [vmem:[%s0 + $0x330] sm:$0xf]
  %v138 = vld [vmem:[%s0 + $0x334] sm:$0xff]
  %v139 = vld [vmem:[%s0 + $0x33c] sm:$0xff]
  %v140 = vld [vmem:[%s0 + $0x344] sm:$0xf]
  %v141 = vld [vmem:[%s0 + $0x348] sm:$0xff]
  %v142 = vld [vmem:[%s0 + $0x350] sm:$0xff]
  %v143 = vld [vmem:[%s0 + $0x358] sm:$0xf]
  %v144 = vld [vmem:[%s0 + $0x35c] sm:$0xff]
  %v145 = vld [vmem:[%s0 + $0x364] sm:$0xff]
  %v146 = vld [vmem:[%s0 + $0x36c] sm:$0xf]
  %v147 = vld [vmem:[%s0 + $0x370] sm:$0xff]
  %v148 = vld [vmem:[%s0 + $0x378] sm:$0xff]
  %v149 = vld [vmem:[%s0 + $0x380] sm:$0xf]
  %v150 = vld [vmem:[%s0 + $0x384] sm:$0xff]
  %v151 = vld [vmem:[%s0 + $0x38c] sm:$0xff]
  %v152 = vld [vmem:[%s0 + $0x394] sm:$0xf]
  %v153 = vld [vmem:[%s0 + $0x398] sm:$0xff]
  %v154 = vld [vmem:[%s0 + $0x3a0] sm:$0xff]
  %v155 = vld [vmem:[%s0 + $0x3a8] sm:$0xf]
  %v156 = vld [vmem:[%s0 + $0x3ac] sm:$0xff]
  %v157 = vld [vmem:[%s0 + $0x3b4] sm:$0xff]
  %v158 = vld [vmem:[%s0 + $0x3bc] sm:$0xf]
  %v159 = vld [vmem:[%s0 + $0x3c0] sm:$0xff]
  %v160 = vld [vmem:[%s0 + $0x3c8] sm:$0xff]
  %v161 = vld [vmem:[%s0 + $0x3d0] sm:$0xf]
  %v162 = vld [vmem:[%s0 + $0x3d4] sm:$0xff]
  %v163 = vld [vmem:[%s0 + $0x3dc] sm:$0xff]
  %v164 = vld [vmem:[%s0 + $0x3e4] sm:$0xf]
  %v165 = vld [vmem:[%s0 + $0x3e8] sm:$0xff]
  %v166 = vld [vmem:[%s0 + $0x3f0] sm:$0xff]
  %v167 = vld [vmem:[%s0 + $0x3f8] sm:$0xf]
  %v168 = vld [vmem:[%s0 + $0x3fc] sm:$0xff]
  %v169 = vld [vmem:[%s0 + $0x404] sm:$0xff]
  %v170 = vld [vmem:[%s0 + $0x40c] sm:$0xf]
  %v171 = vld [vmem:[%s0 + $0x410] sm:$0xff]
  %v172 = vld [vmem:[%s0 + $0x418] sm:$0xff]
  %v173 = vld [vmem:[%s0 + $0x420] sm:$0xf]
  %v174 = vld [vmem:[%s0 + $0x424] sm:$0xff]
  %v175 = vld [vmem:[%s0 + $0x42c] sm:$0xff]
  %v176 = vld [vmem:[%s0 + $0x434] sm:$0xf]
  %v177 = vld [vmem:[%s0 + $0x438] sm:$0xff]
  %v178 = vld [vmem:[%s0 + $0x440] sm:$0xff]
  %v179 = vld [vmem:[%s0 + $0x448] sm:$0xf]
  %v180 = vld [vmem:[%s0 + $0x44c] sm:$0xff]
  %v181 = vld [vmem:[%s0 + $0x454] sm:$0xff]
  %v182 = vld [vmem:[%s0 + $0x45c] sm:$0xf]
  %v183 = vld [vmem:[%s0 + $0x460] sm:$0xff]
  %v184 = vld [vmem:[%s0 + $0x468] sm:$0xff]
  %v185 = vld [vmem:[%s0 + $0x470] sm:$0xf]
  %v186 = vld [vmem:[%s0 + $0x474] sm:$0xff]
  %v187 = vld [vmem:[%s0 + $0x47c] sm:$0xff]
  %v188 = vld [vmem:[%s0 + $0x484] sm:$0xf]
  %v189 = vld [vmem:[%s0 + $0x488] sm:$0xff]
  %v190 = vld [vmem:[%s0 + $0x490] sm:$0xff]
  %v191 = vld [vmem:[%s0 + $0x498] sm:$0xf]
  %v192 = vld [vmem:[%s0 + $0x49c] sm:$0xff]
  %v193 = vld [vmem:[%s0 + $0x4a4] sm:$0xff]
  %v194 = vld [vmem:[%s0 + $0x4ac] sm:$0xf]
  %v195 = vld [vmem:[%s0 + $0x4b0] sm:$0xff]
  %v196 = vld [vmem:[%s0 + $0x4b8] sm:$0xff]
  %v197 = vld [vmem:[%s0 + $0x4c0] sm:$0xf]
  %v198 = vld [vmem:[%s0 + $0x4c4] sm:$0xff]
  %v199 = vld [vmem:[%s0 + $0x4cc] sm:$0xff]
  %v200 = vld [vmem:[%s0 + $0x4d4] sm:$0xf]
  %v201 = vld [vmem:[%s0 + $0x4d8] sm:$0xff]
  %v202 = vld [vmem:[%s0 + $0x4e0] sm:$0xff]
  %v203 = vld [vmem:[%s0 + $0x4e8] sm:$0xf]
  %v204 = vld [vmem:[%s0 + $0x4ec] sm:$0xff]
  %v205 = vld [vmem:[%s0 + $0x4f4] sm:$0xff]
  %v206 = vld [vmem:[%s0 + $0x4fc] sm:$0xf]
  %v207 = vld [vmem:[%s1] sm:$0xf]
  %v208 = vld [vmem:[%s1 + $0x4] sm:$0xf]
  %v209 = vld [vmem:[%s1 + $0x8] sm:$0xf]
  %v210 = vld [vmem:[%s1 + $0xc] sm:$0xf]
  %v211 = vld [vmem:[%s1 + $0x10] sm:$0xf]
  %v212 = vld [vmem:[%s1 + $0x14] sm:$0xf]
  %v213 = vld [vmem:[%s1 + $0x18] sm:$0xf]
  %v214 = vld [vmem:[%s1 + $0x1c] sm:$0xf]
  %v215 = vld [vmem:[%s1 + $0x20] sm:$0xf]
  %v216 = vld [vmem:[%s1 + $0x24] sm:$0xf]
  %v217 = vld [vmem:[%s1 + $0x28] sm:$0xf]
  %v218 = vld [vmem:[%s1 + $0x2c] sm:$0xf]
  %v219 = vld [vmem:[%s1 + $0x30] sm:$0xf]
  %v220 = vld [vmem:[%s1 + $0x34] sm:$0xf]
  %v221 = vld [vmem:[%s1 + $0x38] sm:$0xf]
  %v222 = vld [vmem:[%s1 + $0x3c] sm:$0xf]
  %v223 = vld [vmem:[%s1 + $0x40] sm:$0xf]
  %v224 = vld [vmem:[%s1 + $0x44] sm:$0xf]
  %v225 = vld [vmem:[%s1 + $0x48] sm:$0xf]
  %v226 = vld [vmem:[%s1 + $0x4c] sm:$0xf]
  %v227 = vld [vmem:[%s1 + $0x50] sm:$0xf]
  %v228 = vld [vmem:[%s1 + $0x54] sm:$0xf]
  %v229 = vld [vmem:[%s1 + $0x58] sm:$0xf]
  %v230 = vld [vmem:[%s1 + $0x5c] sm:$0xf]
  %v231 = vld [vmem:[%s1 + $0x60] sm:$0xf]
  %v232 = vld [vmem:[%s1 + $0x64] sm:$0xf]
  %v233 = vld [vmem:[%s1 + $0x68] sm:$0xf]
  %v234 = vld [vmem:[%s1 + $0x6c] sm:$0xf]
  %v235 = vld [vmem:[%s1 + $0x70] sm:$0xf]
  %v236 = vld [vmem:[%s1 + $0x74] sm:$0xf]
  %v237 = vld [vmem:[%s1 + $0x78] sm:$0xf]
  %v238 = vld [vmem:[%s1 + $0x7c] sm:$0xf]
  %v239 = vld [vmem:[%s1 + $0x80] sm:$0xf]
  %v240 = vld [vmem:[%s1 + $0x84] sm:$0xf]
  %v241 = vld [vmem:[%s1 + $0x88] sm:$0xf]
  %v242 = vld [vmem:[%s1 + $0x8c] sm:$0xf]
  %v243 = vld [vmem:[%s1 + $0x90] sm:$0xf]
  %v244 = vld [vmem:[%s1 + $0x94] sm:$0xf]
  %v245 = vld [vmem:[%s1 + $0x98] sm:$0xf]
  %v246 = vld [vmem:[%s1 + $0x9c] sm:$0xf]
  %v247 = vld [vmem:[%s1 + $0xa0] sm:$0xf]
  %v248 = vld [vmem:[%s1 + $0xa4] sm:$0xf]
  %v249 = vld [vmem:[%s1 + $0xa8] sm:$0xf]
  %v250 = vld [vmem:[%s1 + $0xac] sm:$0xf]
  %v251 = vld [vmem:[%s1 + $0xb0] sm:$0xf]
  %v252 = vld [vmem:[%s1 + $0xb4] sm:$0xf]
  %v253 = vld [vmem:[%s1 + $0xb8] sm:$0xf]
  %v254 = vld [vmem:[%s1 + $0xbc] sm:$0xf]
  %v255 = vld [vmem:[%s1 + $0xc0] sm:$0xf]
  %v256 = vld [vmem:[%s1 + $0xc4] sm:$0xf]
  %v257 = vld [vmem:[%s1 + $0xc8] sm:$0xf]
  %v258 = vld [vmem:[%s1 + $0xcc] sm:$0xf]
  %v259 = vld [vmem:[%s1 + $0xd0] sm:$0xf]
  %v260 = vld [vmem:[%s1 + $0xd4] sm:$0xf]
  %v261 = vld [vmem:[%s1 + $0xd8] sm:$0xf]
  %v262 = vld [vmem:[%s1 + $0xdc] sm:$0xf]
  %v263 = vld [vmem:[%s1 + $0xe0] sm:$0xf]
  %v264 = vld [vmem:[%s1 + $0xe4] sm:$0xf]
  %v265 = vld [vmem:[%s1 + $0xe8] sm:$0xf]
  %v266 = vld [vmem:[%s1 + $0xec] sm:$0xf]
  %v267 = vld [vmem:[%s1 + $0xf0] sm:$0xf]
  %v268 = vld [vmem:[%s1 + $0xf4] sm:$0xf]
  %v269 = vld [vmem:[%s1 + $0xf8] sm:$0xf]
  %v270 = vld [vmem:[%s1 + $0xfc] sm:$0xf]
  %v271 = vld [vmem:[%s1 + $0x100] sm:$0xf]
  %v272 = vld [vmem:[%s1 + $0x104] sm:$0xf]
  %v273 = vld [vmem:[%s1 + $0x108] sm:$0xf]
  %v274 = vld [vmem:[%s1 + $0x10c] sm:$0xf]
  %v275 = vld [vmem:[%s1 + $0x110] sm:$0xf]
  %v276 = vld [vmem:[%s1 + $0x114] sm:$0xf]
  %v277 = vld [vmem:[%s1 + $0x118] sm:$0xf]
  %v278 = vld [vmem:[%s1 + $0x11c] sm:$0xf]
  %v471 = vunpack.c.l.b16 %v15
  %v472 = vunpack.c.h.b16 %v15
  %v473 = vunpack.c.l.b16 %v16
  %v474 = vunpack.c.h.b16 %v16
  %v475 = vunpack.c.l.b16 %v17
  %v476 = vunpack.c.l.b16 %v18
  %v477 = vunpack.c.h.b16 %v18
  %v478 = vunpack.c.l.b16 %v19
  %v479 = vunpack.c.h.b16 %v19
  %v480 = vunpack.c.l.b16 %v20
  %v481 = vunpack.c.l.b16 %v21
  %v482 = vunpack.c.h.b16 %v21
  %v483 = vunpack.c.l.b16 %v22
  %v484 = vunpack.c.h.b16 %v22
  %v485 = vunpack.c.l.b16 %v23
  %v486 = vunpack.c.l.b16 %v24
  %v487 = vunpack.c.h.b16 %v24
  %v488 = vunpack.c.l.b16 %v25
  %v489 = vunpack.c.h.b16 %v25
  %v490 = vunpack.c.l.b16 %v26
  %v491 = vunpack.c.l.b16 %v27
  %v492 = vunpack.c.h.b16 %v27
  %v493 = vunpack.c.l.b16 %v28
  %v494 = vunpack.c.h.b16 %v28
  %v495 = vunpack.c.l.b16 %v29
  %v496 = vunpack.c.l.b16 %v30
  %v497 = vunpack.c.h.b16 %v30
  %v498 = vunpack.c.l.b16 %v31
  %v499 = vunpack.c.h.b16 %v31
  %v500 = vunpack.c.l.b16 %v32
  %v501 = vunpack.c.l.b16 %v33
  %v502 = vunpack.c.h.b16 %v33
  %v503 = vunpack.c.l.b16 %v34
  %v504 = vunpack.c.h.b16 %v34
  %v505 = vunpack.c.l.b16 %v35
  %v506 = vunpack.c.l.b16 %v36
  %v507 = vunpack.c.h.b16 %v36
  %v508 = vunpack.c.l.b16 %v37
  %v509 = vunpack.c.h.b16 %v37
  %v510 = vunpack.c.l.b16 %v38
  %v511 = vunpack.c.l.b16 %v39
  %v512 = vunpack.c.h.b16 %v39
  %v513 = vunpack.c.l.b16 %v40
  %v514 = vunpack.c.h.b16 %v40
  %v515 = vunpack.c.l.b16 %v41
  %v516 = vunpack.c.l.b16 %v42
  %v517 = vunpack.c.h.b16 %v42
  %v518 = vunpack.c.l.b16 %v43
  %v519 = vunpack.c.h.b16 %v43
  %v520 = vunpack.c.l.b16 %v44
  %v521 = vunpack.c.l.b16 %v45
  %v522 = vunpack.c.h.b16 %v45
  %v523 = vunpack.c.l.b16 %v46
  %v524 = vunpack.c.h.b16 %v46
  %v525 = vunpack.c.l.b16 %v47
  %v526 = vunpack.c.l.b16 %v48
  %v527 = vunpack.c.h.b16 %v48
  %v528 = vunpack.c.l.b16 %v49
  %v529 = vunpack.c.h.b16 %v49
  %v530 = vunpack.c.l.b16 %v50
  %v531 = vunpack.c.l.b16 %v51
  %v532 = vunpack.c.h.b16 %v51
  %v533 = vunpack.c.l.b16 %v52
  %v534 = vunpack.c.h.b16 %v52
  %v535 = vunpack.c.l.b16 %v53
  %v536 = vunpack.c.l.b16 %v54
  %v537 = vunpack.c.h.b16 %v54
  %v538 = vunpack.c.l.b16 %v55
  %v539 = vunpack.c.h.b16 %v55
  %v540 = vunpack.c.l.b16 %v56
  %v541 = vunpack.c.l.b16 %v57
  %v542 = vunpack.c.h.b16 %v57
  %v543 = vunpack.c.l.b16 %v58
  %v544 = vunpack.c.h.b16 %v58
  %v545 = vunpack.c.l.b16 %v59
  %v546 = vunpack.c.l.b16 %v60
  %v547 = vunpack.c.h.b16 %v60
  %v548 = vunpack.c.l.b16 %v61
  %v549 = vunpack.c.h.b16 %v61
  %v550 = vunpack.c.l.b16 %v62
  %v551 = vunpack.c.l.b16 %v63
  %v552 = vunpack.c.h.b16 %v63
  %v553 = vunpack.c.l.b16 %v64
  %v554 = vunpack.c.h.b16 %v64
  %v555 = vunpack.c.l.b16 %v65
  %v556 = vunpack.c.l.b16 %v66
  %v557 = vunpack.c.h.b16 %v66
  %v558 = vunpack.c.l.b16 %v67
  %v559 = vunpack.c.h.b16 %v67
  %v560 = vunpack.c.l.b16 %v68
  %v561 = vunpack.c.l.b16 %v69
  %v562 = vunpack.c.h.b16 %v69
  %v563 = vunpack.c.l.b16 %v70
  %v564 = vunpack.c.h.b16 %v70
  %v565 = vunpack.c.l.b16 %v71
  %v566 = vunpack.c.l.b16 %v72
  %v567 = vunpack.c.h.b16 %v72
  %v568 = vunpack.c.l.b16 %v73
  %v569 = vunpack.c.h.b16 %v73
  %v570 = vunpack.c.l.b16 %v74
  %v571 = vunpack.c.l.b16 %v75
  %v572 = vunpack.c.h.b16 %v75
  %v573 = vunpack.c.l.b16 %v76
  %v574 = vunpack.c.h.b16 %v76
  %v575 = vunpack.c.l.b16 %v77
  %v576 = vunpack.c.l.b16 %v78
  %v577 = vunpack.c.h.b16 %v78
  %v578 = vunpack.c.l.b16 %v79
  %v579 = vunpack.c.h.b16 %v79
  %v580 = vunpack.c.l.b16 %v80
  %v581 = vunpack.c.l.b16 %v81
  %v582 = vunpack.c.h.b16 %v81
  %v583 = vunpack.c.l.b16 %v82
  %v584 = vunpack.c.h.b16 %v82
  %v585 = vunpack.c.l.b16 %v83
  %v586 = vunpack.c.l.b16 %v84
  %v587 = vunpack.c.h.b16 %v84
  %v588 = vunpack.c.l.b16 %v85
  %v589 = vunpack.c.h.b16 %v85
  %v590 = vunpack.c.l.b16 %v86
  %v591 = vunpack.c.l.b16 %v87
  %v592 = vunpack.c.h.b16 %v87
  %v593 = vunpack.c.l.b16 %v88
  %v594 = vunpack.c.h.b16 %v88
  %v595 = vunpack.c.l.b16 %v89
  %v596 = vunpack.c.l.b16 %v90
  %v597 = vunpack.c.h.b16 %v90
  %v598 = vunpack.c.l.b16 %v91
  %v599 = vunpack.c.h.b16 %v91
  %v600 = vunpack.c.l.b16 %v92
  %v601 = vunpack.c.l.b16 %v93
  %v602 = vunpack.c.h.b16 %v93
  %v603 = vunpack.c.l.b16 %v94
  %v604 = vunpack.c.h.b16 %v94
  %v605 = vunpack.c.l.b16 %v95
  %v606 = vunpack.c.l.b16 %v96
  %v607 = vunpack.c.h.b16 %v96
  %v608 = vunpack.c.l.b16 %v97
  %v609 = vunpack.c.h.b16 %v97
  %v610 = vunpack.c.l.b16 %v98
  %v611 = vunpack.c.l.b16 %v99
  %v612 = vunpack.c.h.b16 %v99
  %v613 = vunpack.c.l.b16 %v100
  %v614 = vunpack.c.h.b16 %v100
  %v615 = vunpack.c.l.b16 %v101
  %v616 = vunpack.c.l.b16 %v102
  %v617 = vunpack.c.h.b16 %v102
  %v618 = vunpack.c.l.b16 %v103
  %v619 = vunpack.c.h.b16 %v103
  %v620 = vunpack.c.l.b16 %v104
  %v621 = vunpack.c.l.b16 %v105
  %v622 = vunpack.c.h.b16 %v105
  %v623 = vunpack.c.l.b16 %v106
  %v624 = vunpack.c.h.b16 %v106
  %v625 = vunpack.c.l.b16 %v107
  %v626 = vunpack.c.l.b16 %v108
  %v627 = vunpack.c.h.b16 %v108
  %v628 = vunpack.c.l.b16 %v109
  %v629 = vunpack.c.h.b16 %v109
  %v630 = vunpack.c.l.b16 %v110
  %v631 = vunpack.c.l.b16 %v111
  %v632 = vunpack.c.h.b16 %v111
  %v633 = vunpack.c.l.b16 %v112
  %v634 = vunpack.c.h.b16 %v112
  %v635 = vunpack.c.l.b16 %v113
  %v636 = vunpack.c.l.b16 %v114
  %v637 = vunpack.c.h.b16 %v114
  %v638 = vunpack.c.l.b16 %v115
  %v639 = vunpack.c.h.b16 %v115
  %v640 = vunpack.c.l.b16 %v116
  %v641 = vunpack.c.l.b16 %v117
  %v642 = vunpack.c.h.b16 %v117
  %v643 = vunpack.c.l.b16 %v118
  %v644 = vunpack.c.h.b16 %v118
  %v645 = vunpack.c.l.b16 %v119
  %v646 = vunpack.c.l.b16 %v120
  %v647 = vunpack.c.h.b16 %v120
  %v648 = vunpack.c.l.b16 %v121
  %v649 = vunpack.c.h.b16 %v121
  %v650 = vunpack.c.l.b16 %v122
  %v651 = vunpack.c.l.b16 %v123
  %v652 = vunpack.c.h.b16 %v123
  %v653 = vunpack.c.l.b16 %v124
  %v654 = vunpack.c.h.b16 %v124
  %v655 = vunpack.c.l.b16 %v125
  %v656 = vunpack.c.l.b16 %v126
  %v657 = vunpack.c.h.b16 %v126
  %v658 = vunpack.c.l.b16 %v127
  %v659 = vunpack.c.h.b16 %v127
  %v660 = vunpack.c.l.b16 %v128
  %v661 = vunpack.c.l.b16 %v129
  %v662 = vunpack.c.h.b16 %v129
  %v663 = vunpack.c.l.b16 %v130
  %v664 = vunpack.c.h.b16 %v130
  %v665 = vunpack.c.l.b16 %v131
  %v666 = vunpack.c.l.b16 %v132
  %v667 = vunpack.c.h.b16 %v132
  %v668 = vunpack.c.l.b16 %v133
  %v669 = vunpack.c.h.b16 %v133
  %v670 = vunpack.c.l.b16 %v134
  %v671 = vunpack.c.l.b16 %v135
  %v672 = vunpack.c.h.b16 %v135
  %v673 = vunpack.c.l.b16 %v136
  %v674 = vunpack.c.h.b16 %v136
  %v675 = vunpack.c.l.b16 %v137
  %v676 = vunpack.c.l.b16 %v138
  %v677 = vunpack.c.h.b16 %v138
  %v678 = vunpack.c.l.b16 %v139
  %v679 = vunpack.c.h.b16 %v139
  %v680 = vunpack.c.l.b16 %v140
  %v681 = vunpack.c.l.b16 %v141
  %v682 = vunpack.c.h.b16 %v141
  %v683 = vunpack.c.l.b16 %v142
  %v684 = vunpack.c.h.b16 %v142
  %v685 = vunpack.c.l.b16 %v143
  %v686 = vunpack.c.l.b16 %v144
  %v687 = vunpack.c.h.b16 %v144
  %v688 = vunpack.c.l.b16 %v145
  %v689 = vunpack.c.h.b16 %v145
  %v690 = vunpack.c.l.b16 %v146
  %v691 = vunpack.c.l.b16 %v147
  %v692 = vunpack.c.h.b16 %v147
  %v693 = vunpack.c.l.b16 %v148
  %v694 = vunpack.c.h.b16 %v148
  %v695 = vunpack.c.l.b16 %v149
  %v696 = vunpack.c.l.b16 %v150
  %v697 = vunpack.c.h.b16 %v150
  %v698 = vunpack.c.l.b16 %v151
  %v699 = vunpack.c.h.b16 %v151
  %v700 = vunpack.c.l.b16 %v152
  %v701 = vunpack.c.l.b16 %v153
  %v702 = vunpack.c.h.b16 %v153
  %v703 = vunpack.c.l.b16 %v154
  %v704 = vunpack.c.h.b16 %v154
  %v705 = vunpack.c.l.b16 %v155
  %v706 = vunpack.c.l.b16 %v156
  %v707 = vunpack.c.h.b16 %v156
  %v708 = vunpack.c.l.b16 %v157
  %v709 = vunpack.c.h.b16 %v157
  %v710 = vunpack.c.l.b16 %v158
  %v711 = vunpack.c.l.b16 %v159
  %v712 = vunpack.c.h.b16 %v159
  %v713 = vunpack.c.l.b16 %v160
  %v714 = vunpack.c.h.b16 %v160
  %v715 = vunpack.c.l.b16 %v161
  %v716 = vunpack.c.l.b16 %v162
  %v717 = vunpack.c.h.b16 %v162
  %v718 = vunpack.c.l.b16 %v163
  %v719 = vunpack.c.h.b16 %v163
  %v720 = vunpack.c.l.b16 %v164
  %v721 = vunpack.c.l.b16 %v165
  %v722 = vunpack.c.h.b16 %v165
  %v723 = vunpack.c.l.b16 %v166
  %v724 = vunpack.c.h.b16 %v166
  %v725 = vunpack.c.l.b16 %v167
  %v726 = vunpack.c.l.b16 %v168
  %v727 = vunpack.c.h.b16 %v168
  %v728 = vunpack.c.l.b16 %v169
  %v729 = vunpack.c.h.b16 %v169
  %v730 = vunpack.c.l.b16 %v170
  %v731 = vunpack.c.l.b16 %v171
  %v732 = vunpack.c.h.b16 %v171
  %v733 = vunpack.c.l.b16 %v172
  %v734 = vunpack.c.h.b16 %v172
  %v735 = vunpack.c.l.b16 %v173
  %v736 = vunpack.c.l.b16 %v174
  %v737 = vunpack.c.h.b16 %v174
  %v738 = vunpack.c.l.b16 %v175
  %v739 = vunpack.c.h.b16 %v175
  %v740 = vunpack.c.l.b16 %v176
  %v741 = vunpack.c.l.b16 %v177
  %v742 = vunpack.c.h.b16 %v177
  %v743 = vunpack.c.l.b16 %v178
  %v744 = vunpack.c.h.b16 %v178
  %v745 = vunpack.c.l.b16 %v179
  %v746 = vunpack.c.l.b16 %v180
  %v747 = vunpack.c.h.b16 %v180
  %v748 = vunpack.c.l.b16 %v181
  %v749 = vunpack.c.h.b16 %v181
  %v750 = vunpack.c.l.b16 %v182
  %v751 = vunpack.c.l.b16 %v183
  %v752 = vunpack.c.h.b16 %v183
  %v753 = vunpack.c.l.b16 %v184
  %v754 = vunpack.c.h.b16 %v184
  %v755 = vunpack.c.l.b16 %v185
  %v756 = vunpack.c.l.b16 %v186
  %v757 = vunpack.c.h.b16 %v186
  %v758 = vunpack.c.l.b16 %v187
  %v759 = vunpack.c.h.b16 %v187
  %v760 = vunpack.c.l.b16 %v188
  %v761 = vunpack.c.l.b16 %v189
  %v762 = vunpack.c.h.b16 %v189
  %v763 = vunpack.c.l.b16 %v190
  %v764 = vunpack.c.h.b16 %v190
  %v765 = vunpack.c.l.b16 %v191
  %v766 = vunpack.c.l.b16 %v192
  %v767 = vunpack.c.h.b16 %v192
  %v768 = vunpack.c.l.b16 %v193
  %v769 = vunpack.c.h.b16 %v193
  %v770 = vunpack.c.l.b16 %v194
  %v771 = vunpack.c.l.b16 %v195
  %v772 = vunpack.c.h.b16 %v195
  %v773 = vunpack.c.l.b16 %v196
  %v774 = vunpack.c.h.b16 %v196
  %v775 = vunpack.c.l.b16 %v197
  %v776 = vunpack.c.l.b16 %v198
  %v777 = vunpack.c.h.b16 %v198
  %v778 = vunpack.c.l.b16 %v199
  %v779 = vunpack.c.h.b16 %v199
  %v780 = vunpack.c.l.b16 %v200
  %v781 = vunpack.c.l.b16 %v201
  %v782 = vunpack.c.h.b16 %v201
  %v783 = vunpack.c.l.b16 %v202
  %v784 = vunpack.c.h.b16 %v202
  %v785 = vunpack.c.l.b16 %v203
  %v786 = vunpack.c.l.b16 %v204
  %v787 = vunpack.c.h.b16 %v204
  %v788 = vunpack.c.l.b16 %v205
  %v789 = vunpack.c.h.b16 %v205
  %v790 = vunpack.c.l.b16 %v206
  %v791 = vpack.c.b16 %v476, %v471
  %v792 = vpack.c.b16 %v477, %v472
  %v793 = vpack.c.b16 %v478, %v473
  %v794 = vpack.c.b16 %v479, %v474
  %v795 = vpack.c.b16 %v480, %v475
  %v796 = vpack.c.b16 %v486, %v481
  %v797 = vpack.c.b16 %v487, %v482
  %v798 = vpack.c.b16 %v488, %v483
  %v799 = vpack.c.b16 %v489, %v484
  %v800 = vpack.c.b16 %v490, %v485
  %v801 = vpack.c.b16 %v496, %v491
  %v802 = vpack.c.b16 %v497, %v492
  %v803 = vpack.c.b16 %v498, %v493
  %v804 = vpack.c.b16 %v499, %v494
  %v805 = vpack.c.b16 %v500, %v495
  %v806 = vpack.c.b16 %v506, %v501
  %v807 = vpack.c.b16 %v507, %v502
  %v808 = vpack.c.b16 %v508, %v503
  %v809 = vpack.c.b16 %v509, %v504
  %v810 = vpack.c.b16 %v510, %v505
  %v811 = vpack.c.b16 %v516, %v511
  %v812 = vpack.c.b16 %v517, %v512
  %v813 = vpack.c.b16 %v518, %v513
  %v814 = vpack.c.b16 %v519, %v514
  %v815 = vpack.c.b16 %v520, %v515
  %v816 = vpack.c.b16 %v526, %v521
  %v817 = vpack.c.b16 %v527, %v522
  %v818 = vpack.c.b16 %v528, %v523
  %v819 = vpack.c.b16 %v529, %v524
  %v820 = vpack.c.b16 %v530, %v525
  %v821 = vpack.c.b16 %v536, %v531
  %v822 = vpack.c.b16 %v537, %v532
  %v823 = vpack.c.b16 %v538, %v533
  %v824 = vpack.c.b16 %v539, %v534
  %v825 = vpack.c.b16 %v540, %v535
  %v826 = vpack.c.b16 %v546, %v541
  %v827 = vpack.c.b16 %v547, %v542
  %v828 = vpack.c.b16 %v548, %v543
  %v829 = vpack.c.b16 %v549, %v544
  %v830 = vpack.c.b16 %v550, %v545
  %v831 = vpack.c.b16 %v556, %v551
  %v832 = vpack.c.b16 %v557, %v552
  %v833 = vpack.c.b16 %v558, %v553
  %v834 = vpack.c.b16 %v559, %v554
  %v835 = vpack.c.b16 %v560, %v555
  %v836 = vpack.c.b16 %v566, %v561
  %v837 = vpack.c.b16 %v567, %v562
  %v838 = vpack.c.b16 %v568, %v563
  %v839 = vpack.c.b16 %v569, %v564
  %v840 = vpack.c.b16 %v570, %v565
  %v841 = vpack.c.b16 %v576, %v571
  %v842 = vpack.c.b16 %v577, %v572
  %v843 = vpack.c.b16 %v578, %v573
  %v844 = vpack.c.b16 %v579, %v574
  %v845 = vpack.c.b16 %v580, %v575
  %v846 = vpack.c.b16 %v586, %v581
  %v847 = vpack.c.b16 %v587, %v582
  %v848 = vpack.c.b16 %v588, %v583
  %v849 = vpack.c.b16 %v589, %v584
  %v850 = vpack.c.b16 %v590, %v585
  %v851 = vpack.c.b16 %v596, %v591
  %v852 = vpack.c.b16 %v597, %v592
  %v853 = vpack.c.b16 %v598, %v593
  %v854 = vpack.c.b16 %v599, %v594
  %v855 = vpack.c.b16 %v600, %v595
  %v856 = vpack.c.b16 %v606, %v601
  %v857 = vpack.c.b16 %v607, %v602
  %v858 = vpack.c.b16 %v608, %v603
  %v859 = vpack.c.b16 %v609, %v604
  %v860 = vpack.c.b16 %v610, %v605
  %v861 = vpack.c.b16 %v616, %v611
  %v862 = vpack.c.b16 %v617, %v612
  %v863 = vpack.c.b16 %v618, %v613
  %v864 = vpack.c.b16 %v619, %v614
  %v865 = vpack.c.b16 %v620, %v615
  %v866 = vpack.c.b16 %v626, %v621
  %v867 = vpack.c.b16 %v627, %v622
  %v868 = vpack.c.b16 %v628, %v623
  %v869 = vpack.c.b16 %v629, %v624
  %v870 = vpack.c.b16 %v630, %v625
  %v871 = vpack.c.b16 %v636, %v631
  %v872 = vpack.c.b16 %v637, %v632
  %v873 = vpack.c.b16 %v638, %v633
  %v874 = vpack.c.b16 %v639, %v634
  %v875 = vpack.c.b16 %v640, %v635
  %v876 = vpack.c.b16 %v646, %v641
  %v877 = vpack.c.b16 %v647, %v642
  %v878 = vpack.c.b16 %v648, %v643
  %v879 = vpack.c.b16 %v649, %v644
  %v880 = vpack.c.b16 %v650, %v645
  %v881 = vpack.c.b16 %v656, %v651
  %v882 = vpack.c.b16 %v657, %v652
  %v883 = vpack.c.b16 %v658, %v653
  %v884 = vpack.c.b16 %v659, %v654
  %v885 = vpack.c.b16 %v660, %v655
  %v886 = vpack.c.b16 %v666, %v661
  %v887 = vpack.c.b16 %v667, %v662
  %v888 = vpack.c.b16 %v668, %v663
  %v889 = vpack.c.b16 %v669, %v664
  %v890 = vpack.c.b16 %v670, %v665
  %v891 = vpack.c.b16 %v676, %v671
  %v892 = vpack.c.b16 %v677, %v672
  %v893 = vpack.c.b16 %v678, %v673
  %v894 = vpack.c.b16 %v679, %v674
  %v895 = vpack.c.b16 %v680, %v675
  %v896 = vpack.c.b16 %v686, %v681
  %v897 = vpack.c.b16 %v687, %v682
  %v898 = vpack.c.b16 %v688, %v683
  %v899 = vpack.c.b16 %v689, %v684
  %v900 = vpack.c.b16 %v690, %v685
  %v901 = vpack.c.b16 %v696, %v691
  %v902 = vpack.c.b16 %v697, %v692
  %v903 = vpack.c.b16 %v698, %v693
  %v904 = vpack.c.b16 %v699, %v694
  %v905 = vpack.c.b16 %v700, %v695
  %v906 = vpack.c.b16 %v706, %v701
  %v907 = vpack.c.b16 %v707, %v702
  %v908 = vpack.c.b16 %v708, %v703
  %v909 = vpack.c.b16 %v709, %v704
  %v910 = vpack.c.b16 %v710, %v705
  %v911 = vpack.c.b16 %v716, %v711
  %v912 = vpack.c.b16 %v717, %v712
  %v913 = vpack.c.b16 %v718, %v713
  %v914 = vpack.c.b16 %v719, %v714
  %v915 = vpack.c.b16 %v720, %v715
  %v916 = vpack.c.b16 %v726, %v721
  %v917 = vpack.c.b16 %v727, %v722
  %v918 = vpack.c.b16 %v728, %v723
  %v919 = vpack.c.b16 %v729, %v724
  %v920 = vpack.c.b16 %v730, %v725
  %v921 = vpack.c.b16 %v736, %v731
  %v922 = vpack.c.b16 %v737, %v732
  %v923 = vpack.c.b16 %v738, %v733
  %v924 = vpack.c.b16 %v739, %v734
  %v925 = vpack.c.b16 %v740, %v735
  %v926 = vpack.c.b16 %v746, %v741
  %v927 = vpack.c.b16 %v747, %v742
  %v928 = vpack.c.b16 %v748, %v743
  %v929 = vpack.c.b16 %v749, %v744
  %v930 = vpack.c.b16 %v750, %v745
  %v931 = vpack.c.b16 %v756, %v751
  %v932 = vpack.c.b16 %v757, %v752
  %v933 = vpack.c.b16 %v758, %v753
  %v934 = vpack.c.b16 %v759, %v754
  %v935 = vpack.c.b16 %v760, %v755
  %v936 = vpack.c.b16 %v766, %v761
  %v937 = vpack.c.b16 %v767, %v762
  %v938 = vpack.c.b16 %v768, %v763
  %v939 = vpack.c.b16 %v769, %v764
  %v940 = vpack.c.b16 %v770, %v765
  %v941 = vpack.c.b16 %v776, %v771
  %v942 = vpack.c.b16 %v777, %v772
  %v943 = vpack.c.b16 %v778, %v773
  %v944 = vpack.c.b16 %v779, %v774
  %v945 = vpack.c.b16 %v780, %v775
  %v946 = vpack.c.b16 %v786, %v781
  %v947 = vpack.c.b16 %v787, %v782
  %v948 = vpack.c.b16 %v788, %v783
  %v949 = vpack.c.b16 %v789, %v784
  %v950 = vpack.c.b16 %v790, %v785
  %v1151 = vunpack.c.l.b16 %v207
  %v1152 = vunpack.c.l.b16 %v208
  %v1153 = vunpack.c.l.b16 %v209
  %v1154 = vunpack.c.l.b16 %v210
  %v1155 = vunpack.c.l.b16 %v211
  %v1156 = vunpack.c.l.b16 %v212
  %v1157 = vunpack.c.l.b16 %v213
  %v1158 = vunpack.c.l.b16 %v214
  %v1159 = vunpack.c.l.b16 %v215
  %v1160 = vunpack.c.l.b16 %v216
  %v1161 = vunpack.c.l.b16 %v217
  %v1162 = vunpack.c.l.b16 %v218
  %v1163 = vunpack.c.l.b16 %v219
  %v1164 = vunpack.c.l.b16 %v220
  %v1165 = vunpack.c.l.b16 %v221
  %v1166 = vunpack.c.l.b16 %v222
  %v1167 = vunpack.c.l.b16 %v223
  %v1168 = vunpack.c.l.b16 %v224
  %v1169 = vunpack.c.l.b16 %v225
  %v1170 = vunpack.c.l.b16 %v226
  %v1171 = vunpack.c.l.b16 %v227
  %v1172 = vunpack.c.l.b16 %v228
  %v1173 = vunpack.c.l.b16 %v229
  %v1174 = vunpack.c.l.b16 %v230
  %v1175 = vunpack.c.l.b16 %v231
  %v1176 = vunpack.c.l.b16 %v232
  %v1177 = vunpack.c.l.b16 %v233
  %v1178 = vunpack.c.l.b16 %v234
  %v1179 = vunpack.c.l.b16 %v235
  %v1180 = vunpack.c.l.b16 %v236
  %v1181 = vunpack.c.l.b16 %v237
  %v1182 = vunpack.c.l.b16 %v238
  %v1183 = vunpack.c.l.b16 %v239
  %v1184 = vunpack.c.l.b16 %v240
  %v1185 = vunpack.c.l.b16 %v241
  %v1186 = vunpack.c.l.b16 %v242
  %v1187 = vunpack.c.l.b16 %v243
  %v1188 = vunpack.c.l.b16 %v244
  %v1189 = vunpack.c.l.b16 %v245
  %v1190 = vunpack.c.l.b16 %v246
  %v1191 = vunpack.c.l.b16 %v247
  %v1192 = vunpack.c.l.b16 %v248
  %v1193 = vunpack.c.l.b16 %v249
  %v1194 = vunpack.c.l.b16 %v250
  %v1195 = vunpack.c.l.b16 %v251
  %v1196 = vunpack.c.l.b16 %v252
  %v1197 = vunpack.c.l.b16 %v253
  %v1198 = vunpack.c.l.b16 %v254
  %v1199 = vunpack.c.l.b16 %v255
  %v1200 = vunpack.c.l.b16 %v256
  %v1201 = vunpack.c.l.b16 %v257
  %v1202 = vunpack.c.l.b16 %v258
  %v1203 = vunpack.c.l.b16 %v259
  %v1204 = vunpack.c.l.b16 %v260
  %v1205 = vunpack.c.l.b16 %v261
  %v1206 = vunpack.c.l.b16 %v262
  %v1207 = vunpack.c.l.b16 %v263
  %v1208 = vunpack.c.l.b16 %v264
  %v1209 = vunpack.c.l.b16 %v265
  %v1210 = vunpack.c.l.b16 %v266
  %v1211 = vunpack.c.l.b16 %v267
  %v1212 = vunpack.c.l.b16 %v268
  %v1213 = vunpack.c.l.b16 %v269
  %v1214 = vunpack.c.l.b16 %v270
  %v1215 = vunpack.c.l.b16 %v271
  %v1216 = vunpack.c.l.b16 %v272
  %v1217 = vunpack.c.l.b16 %v273
  %v1218 = vunpack.c.l.b16 %v274
  %v1219 = vunpack.c.l.b16 %v275
  %v1220 = vunpack.c.l.b16 %v276
  %v1221 = vunpack.c.l.b16 %v277
  %v1222 = vunpack.c.l.b16 %v278
  %v1223 = vpack.c.b16 %v1152, %v1151
  %v1224 = vpack.c.b16 %v1154, %v1153
  %v1225 = vpack.c.b16 %v1156, %v1155
  %v1226 = vpack.c.b16 %v1158, %v1157
  %v1227 = vpack.c.b16 %v1160, %v1159
  %v1228 = vpack.c.b16 %v1162, %v1161
  %v1229 = vpack.c.b16 %v1164, %v1163
  %v1230 = vpack.c.b16 %v1166, %v1165
  %v1231 = vpack.c.b16 %v1168, %v1167
  %v1232 = vpack.c.b16 %v1170, %v1169
  %v1233 = vpack.c.b16 %v1172, %v1171
  %v1234 = vpack.c.b16 %v1174, %v1173
  %v1235 = vpack.c.b16 %v1176, %v1175
  %v1236 = vpack.c.b16 %v1178, %v1177
  %v1237 = vpack.c.b16 %v1180, %v1179
  %v1238 = vpack.c.b16 %v1182, %v1181
  %v1239 = vpack.c.b16 %v1184, %v1183
  %v1240 = vpack.c.b16 %v1186, %v1185
  %v1241 = vpack.c.b16 %v1188, %v1187
  %v1242 = vpack.c.b16 %v1190, %v1189
  %v1243 = vpack.c.b16 %v1192, %v1191
  %v1244 = vpack.c.b16 %v1194, %v1193
  %v1245 = vpack.c.b16 %v1196, %v1195
  %v1246 = vpack.c.b16 %v1198, %v1197
  %v1247 = vpack.c.b16 %v1200, %v1199
  %v1248 = vpack.c.b16 %v1202, %v1201
  %v1249 = vpack.c.b16 %v1204, %v1203
  %v1250 = vpack.c.b16 %v1206, %v1205
  %v1251 = vpack.c.b16 %v1208, %v1207
  %v1252 = vpack.c.b16 %v1210, %v1209
  %v1253 = vpack.c.b16 %v1212, %v1211
  %v1254 = vpack.c.b16 %v1214, %v1213
  %v1255 = vpack.c.b16 %v1216, %v1215
  %v1256 = vpack.c.b16 %v1218, %v1217
  %v1257 = vpack.c.b16 %v1220, %v1219
  %v1258 = vpack.c.b16 %v1222, %v1221
  %vm1295 = vcmask 523264
  %v1297 = vsel %vm1295, %v795, 0
  %v1300 = vsel %vm1295, %v800, 0
  %v1303 = vsel %vm1295, %v805, 0
  %v1306 = vsel %vm1295, %v810, 0
  %v1309 = vsel %vm1295, %v815, 0
  %v1312 = vsel %vm1295, %v820, 0
  %v1315 = vsel %vm1295, %v825, 0
  %v1318 = vsel %vm1295, %v830, 0
  %v1321 = vsel %vm1295, %v835, 0
  %v1324 = vsel %vm1295, %v840, 0
  %v1327 = vsel %vm1295, %v845, 0
  %v1330 = vsel %vm1295, %v850, 0
  %v1333 = vsel %vm1295, %v855, 0
  %v1336 = vsel %vm1295, %v860, 0
  %v1339 = vsel %vm1295, %v865, 0
  %v1342 = vsel %vm1295, %v870, 0
  %v1345 = vsel %vm1295, %v875, 0
  %v1348 = vsel %vm1295, %v880, 0
  %v1351 = vsel %vm1295, %v885, 0
  %v1354 = vsel %vm1295, %v890, 0
  %v1357 = vsel %vm1295, %v895, 0
  %v1360 = vsel %vm1295, %v900, 0
  %v1363 = vsel %vm1295, %v905, 0
  %v1366 = vsel %vm1295, %v910, 0
  %v1369 = vsel %vm1295, %v915, 0
  %v1372 = vsel %vm1295, %v920, 0
  %v1375 = vsel %vm1295, %v925, 0
  %v1378 = vsel %vm1295, %v930, 0
  %v1381 = vsel %vm1295, %v935, 0
  %v1384 = vsel %vm1295, %v940, 0
  %v1387 = vsel %vm1295, %v945, 0
  %v1390 = vsel %vm1295, %v950, 0
  %1392 = vmatprep.subr.bf16.mxu0 0
  %1393 = vmatpush1.bf16.msra.mxu0 %v1223
  %1394 = vmatprep.subr.bf16.mxu0 0
  %1395 = vmatpush1.bf16.msra.mxu0 %v1224
  %1396 = vmatprep.subr.bf16.mxu0 0
  %1397 = vmatpush1.bf16.msra.mxu0 %v1225
  %1398 = vmatprep.subr.bf16.mxu0 0
  %1399 = vmatpush1.bf16.msra.mxu0 %v1226
  %1400 = vmatprep.subr.bf16.mxu0 0
  %1401 = vmatpush1.bf16.msra.mxu0 %v1227
  %1402 = vmatprep.subr.bf16.mxu0 0
  %1403 = vmatpush1.bf16.msra.mxu0 %v1228
  %1404 = vmatprep.subr.bf16.mxu0 0
  %1405 = vmatpush1.bf16.msra.mxu0 %v1229
  %1406 = vmatprep.subr.bf16.mxu0 0
  %1407 = vmatpush1.bf16.msra.mxu0 %v1230
  %1408 = vmatprep.subr.bf16.mxu0 0
  %1409 = vmatpush1.bf16.msra.mxu0 %v1231
  %1410 = vmatprep.subr.bf16.mxu0 0
  %1411 = vmatpush1.bf16.msra.mxu0 %v1232
  %1412 = vmatprep.subr.bf16.mxu0 0
  %1413 = vmatpush1.bf16.msra.mxu0 %v1233
  %1414 = vmatprep.subr.bf16.mxu0 0
  %1415 = vmatpush1.bf16.msra.mxu0 %v1234
  %1416 = vmatprep.subr.bf16.mxu0 0
  %1417 = vmatpush1.bf16.msra.mxu0 %v1235
  %1418 = vmatprep.subr.bf16.mxu0 0
  %1419 = vmatpush1.bf16.msra.mxu0 %v1236
  %1420 = vmatprep.subr.bf16.mxu0 0
  %1421 = vmatpush1.bf16.msra.mxu0 %v1237
  %1422 = vmatprep.subr.bf16.mxu0 0
  %1423 = vmatpush1.bf16.msra.mxu0 %v1238
  %1424 = vmatprep.mubr.bf16.mxu0 %v792
  %1425 = vmatmul.mubr.bf16.gmra.mrb[0].mxu0 %v791
  %v1426 = vpop.f32.mrb[0].mxu0
  %v1427 = vadd.f32 0.0, %v1426
  %v1428 = vpop.f32.mrb[0].mxu0
  %v1429 = vpop.f32.mrb[0].mxu0
  %v1430 = vadd.f32 0.0, %v1429
  %v1431 = vpop.f32.mrb[0].mxu0
  %1432 = vmatprep.mubr.bf16.mxu0 %v797
  %1433 = vmatmul.mubr.bf16.gmra.mrb[0].mxu0 %v796
  %v1434 = vpop.f32.mrb[0].mxu0
  %v1435 = vadd.f32 0.0, %v1434
  %v1436 = vpop.f32.mrb[0].mxu0
  %v1437 = vpop.f32.mrb[0].mxu0
  %v1438 = vadd.f32 0.0, %v1437
  %v1439 = vpop.f32.mrb[0].mxu0
  %1440 = vmatprep.mubr.bf16.mxu0 %v802
  %1441 = vmatmul.mubr.bf16.gmra.mrb[0].mxu0 %v801
  %v1442 = vpop.f32.mrb[0].mxu0
  %v1443 = vadd.f32 0.0, %v1442
  %v1444 = vpop.f32.mrb[0].mxu0
  %v1445 = vpop.f32.mrb[0].mxu0
  %v1446 = vadd.f32 0.0, %v1445
  %v1447 = vpop.f32.mrb[0].mxu0
  %1448 = vmatprep.mubr.bf16.mxu0 %v807
  %1449 = vmatmul.mubr.bf16.gmra.mrb[0].mxu0 %v806
  %v1450 = vpop.f32.mrb[0].mxu0
  %v1451 = vadd.f32 0.0, %v1450
  %v1452 = vpop.f32.mrb[0].mxu0
  %v1453 = vpop.f32.mrb[0].mxu0
  %v1454 = vadd.f32 0.0, %v1453
  %v1455 = vpop.f32.mrb[0].mxu0
  %1456 = vmatprep.mubr.bf16.mxu0 %v812
  %1457 = vmatmul.mubr.bf16.gmra.mrb[0].mxu0 %v811
  %v1458 = vpop.f32.mrb[0].mxu0
  %v1459 = vadd.f32 0.0, %v1458
  %v1460 = vpop.f32.mrb[0].mxu0
  %v1461 = vpop.f32.mrb[0].mxu0
  %v1462 = vadd.f32 0.0, %v1461
  %v1463 = vpop.f32.mrb[0].mxu0
  %1464 = vmatprep.mubr.bf16.mxu0 %v817
  %1465 = vmatmul.mubr.bf16.gmra.mrb[0].mxu0 %v816
  %v1466 = vpop.f32.mrb[0].mxu0
  %v1467 = vadd.f32 0.0, %v1466
  %v1468 = vpop.f32.mrb[0].mxu0
  %v1469 = vpop.f32.mrb[0].mxu0
  %v1470 = vadd.f32 0.0, %v1469
  %v1471 = vpop.f32.mrb[0].mxu0
  %1472 = vmatprep.mubr.bf16.mxu0 %v822
  %1473 = vmatmul.mubr.bf16.gmra.mrb[0].mxu0 %v821
  %v1474 = vpop.f32.mrb[0].mxu0
  %v1475 = vadd.f32 0.0, %v1474
  %v1476 = vpop.f32.mrb[0].mxu0
  %v1477 = vpop.f32.mrb[0].mxu0
  %v1478 = vadd.f32 0.0, %v1477
  %v1479 = vpop.f32.mrb[0].mxu0
  %1480 = vmatprep.mubr.bf16.mxu0 %v827
  %1481 = vmatmul.mubr.bf16.gmra.mrb[0].mxu0 %v826
  %v1482 = vpop.f32.mrb[0].mxu0
  %v1483 = vadd.f32 0.0, %v1482
  %v1484 = vpop.f32.mrb[0].mxu0
  %v1485 = vpop.f32.mrb[0].mxu0
  %v1486 = vadd.f32 0.0, %v1485
  %v1487 = vpop.f32.mrb[0].mxu0
  %1488 = vmatprep.mubr.bf16.mxu0 %v832
  %1489 = vmatmul.mubr.bf16.gmra.mrb[0].mxu0 %v831
  %v1490 = vpop.f32.mrb[0].mxu0
  %v1491 = vadd.f32 0.0, %v1490
  %v1492 = vpop.f32.mrb[0].mxu0
  %v1493 = vpop.f32.mrb[0].mxu0
  %v1494 = vadd.f32 0.0, %v1493
  %v1495 = vpop.f32.mrb[0].mxu0
  %1496 = vmatprep.mubr.bf16.mxu0 %v837
  %1497 = vmatmul.mubr.bf16.gmra.mrb[0].mxu0 %v836
  %v1498 = vpop.f32.mrb[0].mxu0
  %v1499 = vadd.f32 0.0, %v1498
  %v1500 = vpop.f32.mrb[0].mxu0
  %v1501 = vpop.f32.mrb[0].mxu0
  %v1502 = vadd.f32 0.0, %v1501
  %v1503 = vpop.f32.mrb[0].mxu0
  %1504 = vmatprep.mubr.bf16.mxu0 %v842
  %1505 = vmatmul.mubr.bf16.gmra.mrb[0].mxu0 %v841
  %v1506 = vpop.f32.mrb[0].mxu0
  %v1507 = vadd.f32 0.0, %v1506
  %v1508 = vpop.f32.mrb[0].mxu0
  %v1509 = vpop.f32.mrb[0].mxu0
  %v1510 = vadd.f32 0.0, %v1509
  %v1511 = vpop.f32.mrb[0].mxu0
  %1512 = vmatprep.mubr.bf16.mxu0 %v847
  %1513 = vmatmul.mubr.bf16.gmra.mrb[0].mxu0 %v846
  %v1514 = vpop.f32.mrb[0].mxu0
  %v1515 = vadd.f32 0.0, %v1514
  %v1516 = vpop.f32.mrb[0].mxu0
  %v1517 = vpop.f32.mrb[0].mxu0
  %v1518 = vadd.f32 0.0, %v1517
  %v1519 = vpop.f32.mrb[0].mxu0
  %1520 = vmatprep.mubr.bf16.mxu0 %v852
  %1521 = vmatmul.mubr.bf16.gmra.mrb[0].mxu0 %v851
  %v1522 = vpop.f32.mrb[0].mxu0
  %v1523 = vadd.f32 0.0, %v1522
  %v1524 = vpop.f32.mrb[0].mxu0
  %v1525 = vpop.f32.mrb[0].mxu0
  %v1526 = vadd.f32 0.0, %v1525
  %v1527 = vpop.f32.mrb[0].mxu0
  %1528 = vmatprep.mubr.bf16.mxu0 %v857
  %1529 = vmatmul.mubr.bf16.gmra.mrb[0].mxu0 %v856
  %v1530 = vpop.f32.mrb[0].mxu0
  %v1531 = vadd.f32 0.0, %v1530
  %v1532 = vpop.f32.mrb[0].mxu0
  %v1533 = vpop.f32.mrb[0].mxu0
  %v1534 = vadd.f32 0.0, %v1533
  %v1535 = vpop.f32.mrb[0].mxu0
  %1536 = vmatprep.mubr.bf16.mxu0 %v862
  %1537 = vmatmul.mubr.bf16.gmra.mrb[0].mxu0 %v861
  %v1538 = vpop.f32.mrb[0].mxu0
  %v1539 = vadd.f32 0.0, %v1538
  %v1540 = vpop.f32.mrb[0].mxu0
  %v1541 = vpop.f32.mrb[0].mxu0
  %v1542 = vadd.f32 0.0, %v1541
  %v1543 = vpop.f32.mrb[0].mxu0
  %1544 = vmatprep.mubr.bf16.mxu0 %v867
  %1545 = vmatmul.mubr.bf16.gmra.mrb[0].mxu0 %v866
  %v1546 = vpop.f32.mrb[0].mxu0
  %v1547 = vadd.f32 0.0, %v1546
  %v1548 = vpop.f32.mrb[0].mxu0
  %v1549 = vpop.f32.mrb[0].mxu0
  %v1550 = vadd.f32 0.0, %v1549
  %v1551 = vpop.f32.mrb[0].mxu0
  %1552 = vmatprep.mubr.bf16.mxu0 %v872
  %1553 = vmatmul.mubr.bf16.gmra.mrb[0].mxu0 %v871
  %v1554 = vpop.f32.mrb[0].mxu0
  %v1555 = vadd.f32 0.0, %v1554
  %v1556 = vpop.f32.mrb[0].mxu0
  %v1557 = vpop.f32.mrb[0].mxu0
  %v1558 = vadd.f32 0.0, %v1557
  %v1559 = vpop.f32.mrb[0].mxu0
  %1560 = vmatprep.mubr.bf16.mxu0 %v877
  %1561 = vmatmul.mubr.bf16.gmra.mrb[0].mxu0 %v876
  %v1562 = vpop.f32.mrb[0].mxu0
  %v1563 = vadd.f32 0.0, %v1562
  %v1564 = vpop.f32.mrb[0].mxu0
  %v1565 = vpop.f32.mrb[0].mxu0
  %v1566 = vadd.f32 0.0, %v1565
  %v1567 = vpop.f32.mrb[0].mxu0
  %1568 = vmatprep.mubr.bf16.mxu0 %v882
  %1569 = vmatmul.mubr.bf16.gmra.mrb[0].mxu0 %v881
  %v1570 = vpop.f32.mrb[0].mxu0
  %v1571 = vadd.f32 0.0, %v1570
  %v1572 = vpop.f32.mrb[0].mxu0
  %v1573 = vpop.f32.mrb[0].mxu0
  %v1574 = vadd.f32 0.0, %v1573
  %v1575 = vpop.f32.mrb[0].mxu0
  %1576 = vmatprep.mubr.bf16.mxu0 %v887
  %1577 = vmatmul.mubr.bf16.gmra.mrb[0].mxu0 %v886
  %v1578 = vpop.f32.mrb[0].mxu0
  %v1579 = vadd.f32 0.0, %v1578
  %v1580 = vpop.f32.mrb[0].mxu0
  %v1581 = vpop.f32.mrb[0].mxu0
  %v1582 = vadd.f32 0.0, %v1581
  %v1583 = vpop.f32.mrb[0].mxu0
  %1584 = vmatprep.mubr.bf16.mxu0 %v892
  %1585 = vmatmul.mubr.bf16.gmra.mrb[0].mxu0 %v891
  %v1586 = vpop.f32.mrb[0].mxu0
  %v1587 = vadd.f32 0.0, %v1586
  %v1588 = vpop.f32.mrb[0].mxu0
  %v1589 = vpop.f32.mrb[0].mxu0
  %v1590 = vadd.f32 0.0, %v1589
  %v1591 = vpop.f32.mrb[0].mxu0
  %1592 = vmatprep.mubr.bf16.mxu0 %v897
  %1593 = vmatmul.mubr.bf16.gmra.mrb[0].mxu0 %v896
  %v1594 = vpop.f32.mrb[0].mxu0
  %v1595 = vadd.f32 0.0, %v1594
  %v1596 = vpop.f32.mrb[0].mxu0
  %v1597 = vpop.f32.mrb[0].mxu0
  %v1598 = vadd.f32 0.0, %v1597
  %v1599 = vpop.f32.mrb[0].mxu0
  %1600 = vmatprep.mubr.bf16.mxu0 %v902
  %1601 = vmatmul.mubr.bf16.gmra.mrb[0].mxu0 %v901
  %v1602 = vpop.f32.mrb[0].mxu0
  %v1603 = vadd.f32 0.0, %v1602
  %v1604 = vpop.f32.mrb[0].mxu0
  %v1605 = vpop.f32.mrb[0].mxu0
  %v1606 = vadd.f32 0.0, %v1605
  %v1607 = vpop.f32.mrb[0].mxu0
  %1608 = vmatprep.mubr.bf16.mxu0 %v907
  %1609 = vmatmul.mubr.bf16.gmra.mrb[0].mxu0 %v906
  %v1610 = vpop.f32.mrb[0].mxu0
  %v1611 = vadd.f32 0.0, %v1610
  %v1612 = vpop.f32.mrb[0].mxu0
  %v1613 = vpop.f32.mrb[0].mxu0
  %v1614 = vadd.f32 0.0, %v1613
  %v1615 = vpop.f32.mrb[0].mxu0
  %1616 = vmatprep.mubr.bf16.mxu0 %v912
  %1617 = vmatmul.mubr.bf16.gmra.mrb[0].mxu0 %v911
  %v1618 = vpop.f32.mrb[0].mxu0
  %v1619 = vadd.f32 0.0, %v1618
  %v1620 = vpop.f32.mrb[0].mxu0
  %v1621 = vpop.f32.mrb[0].mxu0
  %v1622 = vadd.f32 0.0, %v1621
  %v1623 = vpop.f32.mrb[0].mxu0
  %1624 = vmatprep.mubr.bf16.mxu0 %v917
  %1625 = vmatmul.mubr.bf16.gmra.mrb[0].mxu0 %v916
  %v1626 = vpop.f32.mrb[0].mxu0
  %v1627 = vadd.f32 0.0, %v1626
  %v1628 = vpop.f32.mrb[0].mxu0
  %v1629 = vpop.f32.mrb[0].mxu0
  %v1630 = vadd.f32 0.0, %v1629
  %v1631 = vpop.f32.mrb[0].mxu0
  %1632 = vmatprep.mubr.bf16.mxu0 %v922
  %1633 = vmatmul.mubr.bf16.gmra.mrb[0].mxu0 %v921
  %v1634 = vpop.f32.mrb[0].mxu0
  %v1635 = vadd.f32 0.0, %v1634
  %v1636 = vpop.f32.mrb[0].mxu0
  %v1637 = vpop.f32.mrb[0].mxu0
  %v1638 = vadd.f32 0.0, %v1637
  %v1639 = vpop.f32.mrb[0].mxu0
  %1640 = vmatprep.mubr.bf16.mxu0 %v927
  %1641 = vmatmul.mubr.bf16.gmra.mrb[0].mxu0 %v926
  %v1642 = vpop.f32.mrb[0].mxu0
  %v1643 = vadd.f32 0.0, %v1642
  %v1644 = vpop.f32.mrb[0].mxu0
  %v1645 = vpop.f32.mrb[0].mxu0
  %v1646 = vadd.f32 0.0, %v1645
  %v1647 = vpop.f32.mrb[0].mxu0
  %1648 = vmatprep.mubr.bf16.mxu0 %v932
  %1649 = vmatmul.mubr.bf16.gmra.mrb[0].mxu0 %v931
  %v1650 = vpop.f32.mrb[0].mxu0
  %v1651 = vadd.f32 0.0, %v1650
  %v1652 = vpop.f32.mrb[0].mxu0
  %v1653 = vpop.f32.mrb[0].mxu0
  %v1654 = vadd.f32 0.0, %v1653
  %v1655 = vpop.f32.mrb[0].mxu0
  %1656 = vmatprep.mubr.bf16.mxu0 %v937
  %1657 = vmatmul.mubr.bf16.gmra.mrb[0].mxu0 %v936
  %v1658 = vpop.f32.mrb[0].mxu0
  %v1659 = vadd.f32 0.0, %v1658
  %v1660 = vpop.f32.mrb[0].mxu0
  %v1661 = vpop.f32.mrb[0].mxu0
  %v1662 = vadd.f32 0.0, %v1661
  %v1663 = vpop.f32.mrb[0].mxu0
  %1664 = vmatprep.mubr.bf16.mxu0 %v942
  %1665 = vmatmul.mubr.bf16.gmra.mrb[0].mxu0 %v941
  %v1666 = vpop.f32.mrb[0].mxu0
  %v1667 = vadd.f32 0.0, %v1666
  %v1668 = vpop.f32.mrb[0].mxu0
  %v1669 = vpop.f32.mrb[0].mxu0
  %v1670 = vadd.f32 0.0, %v1669
  %v1671 = vpop.f32.mrb[0].mxu0
  %1672 = vmatprep.mubr.bf16.mxu0 %v947
  %1673 = vmatmul.mubr.bf16.gmra.mrb[0].mxu0 %v946
  %v1674 = vpop.f32.mrb[0].mxu0
  %v1675 = vadd.f32 0.0, %v1674
  %v1676 = vpop.f32.mrb[0].mxu0
  %v1677 = vpop.f32.mrb[0].mxu0
  %v1678 = vadd.f32 0.0, %v1677
  %v1679 = vpop.f32.mrb[0].mxu0
  %1680 = vdwg.mxu0
  %1681 = vmatprep.subr.bf16.mxu0 0
  %1682 = vmatpush1.bf16.msra.mxu0 %v1239
  %1683 = vmatprep.subr.bf16.mxu0 0
  %1684 = vmatpush1.bf16.msra.mxu0 %v1240
  %1685 = vmatprep.subr.bf16.mxu0 0
  %1686 = vmatpush1.bf16.msra.mxu0 %v1241
  %1687 = vmatprep.subr.bf16.mxu0 0
  %1688 = vmatpush1.bf16.msra.mxu0 %v1242
  %1689 = vmatprep.subr.bf16.mxu0 0
  %1690 = vmatpush1.bf16.msra.mxu0 %v1243
  %1691 = vmatprep.subr.bf16.mxu0 0
  %1692 = vmatpush1.bf16.msra.mxu0 %v1244
  %1693 = vmatprep.subr.bf16.mxu0 0
  %1694 = vmatpush1.bf16.msra.mxu0 %v1245
  %1695 = vmatprep.subr.bf16.mxu0 0
  %1696 = vmatpush1.bf16.msra.mxu0 %v1246
  %1697 = vmatprep.subr.bf16.mxu0 0
  %1698 = vmatpush1.bf16.msra.mxu0 %v1247
  %1699 = vmatprep.subr.bf16.mxu0 0
  %1700 = vmatpush1.bf16.msra.mxu0 %v1248
  %1701 = vmatprep.subr.bf16.mxu0 0
  %1702 = vmatpush1.bf16.msra.mxu0 %v1249
  %1703 = vmatprep.subr.bf16.mxu0 0
  %1704 = vmatpush1.bf16.msra.mxu0 %v1250
  %1705 = vmatprep.subr.bf16.mxu0 0
  %1706 = vmatpush1.bf16.msra.mxu0 %v1251
  %1707 = vmatprep.subr.bf16.mxu0 0
  %1708 = vmatpush1.bf16.msra.mxu0 %v1252
  %1709 = vmatprep.subr.bf16.mxu0 0
  %1710 = vmatpush1.bf16.msra.mxu0 %v1253
  %1711 = vmatprep.subr.bf16.mxu0 0
  %1712 = vmatpush1.bf16.msra.mxu0 %v1254
  %1713 = vmatprep.mubr.bf16.mxu0 %v794
  %1714 = vmatmul.mubr.bf16.gmra.mrb[0].mxu0 %v793
  %v1715 = vpop.f32.mrb[0].mxu0
  %v1716 = vadd.f32 %v1427, %v1715
  %v1717 = vpop.f32.mrb[0].mxu0
  %v1718 = vpop.f32.mrb[0].mxu0
  %v1719 = vadd.f32 %v1430, %v1718
  %v1720 = vpop.f32.mrb[0].mxu0
  %1721 = vmatprep.mubr.bf16.mxu0 %v799
  %1722 = vmatmul.mubr.bf16.gmra.mrb[0].mxu0 %v798
  %v1723 = vpop.f32.mrb[0].mxu0
  %v1724 = vadd.f32 %v1435, %v1723
  %v1725 = vpop.f32.mrb[0].mxu0
  %v1726 = vpop.f32.mrb[0].mxu0
  %v1727 = vadd.f32 %v1438, %v1726
  %v1728 = vpop.f32.mrb[0].mxu0
  %1729 = vmatprep.mubr.bf16.mxu0 %v804
  %1730 = vmatmul.mubr.bf16.gmra.mrb[0].mxu0 %v803
  %v1731 = vpop.f32.mrb[0].mxu0
  %v1732 = vadd.f32 %v1443, %v1731
  %v1733 = vpop.f32.mrb[0].mxu0
  %v1734 = vpop.f32.mrb[0].mxu0
  %v1735 = vadd.f32 %v1446, %v1734
  %v1736 = vpop.f32.mrb[0].mxu0
  %1737 = vmatprep.mubr.bf16.mxu0 %v809
  %1738 = vmatmul.mubr.bf16.gmra.mrb[0].mxu0 %v808
  %v1739 = vpop.f32.mrb[0].mxu0
  %v1740 = vadd.f32 %v1451, %v1739
  %v1741 = vpop.f32.mrb[0].mxu0
  %v1742 = vpop.f32.mrb[0].mxu0
  %v1743 = vadd.f32 %v1454, %v1742
  %v1744 = vpop.f32.mrb[0].mxu0
  %1745 = vmatprep.mubr.bf16.mxu0 %v814
  %1746 = vmatmul.mubr.bf16.gmra.mrb[0].mxu0 %v813
  %v1747 = vpop.f32.mrb[0].mxu0
  %v1748 = vadd.f32 %v1459, %v1747
  %v1749 = vpop.f32.mrb[0].mxu0
  %v1750 = vpop.f32.mrb[0].mxu0
  %v1751 = vadd.f32 %v1462, %v1750
  %v1752 = vpop.f32.mrb[0].mxu0
  %1753 = vmatprep.mubr.bf16.mxu0 %v819
  %1754 = vmatmul.mubr.bf16.gmra.mrb[0].mxu0 %v818
  %v1755 = vpop.f32.mrb[0].mxu0
  %v1756 = vadd.f32 %v1467, %v1755
  %v1757 = vpop.f32.mrb[0].mxu0
  %v1758 = vpop.f32.mrb[0].mxu0
  %v1759 = vadd.f32 %v1470, %v1758
  %v1760 = vpop.f32.mrb[0].mxu0
  %1761 = vmatprep.mubr.bf16.mxu0 %v824
  %1762 = vmatmul.mubr.bf16.gmra.mrb[0].mxu0 %v823
  %v1763 = vpop.f32.mrb[0].mxu0
  %v1764 = vadd.f32 %v1475, %v1763
  %v1765 = vpop.f32.mrb[0].mxu0
  %v1766 = vpop.f32.mrb[0].mxu0
  %v1767 = vadd.f32 %v1478, %v1766
  %v1768 = vpop.f32.mrb[0].mxu0
  %1769 = vmatprep.mubr.bf16.mxu0 %v829
  %1770 = vmatmul.mubr.bf16.gmra.mrb[0].mxu0 %v828
  %v1771 = vpop.f32.mrb[0].mxu0
  %v1772 = vadd.f32 %v1483, %v1771
  %v1773 = vpop.f32.mrb[0].mxu0
  %v1774 = vpop.f32.mrb[0].mxu0
  %v1775 = vadd.f32 %v1486, %v1774
  %v1776 = vpop.f32.mrb[0].mxu0
  %1777 = vmatprep.mubr.bf16.mxu0 %v834
  %1778 = vmatmul.mubr.bf16.gmra.mrb[0].mxu0 %v833
  %v1779 = vpop.f32.mrb[0].mxu0
  %v1780 = vadd.f32 %v1491, %v1779
  %v1781 = vpop.f32.mrb[0].mxu0
  %v1782 = vpop.f32.mrb[0].mxu0
  %v1783 = vadd.f32 %v1494, %v1782
  %v1784 = vpop.f32.mrb[0].mxu0
  %1785 = vmatprep.mubr.bf16.mxu0 %v839
  %1786 = vmatmul.mubr.bf16.gmra.mrb[0].mxu0 %v838
  %v1787 = vpop.f32.mrb[0].mxu0
  %v1788 = vadd.f32 %v1499, %v1787
  %v1789 = vpop.f32.mrb[0].mxu0
  %v1790 = vpop.f32.mrb[0].mxu0
  %v1791 = vadd.f32 %v1502, %v1790
  %v1792 = vpop.f32.mrb[0].mxu0
  %1793 = vmatprep.mubr.bf16.mxu0 %v844
  %1794 = vmatmul.mubr.bf16.gmra.mrb[0].mxu0 %v843
  %v1795 = vpop.f32.mrb[0].mxu0
  %v1796 = vadd.f32 %v1507, %v1795
  %v1797 = vpop.f32.mrb[0].mxu0
  %v1798 = vpop.f32.mrb[0].mxu0
  %v1799 = vadd.f32 %v1510, %v1798
  %v1800 = vpop.f32.mrb[0].mxu0
  %1801 = vmatprep.mubr.bf16.mxu0 %v849
  %1802 = vmatmul.mubr.bf16.gmra.mrb[0].mxu0 %v848
  %v1803 = vpop.f32.mrb[0].mxu0
  %v1804 = vadd.f32 %v1515, %v1803
  %v1805 = vpop.f32.mrb[0].mxu0
  %v1806 = vpop.f32.mrb[0].mxu0
  %v1807 = vadd.f32 %v1518, %v1806
  %v1808 = vpop.f32.mrb[0].mxu0
  %1809 = vmatprep.mubr.bf16.mxu0 %v854
  %1810 = vmatmul.mubr.bf16.gmra.mrb[0].mxu0 %v853
  %v1811 = vpop.f32.mrb[0].mxu0
  %v1812 = vadd.f32 %v1523, %v1811
  %v1813 = vpop.f32.mrb[0].mxu0
  %v1814 = vpop.f32.mrb[0].mxu0
  %v1815 = vadd.f32 %v1526, %v1814
  %v1816 = vpop.f32.mrb[0].mxu0
  %1817 = vmatprep.mubr.bf16.mxu0 %v859
  %1818 = vmatmul.mubr.bf16.gmra.mrb[0].mxu0 %v858
  %v1819 = vpop.f32.mrb[0].mxu0
  %v1820 = vadd.f32 %v1531, %v1819
  %v1821 = vpop.f32.mrb[0].mxu0
  %v1822 = vpop.f32.mrb[0].mxu0
  %v1823 = vadd.f32 %v1534, %v1822
  %v1824 = vpop.f32.mrb[0].mxu0
  %1825 = vmatprep.mubr.bf16.mxu0 %v864
  %1826 = vmatmul.mubr.bf16.gmra.mrb[0].mxu0 %v863
  %v1827 = vpop.f32.mrb[0].mxu0
  %v1828 = vadd.f32 %v1539, %v1827
  %v1829 = vpop.f32.mrb[0].mxu0
  %v1830 = vpop.f32.mrb[0].mxu0
  %v1831 = vadd.f32 %v1542, %v1830
  %v1832 = vpop.f32.mrb[0].mxu0
  %1833 = vmatprep.mubr.bf16.mxu0 %v869
  %1834 = vmatmul.mubr.bf16.gmra.mrb[0].mxu0 %v868
  %v1835 = vpop.f32.mrb[0].mxu0
  %v1836 = vadd.f32 %v1547, %v1835
  %v1837 = vpop.f32.mrb[0].mxu0
  %v1838 = vpop.f32.mrb[0].mxu0
  %v1839 = vadd.f32 %v1550, %v1838
  %v1840 = vpop.f32.mrb[0].mxu0
  %1841 = vmatprep.mubr.bf16.mxu0 %v874
  %1842 = vmatmul.mubr.bf16.gmra.mrb[0].mxu0 %v873
  %v1843 = vpop.f32.mrb[0].mxu0
  %v1844 = vadd.f32 %v1555, %v1843
  %v1845 = vpop.f32.mrb[0].mxu0
  %v1846 = vpop.f32.mrb[0].mxu0
  %v1847 = vadd.f32 %v1558, %v1846
  %v1848 = vpop.f32.mrb[0].mxu0
  %1849 = vmatprep.mubr.bf16.mxu0 %v879
  %1850 = vmatmul.mubr.bf16.gmra.mrb[0].mxu0 %v878
  %v1851 = vpop.f32.mrb[0].mxu0
  %v1852 = vadd.f32 %v1563, %v1851
  %v1853 = vpop.f32.mrb[0].mxu0
  %v1854 = vpop.f32.mrb[0].mxu0
  %v1855 = vadd.f32 %v1566, %v1854
  %v1856 = vpop.f32.mrb[0].mxu0
  %1857 = vmatprep.mubr.bf16.mxu0 %v884
  %1858 = vmatmul.mubr.bf16.gmra.mrb[0].mxu0 %v883
  %v1859 = vpop.f32.mrb[0].mxu0
  %v1860 = vadd.f32 %v1571, %v1859
  %v1861 = vpop.f32.mrb[0].mxu0
  %v1862 = vpop.f32.mrb[0].mxu0
  %v1863 = vadd.f32 %v1574, %v1862
  %v1864 = vpop.f32.mrb[0].mxu0
  %1865 = vmatprep.mubr.bf16.mxu0 %v889
  %1866 = vmatmul.mubr.bf16.gmra.mrb[0].mxu0 %v888
  %v1867 = vpop.f32.mrb[0].mxu0
  %v1868 = vadd.f32 %v1579, %v1867
  %v1869 = vpop.f32.mrb[0].mxu0
  %v1870 = vpop.f32.mrb[0].mxu0
  %v1871 = vadd.f32 %v1582, %v1870
  %v1872 = vpop.f32.mrb[0].mxu0
  %1873 = vmatprep.mubr.bf16.mxu0 %v894
  %1874 = vmatmul.mubr.bf16.gmra.mrb[0].mxu0 %v893
  %v1875 = vpop.f32.mrb[0].mxu0
  %v1876 = vadd.f32 %v1587, %v1875
  %v1877 = vpop.f32.mrb[0].mxu0
  %v1878 = vpop.f32.mrb[0].mxu0
  %v1879 = vadd.f32 %v1590, %v1878
  %v1880 = vpop.f32.mrb[0].mxu0
  %1881 = vmatprep.mubr.bf16.mxu0 %v899
  %1882 = vmatmul.mubr.bf16.gmra.mrb[0].mxu0 %v898
  %v1883 = vpop.f32.mrb[0].mxu0
  %v1884 = vadd.f32 %v1595, %v1883
  %v1885 = vpop.f32.mrb[0].mxu0
  %v1886 = vpop.f32.mrb[0].mxu0
  %v1887 = vadd.f32 %v1598, %v1886
  %v1888 = vpop.f32.mrb[0].mxu0
  %1889 = vmatprep.mubr.bf16.mxu0 %v904
  %1890 = vmatmul.mubr.bf16.gmra.mrb[0].mxu0 %v903
  %v1891 = vpop.f32.mrb[0].mxu0
  %v1892 = vadd.f32 %v1603, %v1891
  %v1893 = vpop.f32.mrb[0].mxu0
  %v1894 = vpop.f32.mrb[0].mxu0
  %v1895 = vadd.f32 %v1606, %v1894
  %v1896 = vpop.f32.mrb[0].mxu0
  %1897 = vmatprep.mubr.bf16.mxu0 %v909
  %1898 = vmatmul.mubr.bf16.gmra.mrb[0].mxu0 %v908
  %v1899 = vpop.f32.mrb[0].mxu0
  %v1900 = vadd.f32 %v1611, %v1899
  %v1901 = vpop.f32.mrb[0].mxu0
  %v1902 = vpop.f32.mrb[0].mxu0
  %v1903 = vadd.f32 %v1614, %v1902
  %v1904 = vpop.f32.mrb[0].mxu0
  %1905 = vmatprep.mubr.bf16.mxu0 %v914
  %1906 = vmatmul.mubr.bf16.gmra.mrb[0].mxu0 %v913
  %v1907 = vpop.f32.mrb[0].mxu0
  %v1908 = vadd.f32 %v1619, %v1907
  %v1909 = vpop.f32.mrb[0].mxu0
  %v1910 = vpop.f32.mrb[0].mxu0
  %v1911 = vadd.f32 %v1622, %v1910
  %v1912 = vpop.f32.mrb[0].mxu0
  %1913 = vmatprep.mubr.bf16.mxu0 %v919
  %1914 = vmatmul.mubr.bf16.gmra.mrb[0].mxu0 %v918
  %v1915 = vpop.f32.mrb[0].mxu0
  %v1916 = vadd.f32 %v1627, %v1915
  %v1917 = vpop.f32.mrb[0].mxu0
  %v1918 = vpop.f32.mrb[0].mxu0
  %v1919 = vadd.f32 %v1630, %v1918
  %v1920 = vpop.f32.mrb[0].mxu0
  %1921 = vmatprep.mubr.bf16.mxu0 %v924
  %1922 = vmatmul.mubr.bf16.gmra.mrb[0].mxu0 %v923
  %v1923 = vpop.f32.mrb[0].mxu0
  %v1924 = vadd.f32 %v1635, %v1923
  %v1925 = vpop.f32.mrb[0].mxu0
  %v1926 = vpop.f32.mrb[0].mxu0
  %v1927 = vadd.f32 %v1638, %v1926
  %v1928 = vpop.f32.mrb[0].mxu0
  %1929 = vmatprep.mubr.bf16.mxu0 %v929
  %1930 = vmatmul.mubr.bf16.gmra.mrb[0].mxu0 %v928
  %v1931 = vpop.f32.mrb[0].mxu0
  %v1932 = vadd.f32 %v1643, %v1931
  %v1933 = vpop.f32.mrb[0].mxu0
  %v1934 = vpop.f32.mrb[0].mxu0
  %v1935 = vadd.f32 %v1646, %v1934
  %v1936 = vpop.f32.mrb[0].mxu0
  %1937 = vmatprep.mubr.bf16.mxu0 %v934
  %1938 = vmatmul.mubr.bf16.gmra.mrb[0].mxu0 %v933
  %v1939 = vpop.f32.mrb[0].mxu0
  %v1940 = vadd.f32 %v1651, %v1939
  %v1941 = vpop.f32.mrb[0].mxu0
  %v1942 = vpop.f32.mrb[0].mxu0
  %v1943 = vadd.f32 %v1654, %v1942
  %v1944 = vpop.f32.mrb[0].mxu0
  %1945 = vmatprep.mubr.bf16.mxu0 %v939
  %1946 = vmatmul.mubr.bf16.gmra.mrb[0].mxu0 %v938
  %v1947 = vpop.f32.mrb[0].mxu0
  %v1948 = vadd.f32 %v1659, %v1947
  %v1949 = vpop.f32.mrb[0].mxu0
  %v1950 = vpop.f32.mrb[0].mxu0
  %v1951 = vadd.f32 %v1662, %v1950
  %v1952 = vpop.f32.mrb[0].mxu0
  %1953 = vmatprep.mubr.bf16.mxu0 %v944
  %1954 = vmatmul.mubr.bf16.gmra.mrb[0].mxu0 %v943
  %v1955 = vpop.f32.mrb[0].mxu0
  %v1956 = vadd.f32 %v1667, %v1955
  %v1957 = vpop.f32.mrb[0].mxu0
  %v1958 = vpop.f32.mrb[0].mxu0
  %v1959 = vadd.f32 %v1670, %v1958
  %v1960 = vpop.f32.mrb[0].mxu0
  %1961 = vmatprep.mubr.bf16.mxu0 %v949
  %1962 = vmatmul.mubr.bf16.gmra.mrb[0].mxu0 %v948
  %v1963 = vpop.f32.mrb[0].mxu0
  %v1964 = vadd.f32 %v1675, %v1963
  %v1965 = vpop.f32.mrb[0].mxu0
  %v1966 = vpop.f32.mrb[0].mxu0
  %v1967 = vadd.f32 %v1678, %v1966
  %v1968 = vpop.f32.mrb[0].mxu0
  %1969 = vdwg.mxu0
  %1970 = vmatprep.subr.bf16.mxu0 0
  %1971 = vmatpush1.bf16.msra.mxu0 %v1255
  %1972 = vmatprep.subr.bf16.mxu0 0
  %1973 = vmatpush1.bf16.msra.mxu0 %v1256
  %1974 = vmatprep.subr.bf16.mxu0 0
  %1975 = vmatpush1.bf16.msra.mxu0 %v1257
  %1976 = vmatprep.subr.bf16.mxu0 0
  %1977 = vmatpush1.bf16.msra.mxu0 %v1258
  %1978 = vmatprep.subr.bf16.mxu0 0
  %1979 = vmatpush1.bf16.msra.mxu0 0
  %1980 = vmatprep.subr.bf16.mxu0 0
  %1981 = vmatpush1.bf16.msra.mxu0 0
  %1982 = vmatprep.subr.bf16.mxu0 0
  %1983 = vmatpush1.bf16.msra.mxu0 0
  %1984 = vmatprep.subr.bf16.mxu0 0
  %1985 = vmatpush1.bf16.msra.mxu0 0
  %1986 = vmatprep.subr.bf16.mxu0 0
  %1987 = vmatpush1.bf16.msra.mxu0 0
  %1988 = vmatprep.subr.bf16.mxu0 0
  %1989 = vmatpush1.bf16.msra.mxu0 0
  %1990 = vmatprep.subr.bf16.mxu0 0
  %1991 = vmatpush1.bf16.msra.mxu0 0
  %1992 = vmatprep.subr.bf16.mxu0 0
  %1993 = vmatpush1.bf16.msra.mxu0 0
  %1994 = vmatprep.subr.bf16.mxu0 0
  %1995 = vmatpush1.bf16.msra.mxu0 0
  %1996 = vmatprep.subr.bf16.mxu0 0
  %1997 = vmatpush1.bf16.msra.mxu0 0
  %1998 = vmatprep.subr.bf16.mxu0 0
  %1999 = vmatpush1.bf16.msra.mxu0 0
  %2000 = vmatprep.subr.bf16.mxu0 0
  %2001 = vmatpush1.bf16.msra.mxu0 0
  %2002 = vmatprep.mubr.bf16.mxu0 0
  %2003 = vmatmul.mubr.bf16.gmra.mrb[0].mxu0 %v1297
  %v2004 = vpop.f32.mrb[0].mxu0
  %v2005 = vadd.f32 %v1716, %v2004
  %v2006 = vpop.f32.mrb[0].mxu0
  %v2007 = vpop.f32.mrb[0].mxu0
  %v2008 = vadd.f32 %v1719, %v2007
  %v2009 = vpop.f32.mrb[0].mxu0
  %2010 = vmatprep.mubr.bf16.mxu0 0
  %2011 = vmatmul.mubr.bf16.gmra.mrb[0].mxu0 %v1300
  %v2012 = vpop.f32.mrb[0].mxu0
  %v2013 = vadd.f32 %v1724, %v2012
  %v2014 = vpop.f32.mrb[0].mxu0
  %v2015 = vpop.f32.mrb[0].mxu0
  %v2016 = vadd.f32 %v1727, %v2015
  %v2017 = vpop.f32.mrb[0].mxu0
  %2018 = vmatprep.mubr.bf16.mxu0 0
  %2019 = vmatmul.mubr.bf16.gmra.mrb[0].mxu0 %v1303
  %v2020 = vpop.f32.mrb[0].mxu0
  %v2021 = vadd.f32 %v1732, %v2020
  %v2022 = vpop.f32.mrb[0].mxu0
  %v2023 = vpop.f32.mrb[0].mxu0
  %v2024 = vadd.f32 %v1735, %v2023
  %v2025 = vpop.f32.mrb[0].mxu0
  %2026 = vmatprep.mubr.bf16.mxu0 0
  %2027 = vmatmul.mubr.bf16.gmra.mrb[0].mxu0 %v1306
  %v2028 = vpop.f32.mrb[0].mxu0
  %v2029 = vadd.f32 %v1740, %v2028
  %v2030 = vpop.f32.mrb[0].mxu0
  %v2031 = vpop.f32.mrb[0].mxu0
  %v2032 = vadd.f32 %v1743, %v2031
  %v2033 = vpop.f32.mrb[0].mxu0
  %2034 = vmatprep.mubr.bf16.mxu0 0
  %2035 = vmatmul.mubr.bf16.gmra.mrb[0].mxu0 %v1309
  %v2036 = vpop.f32.mrb[0].mxu0
  %v2037 = vadd.f32 %v1748, %v2036
  %v2038 = vpop.f32.mrb[0].mxu0
  %v2039 = vpop.f32.mrb[0].mxu0
  %v2040 = vadd.f32 %v1751, %v2039
  %v2041 = vpop.f32.mrb[0].mxu0
  %2042 = vmatprep.mubr.bf16.mxu0 0
  %2043 = vmatmul.mubr.bf16.gmra.mrb[0].mxu0 %v1312
  %v2044 = vpop.f32.mrb[0].mxu0
  %v2045 = vadd.f32 %v1756, %v2044
  %v2046 = vpop.f32.mrb[0].mxu0
  %v2047 = vpop.f32.mrb[0].mxu0
  %v2048 = vadd.f32 %v1759, %v2047
  %v2049 = vpop.f32.mrb[0].mxu0
  %2050 = vmatprep.mubr.bf16.mxu0 0
  %2051 = vmatmul.mubr.bf16.gmra.mrb[0].mxu0 %v1315
  %v2052 = vpop.f32.mrb[0].mxu0
  %v2053 = vadd.f32 %v1764, %v2052
  %v2054 = vpop.f32.mrb[0].mxu0
  %v2055 = vpop.f32.mrb[0].mxu0
  %v2056 = vadd.f32 %v1767, %v2055
  %v2057 = vpop.f32.mrb[0].mxu0
  %2058 = vmatprep.mubr.bf16.mxu0 0
  %2059 = vmatmul.mubr.bf16.gmra.mrb[0].mxu0 %v1318
  %v2060 = vpop.f32.mrb[0].mxu0
  %v2061 = vadd.f32 %v1772, %v2060
  %v2062 = vpop.f32.mrb[0].mxu0
  %v2063 = vpop.f32.mrb[0].mxu0
  %v2064 = vadd.f32 %v1775, %v2063
  %v2065 = vpop.f32.mrb[0].mxu0
  %2066 = vmatprep.mubr.bf16.mxu0 0
  %2067 = vmatmul.mubr.bf16.gmra.mrb[0].mxu0 %v1321
  %v2068 = vpop.f32.mrb[0].mxu0
  %v2069 = vadd.f32 %v1780, %v2068
  %v2070 = vpop.f32.mrb[0].mxu0
  %v2071 = vpop.f32.mrb[0].mxu0
  %v2072 = vadd.f32 %v1783, %v2071
  %v2073 = vpop.f32.mrb[0].mxu0
  %2074 = vmatprep.mubr.bf16.mxu0 0
  %2075 = vmatmul.mubr.bf16.gmra.mrb[0].mxu0 %v1324
  %v2076 = vpop.f32.mrb[0].mxu0
  %v2077 = vadd.f32 %v1788, %v2076
  %v2078 = vpop.f32.mrb[0].mxu0
  %v2079 = vpop.f32.mrb[0].mxu0
  %v2080 = vadd.f32 %v1791, %v2079
  %v2081 = vpop.f32.mrb[0].mxu0
  %2082 = vmatprep.mubr.bf16.mxu0 0
  %2083 = vmatmul.mubr.bf16.gmra.mrb[0].mxu0 %v1327
  %v2084 = vpop.f32.mrb[0].mxu0
  %v2085 = vadd.f32 %v1796, %v2084
  %v2086 = vpop.f32.mrb[0].mxu0
  %v2087 = vpop.f32.mrb[0].mxu0
  %v2088 = vadd.f32 %v1799, %v2087
  %v2089 = vpop.f32.mrb[0].mxu0
  %2090 = vmatprep.mubr.bf16.mxu0 0
  %2091 = vmatmul.mubr.bf16.gmra.mrb[0].mxu0 %v1330
  %v2092 = vpop.f32.mrb[0].mxu0
  %v2093 = vadd.f32 %v1804, %v2092
  %v2094 = vpop.f32.mrb[0].mxu0
  %v2095 = vpop.f32.mrb[0].mxu0
  %v2096 = vadd.f32 %v1807, %v2095
  %v2097 = vpop.f32.mrb[0].mxu0
  %2098 = vmatprep.mubr.bf16.mxu0 0
  %2099 = vmatmul.mubr.bf16.gmra.mrb[0].mxu0 %v1333
  %v2100 = vpop.f32.mrb[0].mxu0
  %v2101 = vadd.f32 %v1812, %v2100
  %v2102 = vpop.f32.mrb[0].mxu0
  %v2103 = vpop.f32.mrb[0].mxu0
  %v2104 = vadd.f32 %v1815, %v2103
  %v2105 = vpop.f32.mrb[0].mxu0
  %2106 = vmatprep.mubr.bf16.mxu0 0
  %2107 = vmatmul.mubr.bf16.gmra.mrb[0].mxu0 %v1336
  %v2108 = vpop.f32.mrb[0].mxu0
  %v2109 = vadd.f32 %v1820, %v2108
  %v2110 = vpop.f32.mrb[0].mxu0
  %v2111 = vpop.f32.mrb[0].mxu0
  %v2112 = vadd.f32 %v1823, %v2111
  %v2113 = vpop.f32.mrb[0].mxu0
  %2114 = vmatprep.mubr.bf16.mxu0 0
  %2115 = vmatmul.mubr.bf16.gmra.mrb[0].mxu0 %v1339
  %v2116 = vpop.f32.mrb[0].mxu0
  %v2117 = vadd.f32 %v1828, %v2116
  %v2118 = vpop.f32.mrb[0].mxu0
  %v2119 = vpop.f32.mrb[0].mxu0
  %v2120 = vadd.f32 %v1831, %v2119
  %v2121 = vpop.f32.mrb[0].mxu0
  %2122 = vmatprep.mubr.bf16.mxu0 0
  %2123 = vmatmul.mubr.bf16.gmra.mrb[0].mxu0 %v1342
  %v2124 = vpop.f32.mrb[0].mxu0
  %v2125 = vadd.f32 %v1836, %v2124
  %v2126 = vpop.f32.mrb[0].mxu0
  %v2127 = vpop.f32.mrb[0].mxu0
  %v2128 = vadd.f32 %v1839, %v2127
  %v2129 = vpop.f32.mrb[0].mxu0
  %2130 = vmatprep.mubr.bf16.mxu0 0
  %2131 = vmatmul.mubr.bf16.gmra.mrb[0].mxu0 %v1345
  %v2132 = vpop.f32.mrb[0].mxu0
  %v2133 = vadd.f32 %v1844, %v2132
  %v2134 = vpop.f32.mrb[0].mxu0
  %v2135 = vpop.f32.mrb[0].mxu0
  %v2136 = vadd.f32 %v1847, %v2135
  %v2137 = vpop.f32.mrb[0].mxu0
  %2138 = vmatprep.mubr.bf16.mxu0 0
  %2139 = vmatmul.mubr.bf16.gmra.mrb[0].mxu0 %v1348
  %v2140 = vpop.f32.mrb[0].mxu0
  %v2141 = vadd.f32 %v1852, %v2140
  %v2142 = vpop.f32.mrb[0].mxu0
  %v2143 = vpop.f32.mrb[0].mxu0
  %v2144 = vadd.f32 %v1855, %v2143
  %v2145 = vpop.f32.mrb[0].mxu0
  %2146 = vmatprep.mubr.bf16.mxu0 0
  %2147 = vmatmul.mubr.bf16.gmra.mrb[0].mxu0 %v1351
  %v2148 = vpop.f32.mrb[0].mxu0
  %v2149 = vadd.f32 %v1860, %v2148
  %v2150 = vpop.f32.mrb[0].mxu0
  %v2151 = vpop.f32.mrb[0].mxu0
  %v2152 = vadd.f32 %v1863, %v2151
  %v2153 = vpop.f32.mrb[0].mxu0
  %2154 = vmatprep.mubr.bf16.mxu0 0
  %2155 = vmatmul.mubr.bf16.gmra.mrb[0].mxu0 %v1354
  %v2156 = vpop.f32.mrb[0].mxu0
  %v2157 = vadd.f32 %v1868, %v2156
  %v2158 = vpop.f32.mrb[0].mxu0
  %v2159 = vpop.f32.mrb[0].mxu0
  %v2160 = vadd.f32 %v1871, %v2159
  %v2161 = vpop.f32.mrb[0].mxu0
  %2162 = vmatprep.mubr.bf16.mxu0 0
  %2163 = vmatmul.mubr.bf16.gmra.mrb[0].mxu0 %v1357
  %v2164 = vpop.f32.mrb[0].mxu0
  %v2165 = vadd.f32 %v1876, %v2164
  %v2166 = vpop.f32.mrb[0].mxu0
  %v2167 = vpop.f32.mrb[0].mxu0
  %v2168 = vadd.f32 %v1879, %v2167
  %v2169 = vpop.f32.mrb[0].mxu0
  %2170 = vmatprep.mubr.bf16.mxu0 0
  %2171 = vmatmul.mubr.bf16.gmra.mrb[0].mxu0 %v1360
  %v2172 = vpop.f32.mrb[0].mxu0
  %v2173 = vadd.f32 %v1884, %v2172
  %v2174 = vpop.f32.mrb[0].mxu0
  %v2175 = vpop.f32.mrb[0].mxu0
  %v2176 = vadd.f32 %v1887, %v2175
  %v2177 = vpop.f32.mrb[0].mxu0
  %2178 = vmatprep.mubr.bf16.mxu0 0
  %2179 = vmatmul.mubr.bf16.gmra.mrb[0].mxu0 %v1363
  %v2180 = vpop.f32.mrb[0].mxu0
  %v2181 = vadd.f32 %v1892, %v2180
  %v2182 = vpop.f32.mrb[0].mxu0
  %v2183 = vpop.f32.mrb[0].mxu0
  %v2184 = vadd.f32 %v1895, %v2183
  %v2185 = vpop.f32.mrb[0].mxu0
  %2186 = vmatprep.mubr.bf16.mxu0 0
  %2187 = vmatmul.mubr.bf16.gmra.mrb[0].mxu0 %v1366
  %v2188 = vpop.f32.mrb[0].mxu0
  %v2189 = vadd.f32 %v1900, %v2188
  %v2190 = vpop.f32.mrb[0].mxu0
  %v2191 = vpop.f32.mrb[0].mxu0
  %v2192 = vadd.f32 %v1903, %v2191
  %v2193 = vpop.f32.mrb[0].mxu0
  %2194 = vmatprep.mubr.bf16.mxu0 0
  %2195 = vmatmul.mubr.bf16.gmra.mrb[0].mxu0 %v1369
  %v2196 = vpop.f32.mrb[0].mxu0
  %v2197 = vadd.f32 %v1908, %v2196
  %v2198 = vpop.f32.mrb[0].mxu0
  %v2199 = vpop.f32.mrb[0].mxu0
  %v2200 = vadd.f32 %v1911, %v2199
  %v2201 = vpop.f32.mrb[0].mxu0
  %2202 = vmatprep.mubr.bf16.mxu0 0
  %2203 = vmatmul.mubr.bf16.gmra.mrb[0].mxu0 %v1372
  %v2204 = vpop.f32.mrb[0].mxu0
  %v2205 = vadd.f32 %v1916, %v2204
  %v2206 = vpop.f32.mrb[0].mxu0
  %v2207 = vpop.f32.mrb[0].mxu0
  %v2208 = vadd.f32 %v1919, %v2207
  %v2209 = vpop.f32.mrb[0].mxu0
  %2210 = vmatprep.mubr.bf16.mxu0 0
  %2211 = vmatmul.mubr.bf16.gmra.mrb[0].mxu0 %v1375
  %v2212 = vpop.f32.mrb[0].mxu0
  %v2213 = vadd.f32 %v1924, %v2212
  %v2214 = vpop.f32.mrb[0].mxu0
  %v2215 = vpop.f32.mrb[0].mxu0
  %v2216 = vadd.f32 %v1927, %v2215
  %v2217 = vpop.f32.mrb[0].mxu0
  %2218 = vmatprep.mubr.bf16.mxu0 0
  %2219 = vmatmul.mubr.bf16.gmra.mrb[0].mxu0 %v1378
  %v2220 = vpop.f32.mrb[0].mxu0
  %v2221 = vadd.f32 %v1932, %v2220
  %v2222 = vpop.f32.mrb[0].mxu0
  %v2223 = vpop.f32.mrb[0].mxu0
  %v2224 = vadd.f32 %v1935, %v2223
  %v2225 = vpop.f32.mrb[0].mxu0
  %2226 = vmatprep.mubr.bf16.mxu0 0
  %2227 = vmatmul.mubr.bf16.gmra.mrb[0].mxu0 %v1381
  %v2228 = vpop.f32.mrb[0].mxu0
  %v2229 = vadd.f32 %v1940, %v2228
  %v2230 = vpop.f32.mrb[0].mxu0
  %v2231 = vpop.f32.mrb[0].mxu0
  %v2232 = vadd.f32 %v1943, %v2231
  %v2233 = vpop.f32.mrb[0].mxu0
  %2234 = vmatprep.mubr.bf16.mxu0 0
  %2235 = vmatmul.mubr.bf16.gmra.mrb[0].mxu0 %v1384
  %v2236 = vpop.f32.mrb[0].mxu0
  %v2237 = vadd.f32 %v1948, %v2236
  %v2238 = vpop.f32.mrb[0].mxu0
  %v2239 = vpop.f32.mrb[0].mxu0
  %v2240 = vadd.f32 %v1951, %v2239
  %v2241 = vpop.f32.mrb[0].mxu0
  %2242 = vmatprep.mubr.bf16.mxu0 0
  %2243 = vmatmul.mubr.bf16.gmra.mrb[0].mxu0 %v1387
  %v2244 = vpop.f32.mrb[0].mxu0
  %v2245 = vadd.f32 %v1956, %v2244
  %v2246 = vpop.f32.mrb[0].mxu0
  %v2247 = vpop.f32.mrb[0].mxu0
  %v2248 = vadd.f32 %v1959, %v2247
  %v2249 = vpop.f32.mrb[0].mxu0
  %2250 = vmatprep.mubr.bf16.mxu0 0
  %2251 = vmatmul.mubr.bf16.gmra.mrb[0].mxu0 %v1390
  %v2252 = vpop.f32.mrb[0].mxu0
  %v2253 = vadd.f32 %v1964, %v2252
  %v2254 = vpop.f32.mrb[0].mxu0
  %v2255 = vpop.f32.mrb[0].mxu0
  %v2256 = vadd.f32 %v1967, %v2255
  %v2257 = vpop.f32.mrb[0].mxu0
  %2258 = vdwg.mxu0
  %2259 = vst [vmem:[%s2] sm:$0xff] %v2005
  %2260 = vst [vmem:[%s2 + $0x8] sm:$0xff] %v2008
  %2261 = vst [vmem:[%s2 + $0x10] sm:$0xff] %v2013
  %2262 = vst [vmem:[%s2 + $0x18] sm:$0xff] %v2016
  %2263 = vst [vmem:[%s2 + $0x20] sm:$0xff] %v2021
  %2264 = vst [vmem:[%s2 + $0x28] sm:$0xff] %v2024
  %2265 = vst [vmem:[%s2 + $0x30] sm:$0xff] %v2029
  %2266 = vst [vmem:[%s2 + $0x38] sm:$0xff] %v2032
  %2267 = vst [vmem:[%s2 + $0x40] sm:$0xff] %v2037
  %2268 = vst [vmem:[%s2 + $0x48] sm:$0xff] %v2040
  %2269 = vst [vmem:[%s2 + $0x50] sm:$0xff] %v2045
  %2270 = vst [vmem:[%s2 + $0x58] sm:$0xff] %v2048
  %2271 = vst [vmem:[%s2 + $0x60] sm:$0xff] %v2053
  %2272 = vst [vmem:[%s2 + $0x68] sm:$0xff] %v2056
  %2273 = vst [vmem:[%s2 + $0x70] sm:$0xff] %v2061
  %2274 = vst [vmem:[%s2 + $0x78] sm:$0xff] %v2064
  %2275 = vst [vmem:[%s2 + $0x80] sm:$0xff] %v2069
  %2276 = vst [vmem:[%s2 + $0x88] sm:$0xff] %v2072
  %2277 = vst [vmem:[%s2 + $0x90] sm:$0xff] %v2077
  %2278 = vst [vmem:[%s2 + $0x98] sm:$0xff] %v2080
  %2279 = vst [vmem:[%s2 + $0xa0] sm:$0xff] %v2085
  %2280 = vst [vmem:[%s2 + $0xa8] sm:$0xff] %v2088
  %2281 = vst [vmem:[%s2 + $0xb0] sm:$0xff] %v2093
  %2282 = vst [vmem:[%s2 + $0xb8] sm:$0xff] %v2096
  %2283 = vst [vmem:[%s2 + $0xc0] sm:$0xff] %v2101
  %2284 = vst [vmem:[%s2 + $0xc8] sm:$0xff] %v2104
  %2285 = vst [vmem:[%s2 + $0xd0] sm:$0xff] %v2109
  %2286 = vst [vmem:[%s2 + $0xd8] sm:$0xff] %v2112
  %2287 = vst [vmem:[%s2 + $0xe0] sm:$0xff] %v2117
  %2288 = vst [vmem:[%s2 + $0xe8] sm:$0xff] %v2120
  %2289 = vst [vmem:[%s2 + $0xf0] sm:$0xff] %v2125
  %2290 = vst [vmem:[%s2 + $0xf8] sm:$0xff] %v2128
  %2291 = vst [vmem:[%s2 + $0x100] sm:$0xff] %v2133
  %2292 = vst [vmem:[%s2 + $0x108] sm:$0xff] %v2136
  %2293 = vst [vmem:[%s2 + $0x110] sm:$0xff] %v2141
  %2294 = vst [vmem:[%s2 + $0x118] sm:$0xff] %v2144
  %2295 = vst [vmem:[%s2 + $0x120] sm:$0xff] %v2149
  %2296 = vst [vmem:[%s2 + $0x128] sm:$0xff] %v2152
  %2297 = vst [vmem:[%s2 + $0x130] sm:$0xff] %v2157
  %2298 = vst [vmem:[%s2 + $0x138] sm:$0xff] %v2160
  %2299 = vst [vmem:[%s2 + $0x140] sm:$0xff] %v2165
  %2300 = vst [vmem:[%s2 + $0x148] sm:$0xff] %v2168
  %2301 = vst [vmem:[%s2 + $0x150] sm:$0xff] %v2173
  %2302 = vst [vmem:[%s2 + $0x158] sm:$0xff] %v2176
  %2303 = vst [vmem:[%s2 + $0x160] sm:$0xff] %v2181
  %2304 = vst [vmem:[%s2 + $0x168] sm:$0xff] %v2184
  %2305 = vst [vmem:[%s2 + $0x170] sm:$0xff] %v2189
  %2306 = vst [vmem:[%s2 + $0x178] sm:$0xff] %v2192
  %2307 = vst [vmem:[%s2 + $0x180] sm:$0xff] %v2197
  %2308 = vst [vmem:[%s2 + $0x188] sm:$0xff] %v2200
  %2309 = vst [vmem:[%s2 + $0x190] sm:$0xff] %v2205
  %2310 = vst [vmem:[%s2 + $0x198] sm:$0xff] %v2208
  %2311 = vst [vmem:[%s2 + $0x1a0] sm:$0xff] %v2213
  %2312 = vst [vmem:[%s2 + $0x1a8] sm:$0xff] %v2216
  %2313 = vst [vmem:[%s2 + $0x1b0] sm:$0xff] %v2221
  %2314 = vst [vmem:[%s2 + $0x1b8] sm:$0xff] %v2224
  %2315 = vst [vmem:[%s2 + $0x1c0] sm:$0xff] %v2229
  %2316 = vst [vmem:[%s2 + $0x1c8] sm:$0xff] %v2232
  %2317 = vst [vmem:[%s2 + $0x1d0] sm:$0xff] %v2237
  %2318 = vst [vmem:[%s2 + $0x1d8] sm:$0xff] %v2240
  %2319 = vst [vmem:[%s2 + $0x1e0] sm:$0xff] %v2245
  %2320 = vst [vmem:[%s2 + $0x1e8] sm:$0xff] %v2248
  %2321 = vst [vmem:[%s2 + $0x1f0] sm:$0xff] %v2253
  %2322 = vst [vmem:[%s2 + $0x1f8] sm:$0xff] %v2256
  %p2323 = scmp.eq.s32.totalorder 0, 0
  // Predicated region
  $region10: #{inception_b_forward.13} parent=0 // pred_check
    %p2324 = pneg %p2323
  $region11: #{inception_b_forward.13} parent=0 // pred_check_branch
    %2326 = sbr.rel (%p2324) target = $region13
  $region12: #{inception_b_forward.13} parent=0 // pred_region
    %2327 = vst [vmem:[%s3] sm:$0x1] 0.0
    %2328 = vst [vmem:[%s4] sm:$0x1] 0.0
  $region13: #{inception_b_forward.13} parent=0 // pred_fallthru
    _
  %v2329 = vld [vmem:[%s3] sm:$0x1]
  %v2330 = vadd.f32 %v2005, %v2008
  %v2331 = vadd.f32 %v2330, %v2013
  %v2332 = vadd.f32 %v2331, %v2016
  %v2333 = vadd.f32 %v2332, %v2021
  %v2334 = vadd.f32 %v2333, %v2024
  %v2335 = vadd.f32 %v2334, %v2029
  %v2336 = vadd.f32 %v2335, %v2032
  %v2337 = vadd.f32 %v2336, %v2037
  %v2338 = vadd.f32 %v2337, %v2040
  %v2339 = vadd.f32 %v2338, %v2045
  %v2340 = vadd.f32 %v2339, %v2048
  %v2341 = vadd.f32 %v2340, %v2053
  %v2342 = vadd.f32 %v2341, %v2056
  %v2343 = vadd.f32 %v2342, %v2061
  %v2344 = vadd.f32 %v2343, %v2064
  %v2345 = vadd.f32 %v2344, %v2069
  %v2346 = vadd.f32 %v2345, %v2072
  %v2347 = vadd.f32 %v2346, %v2077
  %v2348 = vadd.f32 %v2347, %v2080
  %v2349 = vadd.f32 %v2348, %v2085
  %v2350 = vadd.f32 %v2349, %v2088
  %v2351 = vadd.f32 %v2350, %v2093
  %v2352 = vadd.f32 %v2351, %v2096
  %v2353 = vadd.f32 %v2352, %v2101
  %v2354 = vadd.f32 %v2353, %v2104
  %v2355 = vadd.f32 %v2354, %v2109
  %v2356 = vadd.f32 %v2355, %v2112
  %v2357 = vadd.f32 %v2356, %v2117
  %v2358 = vadd.f32 %v2357, %v2120
  %v2359 = vadd.f32 %v2358, %v2125
  %v2360 = vadd.f32 %v2359, %v2128
  %v2361 = vadd.f32 %v2360, %v2133
  %v2362 = vadd.f32 %v2361, %v2136
  %v2363 = vadd.f32 %v2362, %v2141
  %v2364 = vadd.f32 %v2363, %v2144
  %v2365 = vadd.f32 %v2364, %v2149
  %v2366 = vadd.f32 %v2365, %v2152
  %v2367 = vadd.f32 %v2366, %v2157
  %v2368 = vadd.f32 %v2367, %v2160
  %v2369 = vadd.f32 %v2368, %v2165
  %v2370 = vadd.f32 %v2369, %v2168
  %v2371 = vadd.f32 %v2370, %v2173
  %v2372 = vadd.f32 %v2371, %v2176
  %v2373 = vadd.f32 %v2372, %v2181
  %v2374 = vadd.f32 %v2373, %v2184
  %v2375 = vadd.f32 %v2374, %v2189
  %v2376 = vadd.f32 %v2375, %v2192
  %v2377 = vadd.f32 %v2376, %v2197
  %v2378 = vadd.f32 %v2377, %v2200
  %v2379 = vadd.f32 %v2378, %v2205
  %v2380 = vadd.f32 %v2379, %v2208
  %v2381 = vadd.f32 %v2380, %v2213
  %v2382 = vadd.f32 %v2381, %v2216
  %v2383 = vadd.f32 %v2382, %v2221
  %v2384 = vadd.f32 %v2383, %v2224
  %v2385 = vadd.f32 %v2384, %v2229
  %v2386 = vadd.f32 %v2385, %v2232
  %v2387 = vadd.f32 %v2386, %v2237
  %v2388 = vadd.f32 %v2387, %v2240
  %v2389 = vadd.f32 %v2388, %v2245
  %v2390 = vadd.f32 %v2389, %v2248
  %v2391 = vadd.f32 %v2390, %v2253
  %v2392 = vadd.f32 %v2391, %v2256
  %v2393 = vrot.slane %v2392, 4
  %v2394 = vadd.f32 %v2392, %v2393
  %v2395 = vrot.slane %v2394, 2
  %v2396 = vadd.f32 %v2394, %v2395
  %v2397 = vrot.slane %v2396, 1
  %v2398 = vadd.f32 %v2396, %v2397
  %v2399 = vadd.f32 %v2329, %v2398
  %2400 = vst [vmem:[%s3] sm:$0x1] %v2399
  %v2401 = vld [vmem:[%s4] sm:$0x1]
  %v2402 = vmul.f32 %v2005, %v2005
  %v2403 = vmul.f32 %v2008, %v2008
  %v2404 = vmul.f32 %v2013, %v2013
  %v2405 = vmul.f32 %v2016, %v2016
  %v2406 = vmul.f32 %v2021, %v2021
  %v2407 = vmul.f32 %v2024, %v2024
  %v2408 = vmul.f32 %v2029, %v2029
  %v2409 = vmul.f32 %v2032, %v2032
  %v2410 = vmul.f32 %v2037, %v2037
  %v2411 = vmul.f32 %v2040, %v2040
  %v2412 = vmul.f32 %v2045, %v2045
  %v2413 = vmul.f32 %v2048, %v2048
  %v2414 = vmul.f32 %v2053, %v2053
  %v2415 = vmul.f32 %v2056, %v2056
  %v2416 = vmul.f32 %v2061, %v2061
  %v2417 = vmul.f32 %v2064, %v2064
  %v2418 = vmul.f32 %v2069, %v2069
  %v2419 = vmul.f32 %v2072, %v2072
  %v2420 = vmul.f32 %v2077, %v2077
  %v2421 = vmul.f32 %v2080, %v2080
  %v2422 = vmul.f32 %v2085, %v2085
  %v2423 = vmul.f32 %v2088, %v2088
  %v2424 = vmul.f32 %v2093, %v2093
  %v2425 = vmul.f32 %v2096, %v2096
  %v2426 = vmul.f32 %v2101, %v2101
  %v2427 = vmul.f32 %v2104, %v2104
  %v2428 = vmul.f32 %v2109, %v2109
  %v2429 = vmul.f32 %v2112, %v2112
  %v2430 = vmul.f32 %v2117, %v2117
  %v2431 = vmul.f32 %v2120, %v2120
  %v2432 = vmul.f32 %v2125, %v2125
  %v2433 = vmul.f32 %v2128, %v2128
  %v2434 = vmul.f32 %v2133, %v2133
  %v2435 = vmul.f32 %v2136, %v2136
  %v2436 = vmul.f32 %v2141, %v2141
  %v2437 = vmul.f32 %v2144, %v2144
  %v2438 = vmul.f32 %v2149, %v2149
  %v2439 = vmul.f32 %v2152, %v2152
  %v2440 = vmul.f32 %v2157, %v2157
  %v2441 = vmul.f32 %v2160, %v2160
  %v2442 = vmul.f32 %v2165, %v2165
  %v2443 = vmul.f32 %v2168, %v2168
  %v2444 = vmul.f32 %v2173, %v2173
  %v2445 = vmul.f32 %v2176, %v2176
  %v2446 = vmul.f32 %v2181, %v2181
  %v2447 = vmul.f32 %v2184, %v2184
  %v2448 = vmul.f32 %v2189, %v2189
  %v2449 = vmul.f32 %v2192, %v2192
  %v2450 = vmul.f32 %v2197, %v2197
  %v2451 = vmul.f32 %v2200, %v2200
  %v2452 = vmul.f32 %v2205, %v2205
  %v2453 = vmul.f32 %v2208, %v2208
  %v2454 = vmul.f32 %v2213, %v2213
  %v2455 = vmul.f32 %v2216, %v2216
  %v2456 = vmul.f32 %v2221, %v2221
  %v2457 = vmul.f32 %v2224, %v2224
  %v2458 = vmul.f32 %v2229, %v2229
  %v2459 = vmul.f32 %v2232, %v2232
  %v2460 = vmul.f32 %v2237, %v2237
  %v2461 = vmul.f32 %v2240, %v2240
  %v2462 = vmul.f32 %v2245, %v2245
  %v2463 = vmul.f32 %v2248, %v2248
  %v2464 = vmul.f32 %v2253, %v2253
  %v2465 = vmul.f32 %v2256, %v2256
  %v2466 = vadd.f32 %v2402, %v2403
  %v2467 = vadd.f32 %v2466, %v2404
  %v2468 = vadd.f32 %v2467, %v2405
  %v2469 = vadd.f32 %v2468, %v2406
  %v2470 = vadd.f32 %v2469, %v2407
  %v2471 = vadd.f32 %v2470, %v2408
  %v2472 = vadd.f32 %v2471, %v2409
  %v2473 = vadd.f32 %v2472, %v2410
  %v2474 = vadd.f32 %v2473, %v2411
  %v2475 = vadd.f32 %v2474, %v2412
  %v2476 = vadd.f32 %v2475, %v2413
  %v2477 = vadd.f32 %v2476, %v2414
  %v2478 = vadd.f32 %v2477, %v2415
  %v2479 = vadd.f32 %v2478, %v2416
  %v2480 = vadd.f32 %v2479, %v2417
  %v2481 = vadd.f32 %v2480, %v2418
  %v2482 = vadd.f32 %v2481, %v2419
  %v2483 = vadd.f32 %v2482, %v2420
  %v2484 = vadd.f32 %v2483, %v2421
  %v2485 = vadd.f32 %v2484, %v2422
  %v2486 = vadd.f32 %v2485, %v2423
  %v2487 = vadd.f32 %v2486, %v2424
  %v2488 = vadd.f32 %v2487, %v2425
  %v2489 = vadd.f32 %v2488, %v2426
  %v2490 = vadd.f32 %v2489, %v2427
  %v2491 = vadd.f32 %v2490, %v2428
  %v2492 = vadd.f32 %v2491, %v2429
  %v2493 = vadd.f32 %v2492, %v2430
  %v2494 = vadd.f32 %v2493, %v2431
  %v2495 = vadd.f32 %v2494, %v2432
  %v2496 = vadd.f32 %v2495, %v2433
  %v2497 = vadd.f32 %v2496, %v2434
  %v2498 = vadd.f32 %v2497, %v2435
  %v2499 = vadd.f32 %v2498, %v2436
  %v2500 = vadd.f32 %v2499, %v2437
  %v2501 = vadd.f32 %v2500, %v2438
  %v2502 = vadd.f32 %v2501, %v2439
  %v2503 = vadd.f32 %v2502, %v2440
  %v2504 = vadd.f32 %v2503, %v2441
  %v2505 = vadd.f32 %v2504, %v2442
  %v2506 = vadd.f32 %v2505, %v2443
  %v2507 = vadd.f32 %v2506, %v2444
  %v2508 = vadd.f32 %v2507, %v2445
  %v2509 = vadd.f32 %v2508, %v2446
  %v2510 = vadd.f32 %v2509, %v2447
  %v2511 = vadd.f32 %v2510, %v2448
  %v2512 = vadd.f32 %v2511, %v2449
  %v2513 = vadd.f32 %v2512, %v2450
  %v2514 = vadd.f32 %v2513, %v2451
  %v2515 = vadd.f32 %v2514, %v2452
  %v2516 = vadd.f32 %v2515, %v2453
  %v2517 = vadd.f32 %v2516, %v2454
  %v2518 = vadd.f32 %v2517, %v2455
  %v2519 = vadd.f32 %v2518, %v2456
  %v2520 = vadd.f32 %v2519, %v2457
  %v2521 = vadd.f32 %v2520, %v2458
  %v2522 = vadd.f32 %v2521, %v2459
  %v2523 = vadd.f32 %v2522, %v2460
  %v2524 = vadd.f32 %v2523, %v2461
  %v2525 = vadd.f32 %v2524, %v2462
  %v2526 = vadd.f32 %v2525, %v2463
  %v2527 = vadd.f32 %v2526, %v2464
  %v2528 = vadd.f32 %v2527, %v2465
  %v2529 = vrot.slane %v2528, 4
  %v2530 = vadd.f32 %v2528, %v2529
  %v2531 = vrot.slane %v2530, 2
  %v2532 = vadd.f32 %v2530, %v2531
  %v2533 = vrot.slane %v2532, 1
  %v2534 = vadd.f32 %v2532, %v2533
  %v2535 = vadd.f32 %v2401, %v2534
  %2536 = vst [vmem:[%s4] sm:$0x1] %v2535
  // Predicated region
  $region14: #{inception_b_forward.13} parent=0 // pred_check
    _
  $region15: #{inception_b_forward.13} parent=0 // pred_check_branch
    %2538 = sbr.rel (0) target = $region17
  $region16: #{inception_b_forward.13} parent=0 // pred_region
    _
  $region17: #{inception_b_forward.13} parent=0 // pred_fallthru
    _
  // Predicated region
  $region18: #{inception_b_forward.13} parent=0 // pred_check
    _
  $region19: #{inception_b_forward.13} parent=0 // pred_check_branch
    %2540 = sbr.rel (0) target = $region21
  $region20: #{inception_b_forward.13} parent=0 // pred_region
    _
  $region21: #{inception_b_forward.13} parent=0 // pred_fallthru
    _
  // Predicated region
  $region22: #{inception_b_forward.13} parent=0 // pred_check
    _
  $region23: #{inception_b_forward.13} parent=0 // pred_check_branch
    %2542 = sbr.rel (0) target = $region25
  $region24: #{inception_b_forward.13} parent=0 // pred_region
    _
  $region25: #{inception_b_forward.13} parent=0 // pred_fallthru
    _
  // Predicated region
  $region26: #{inception_b_forward.13} parent=0 // pred_check
    _
  $region27: #{inception_b_forward.13} parent=0 // pred_check_branch
    %2544 = sbr.rel (0) target = $region29
  $region28: #{inception_b_forward.13} parent=0 // pred_region
    _
  $region29: #{inception_b_forward.13} parent=0 // pred_fallthru
    _
  // Predicated region
  $region30: #{inception_b_forward.13} parent=0 // pred_check
    _
  $region31: #{inception_b_forward.13} parent=0 // pred_check_branch
    %2546 = sbr.rel (0) target = $region33
  $region32: #{inception_b_forward.13} parent=0 // pred_region
    _
  $region33: #{inception_b_forward.13} parent=0 // pred_fallthru
    _
  // Predicated region
  $region34: #{inception_b_forward.13} parent=0 // pred_check
    _
  $region35: #{inception_b_forward.13} parent=0 // pred_check_branch
    %2548 = sbr.rel (0) target = $region37
  $region36: #{inception_b_forward.13} parent=0 // pred_region
    _
  $region37: #{inception_b_forward.13} parent=0 // pred_fallthru
    _

// kernel: inception_b_forward.16
$region0: #{inception_b_forward.16}
  #allocation0 [shape = 'u32[]', space=smem, size = 0x4, offset = 0x4, fixed_abs, tag = 'smem constant byte address 0x4 - core index']
  #allocation1 [shape = 'u32[144,128]{1,0:T(1,128)}', space=vmem, size = 0x12000, scoped, tag = 'internal scratch']
  %s0 = inlined_call_operand.vmem [shape: f32[128,128], index: 0, kind: input, shape index: {}]
  %s1 = inlined_call_operand.vmem [shape: f32[1,128], index: 1, kind: input, shape index: {}]
  %s2 = inlined_call_operand.vmem [shape: f32[1,128], index: 2, kind: input, shape index: {}]
  %s3 = inlined_call_operand.vmem [shape: f32[128,128], index: 3, kind: output, shape index: {}]
  %s4 = sld [smem:[#allocation0]]
  $region22: #{inception_b_forward.16} parent=0
    _
  %s6 = ssub.s32 1, %s4
  %s7 = scalar_select 0, %s6, %s4
  // Predicated region
  $region2: #{inception_b_forward.16} parent=0 // pred_check
    _
  $region3: #{inception_b_forward.16} parent=0 // pred_check_branch
    %9 = sbr.rel (0) target = $region5
  $region4: #{inception_b_forward.16} parent=0 // pred_region
    _
  $region5: #{inception_b_forward.16} parent=0 // pred_fallthru
    _
  // Predicated region
  $region6: #{inception_b_forward.16} parent=0 // pred_check
    _
  $region7: #{inception_b_forward.16} parent=0 // pred_check_branch
    %11 = sbr.rel (0) target = $region9
  $region8: #{inception_b_forward.16} parent=0 // pred_region
    _
  $region9: #{inception_b_forward.16} parent=0 // pred_fallthru
    _
  // Predicated region
  $region10: #{inception_b_forward.16} parent=0 // pred_check
    _
  $region11: #{inception_b_forward.16} parent=0 // pred_check_branch
    %13 = sbr.rel (0) target = $region13
  $region12: #{inception_b_forward.16} parent=0 // pred_region
    _
  $region13: #{inception_b_forward.16} parent=0 // pred_fallthru
    _
  %v14 = vld [vmem:[%s0] sm:$0xff]
  %v15 = vld [vmem:[%s0 + $0x8] sm:$0xff]
  %v16 = vld [vmem:[%s0 + $0x10] sm:$0xff]
  %v17 = vld [vmem:[%s0 + $0x18] sm:$0xff]
  %v18 = vld [vmem:[%s0 + $0x20] sm:$0xff]
  %v19 = vld [vmem:[%s0 + $0x28] sm:$0xff]
  %v20 = vld [vmem:[%s0 + $0x30] sm:$0xff]
  %v21 = vld [vmem:[%s0 + $0x38] sm:$0xff]
  %v22 = vld [vmem:[%s0 + $0x40] sm:$0xff]
  %v23 = vld [vmem:[%s0 + $0x48] sm:$0xff]
  %v24 = vld [vmem:[%s0 + $0x50] sm:$0xff]
  %v25 = vld [vmem:[%s0 + $0x58] sm:$0xff]
  %v26 = vld [vmem:[%s0 + $0x60] sm:$0xff]
  %v27 = vld [vmem:[%s0 + $0x68] sm:$0xff]
  %v28 = vld [vmem:[%s0 + $0x70] sm:$0xff]
  %v29 = vld [vmem:[%s0 + $0x78] sm:$0xff]
  %v30 = vld [vmem:[%s1] sm:$0x1]
  %v32 = vlaneseq
  %v33 = vshrl.u32 %v32, 7
  %v34 = vsub.s32 0, %v33
  %v35 = vrot.slane %v30, %v34
  %v37 = vmul.f32 %v14, %v35
  %v38 = vmul.f32 %v15, %v35
  %v39 = vmul.f32 %v16, %v35
  %v40 = vmul.f32 %v17, %v35
  %v41 = vmul.f32 %v18, %v35
  %v42 = vmul.f32 %v19, %v35
  %v43 = vmul.f32 %v20, %v35
  %v44 = vmul.f32 %v21, %v35
  %v45 = vmul.f32 %v22, %v35
  %v46 = vmul.f32 %v23, %v35
  %v47 = vmul.f32 %v24, %v35
  %v48 = vmul.f32 %v25, %v35
  %v49 = vmul.f32 %v26, %v35
  %v50 = vmul.f32 %v27, %v35
  %v51 = vmul.f32 %v28, %v35
  %v52 = vmul.f32 %v29, %v35
  %v53 = vld [vmem:[%s2] sm:$0x1]
  %v55 = vlaneseq
  %v56 = vshrl.u32 %v55, 7
  %v57 = vsub.s32 0, %v56
  %v58 = vrot.slane %v53, %v57
  %v60 = vadd.f32 %v37, %v58
  %v61 = vadd.f32 %v38, %v58
  %v62 = vadd.f32 %v39, %v58
  %v63 = vadd.f32 %v40, %v58
  %v64 = vadd.f32 %v41, %v58
  %v65 = vadd.f32 %v42, %v58
  %v66 = vadd.f32 %v43, %v58
  %v67 = vadd.f32 %v44, %v58
  %v68 = vadd.f32 %v45, %v58
  %v69 = vadd.f32 %v46, %v58
  %v70 = vadd.f32 %v47, %v58
  %v71 = vadd.f32 %v48, %v58
  %v72 = vadd.f32 %v49, %v58
  %v73 = vadd.f32 %v50, %v58
  %v74 = vadd.f32 %v51, %v58
  %v75 = vadd.f32 %v52, %v58
  %v76 = vmax.f32 %v60, 0.0
  %v77 = vmax.f32 %v61, 0.0
  %v78 = vmax.f32 %v62, 0.0
  %v79 = vmax.f32 %v63, 0.0
  %v80 = vmax.f32 %v64, 0.0
  %v81 = vmax.f32 %v65, 0.0
  %v82 = vmax.f32 %v66, 0.0
  %v83 = vmax.f32 %v67, 0.0
  %v84 = vmax.f32 %v68, 0.0
  %v85 = vmax.f32 %v69, 0.0
  %v86 = vmax.f32 %v70, 0.0
  %v87 = vmax.f32 %v71, 0.0
  %v88 = vmax.f32 %v72, 0.0
  %v89 = vmax.f32 %v73, 0.0
  %v90 = vmax.f32 %v74, 0.0
  %v91 = vmax.f32 %v75, 0.0
  %92 = vst [vmem:[%s3] sm:$0xff] %v76
  %93 = vst [vmem:[%s3 + $0x8] sm:$0xff] %v77
  %94 = vst [vmem:[%s3 + $0x10] sm:$0xff] %v78
  %95 = vst [vmem:[%s3 + $0x18] sm:$0xff] %v79
  %96 = vst [vmem:[%s3 + $0x20] sm:$0xff] %v80
  %97 = vst [vmem:[%s3 + $0x28] sm:$0xff] %v81
  %98 = vst [vmem:[%s3 + $0x30] sm:$0xff] %v82
  %99 = vst [vmem:[%s3 + $0x38] sm:$0xff] %v83
  %100 = vst [vmem:[%s3 + $0x40] sm:$0xff] %v84
  %101 = vst [vmem:[%s3 + $0x48] sm:$0xff] %v85
  %102 = vst [vmem:[%s3 + $0x50] sm:$0xff] %v86
  %103 = vst [vmem:[%s3 + $0x58] sm:$0xff] %v87
  %104 = vst [vmem:[%s3 + $0x60] sm:$0xff] %v88
  %105 = vst [vmem:[%s3 + $0x68] sm:$0xff] %v89
  %106 = vst [vmem:[%s3 + $0x70] sm:$0xff] %v90
  %107 = vst [vmem:[%s3 + $0x78] sm:$0xff] %v91
  // Predicated region
  $region14: #{inception_b_forward.16} parent=0 // pred_check
    _
  $region15: #{inception_b_forward.16} parent=0 // pred_check_branch
    %109 = sbr.rel (0) target = $region17
  $region16: #{inception_b_forward.16} parent=0 // pred_region
    _
  $region17: #{inception_b_forward.16} parent=0 // pred_fallthru
    _
  // Predicated region
  $region18: #{inception_b_forward.16} parent=0 // pred_check
    _
  $region19: #{inception_b_forward.16} parent=0 // pred_check_branch
    %111 = sbr.rel (0) target = $region21
  $region20: #{inception_b_forward.16} parent=0 // pred_region
    _
  $region21: #{inception_b_forward.16} parent=0 // pred_fallthru
    _

// kernel: inception_b_forward.15
$region0: #{inception_b_forward.15}
  #allocation0 [shape = 'u32[]', space=smem, size = 0x4, offset = 0x4, fixed_abs, tag = 'smem constant byte address 0x4 - core index']
  #allocation1 [shape = 'u32[144,128]{1,0:T(1,128)}', space=vmem, size = 0x12000, scoped, tag = 'internal scratch']
  %s0 = inlined_call_operand.vmem [shape: bf16[128,864], index: 0, kind: input, shape index: {}]
  %s1 = inlined_call_operand.vmem [shape: bf16[864,128], index: 1, kind: input, shape index: {}]
  %s2 = inlined_call_operand.vmem [shape: f32[128,128], index: 2, kind: output, shape index: {0}]
  %s3 = inlined_call_operand.vmem [shape: f32[1,128], index: 3, kind: output, shape index: {1}]
  %s4 = inlined_call_operand.vmem [shape: f32[1,128], index: 4, kind: output, shape index: {2}]
  %5 = xla_tuple %s2, %s3, %s4
  %s6 = sld [smem:[#allocation0]]
  $region38: #{inception_b_forward.15} parent=0
    _
  %s8 = ssub.s32 1, %s6
  %s9 = scalar_select 0, %s8, %s6
  // Predicated region
  $region2: #{inception_b_forward.15} parent=0 // pred_check
    _
  $region3: #{inception_b_forward.15} parent=0 // pred_check_branch
    %11 = sbr.rel (0) target = $region5
  $region4: #{inception_b_forward.15} parent=0 // pred_region
    _
  $region5: #{inception_b_forward.15} parent=0 // pred_fallthru
    _
  // Predicated region
  $region6: #{inception_b_forward.15} parent=0 // pred_check
    _
  $region7: #{inception_b_forward.15} parent=0 // pred_check_branch
    %13 = sbr.rel (0) target = $region9
  $region8: #{inception_b_forward.15} parent=0 // pred_region
    _
  $region9: #{inception_b_forward.15} parent=0 // pred_fallthru
    _
  %v15 = vld [vmem:[%s0] sm:$0xff]
  %v16 = vld [vmem:[%s0 + $0x8] sm:$0xff]
  %v17 = vld [vmem:[%s0 + $0x10] sm:$0xff]
  %v18 = vld [vmem:[%s0 + $0x18] sm:$0xf]
  %v19 = vld [vmem:[%s0 + $0x1c] sm:$0xff]
  %v20 = vld [vmem:[%s0 + $0x24] sm:$0xff]
  %v21 = vld [vmem:[%s0 + $0x2c] sm:$0xff]
  %v22 = vld [vmem:[%s0 + $0x34] sm:$0xf]
  %v23 = vld [vmem:[%s0 + $0x38] sm:$0xff]
  %v24 = vld [vmem:[%s0 + $0x40] sm:$0xff]
  %v25 = vld [vmem:[%s0 + $0x48] sm:$0xff]
  %v26 = vld [vmem:[%s0 + $0x50] sm:$0xf]
  %v27 = vld [vmem:[%s0 + $0x54] sm:$0xff]
  %v28 = vld [vmem:[%s0 + $0x5c] sm:$0xff]
  %v29 = vld [vmem:[%s0 + $0x64] sm:$0xff]
  %v30 = vld [vmem:[%s0 + $0x6c] sm:$0xf]
  %v31 = vld [vmem:[%s0 + $0x70] sm:$0xff]
  %v32 = vld [vmem:[%s0 + $0x78] sm:$0xff]
  %v33 = vld [vmem:[%s0 + $0x80] sm:$0xff]
  %v34 = vld [vmem:[%s0 + $0x88] sm:$0xf]
  %v35 = vld [vmem:[%s0 + $0x8c] sm:$0xff]
  %v36 = vld [vmem:[%s0 + $0x94] sm:$0xff]
  %v37 = vld [vmem:[%s0 + $0x9c] sm:$0xff]
  %v38 = vld [vmem:[%s0 + $0xa4] sm:$0xf]
  %v39 = vld [vmem:[%s0 + $0xa8] sm:$0xff]
  %v40 = vld [vmem:[%s0 + $0xb0] sm:$0xff]
  %v41 = vld [vmem:[%s0 + $0xb8] sm:$0xff]
  %v42 = vld [vmem:[%s0 + $0xc0] sm:$0xf]
  %v43 = vld [vmem:[%s0 + $0xc4] sm:$0xff]
  %v44 = vld [vmem:[%s0 + $0xcc] sm:$0xff]
  %v45 = vld [vmem:[%s0 + $0xd4] sm:$0xff]
  %v46 = vld [vmem:[%s0 + $0xdc] sm:$0xf]
  %v47 = vld [vmem:[%s0 + $0xe0] sm:$0xff]
  %v48 = vld [vmem:[%s0 + $0xe8] sm:$0xff]
  %v49 = vld [vmem:[%s0 + $0xf0] sm:$0xff]
  %v50 = vld [vmem:[%s0 + $0xf8] sm:$0xf]
  %v51 = vld [vmem:[%s0 + $0xfc] sm:$0xff]
  %v52 = vld [vmem:[%s0 + $0x104] sm:$0xff]
  %v53 = vld [vmem:[%s0 + $0x10c] sm:$0xff]
  %v54 = vld [vmem:[%s0 + $0x114] sm:$0xf]
  %v55 = vld [vmem:[%s0 + $0x118] sm:$0xff]
  %v56 = vld [vmem:[%s0 + $0x120] sm:$0xff]
  %v57 = vld [vmem:[%s0 + $0x128] sm:$0xff]
  %v58 = vld [vmem:[%s0 + $0x130] sm:$0xf]
  %v59 = vld [vmem:[%s0 + $0x134] sm:$0xff]
  %v60 = vld [vmem:[%s0 + $0x13c] sm:$0xff]
  %v61 = vld [vmem:[%s0 + $0x144] sm:$0xff]
  %v62 = vld [vmem:[%s0 + $0x14c] sm:$0xf]
  %v63 = vld [vmem:[%s0 + $0x150] sm:$0xff]
  %v64 = vld [vmem:[%s0 + $0x158] sm:$0xff]
  %v65 = vld [vmem:[%s0 + $0x160] sm:$0xff]
  %v66 = vld [vmem:[%s0 + $0x168] sm:$0xf]
  %v67 = vld [vmem:[%s0 + $0x16c] sm:$0xff]
  %v68 = vld [vmem:[%s0 + $0x174] sm:$0xff]
  %v69 = vld [vmem:[%s0 + $0x17c] sm:$0xff]
  %v70 = vld [vmem:[%s0 + $0x184] sm:$0xf]
  %v71 = vld [vmem:[%s0 + $0x188] sm:$0xff]
  %v72 = vld [vmem:[%s0 + $0x190] sm:$0xff]
  %v73 = vld [vmem:[%s0 + $0x198] sm:$0xff]
  %v74 = vld [vmem:[%s0 + $0x1a0] sm:$0xf]
  %v75 = vld [vmem:[%s0 + $0x1a4] sm:$0xff]
  %v76 = vld [vmem:[%s0 + $0x1ac] sm:$0xff]
  %v77 = vld [vmem:[%s0 + $0x1b4] sm:$0xff]
  %v78 = vld [vmem:[%s0 + $0x1bc] sm:$0xf]
  %v79 = vld [vmem:[%s1] sm:$0xf]
  %v80 = vld [vmem:[%s1 + $0x4] sm:$0xf]
  %v81 = vld [vmem:[%s1 + $0x8] sm:$0xf]
  %v82 = vld [vmem:[%s1 + $0xc] sm:$0xf]
  %v83 = vld [vmem:[%s1 + $0x10] sm:$0xf]
  %v84 = vld [vmem:[%s1 + $0x14] sm:$0xf]
  %v85 = vld [vmem:[%s1 + $0x18] sm:$0xf]
  %v86 = vld [vmem:[%s1 + $0x1c] sm:$0xf]
  %v87 = vld [vmem:[%s1 + $0x20] sm:$0xf]
  %v88 = vld [vmem:[%s1 + $0x24] sm:$0xf]
  %v89 = vld [vmem:[%s1 + $0x28] sm:$0xf]
  %v90 = vld [vmem:[%s1 + $0x2c] sm:$0xf]
  %v91 = vld [vmem:[%s1 + $0x30] sm:$0xf]
  %v92 = vld [vmem:[%s1 + $0x34] sm:$0xf]
  %v93 = vld [vmem:[%s1 + $0x38] sm:$0xf]
  %v94 = vld [vmem:[%s1 + $0x3c] sm:$0xf]
  %v95 = vld [vmem:[%s1 + $0x40] sm:$0xf]
  %v96 = vld [vmem:[%s1 + $0x44] sm:$0xf]
  %v97 = vld [vmem:[%s1 + $0x48] sm:$0xf]
  %v98 = vld [vmem:[%s1 + $0x4c] sm:$0xf]
  %v99 = vld [vmem:[%s1 + $0x50] sm:$0xf]
  %v100 = vld [vmem:[%s1 + $0x54] sm:$0xf]
  %v101 = vld [vmem:[%s1 + $0x58] sm:$0xf]
  %v102 = vld [vmem:[%s1 + $0x5c] sm:$0xf]
  %v103 = vld [vmem:[%s1 + $0x60] sm:$0xf]
  %v104 = vld [vmem:[%s1 + $0x64] sm:$0xf]
  %v105 = vld [vmem:[%s1 + $0x68] sm:$0xf]
  %v106 = vld [vmem:[%s1 + $0x6c] sm:$0xf]
  %v107 = vld [vmem:[%s1 + $0x70] sm:$0xf]
  %v108 = vld [vmem:[%s1 + $0x74] sm:$0xf]
  %v109 = vld [vmem:[%s1 + $0x78] sm:$0xf]
  %v110 = vld [vmem:[%s1 + $0x7c] sm:$0xf]
  %v111 = vld [vmem:[%s1 + $0x80] sm:$0xf]
  %v112 = vld [vmem:[%s1 + $0x84] sm:$0xf]
  %v113 = vld [vmem:[%s1 + $0x88] sm:$0xf]
  %v114 = vld [vmem:[%s1 + $0x8c] sm:$0xf]
  %v115 = vld [vmem:[%s1 + $0x90] sm:$0xf]
  %v116 = vld [vmem:[%s1 + $0x94] sm:$0xf]
  %v117 = vld [vmem:[%s1 + $0x98] sm:$0xf]
  %v118 = vld [vmem:[%s1 + $0x9c] sm:$0xf]
  %v119 = vld [vmem:[%s1 + $0xa0] sm:$0xf]
  %v120 = vld [vmem:[%s1 + $0xa4] sm:$0xf]
  %v121 = vld [vmem:[%s1 + $0xa8] sm:$0xf]
  %v122 = vld [vmem:[%s1 + $0xac] sm:$0xf]
  %v123 = vld [vmem:[%s1 + $0xb0] sm:$0xf]
  %v124 = vld [vmem:[%s1 + $0xb4] sm:$0xf]
  %v125 = vld [vmem:[%s1 + $0xb8] sm:$0xf]
  %v126 = vld [vmem:[%s1 + $0xbc] sm:$0xf]
  %v127 = vld [vmem:[%s1 + $0xc0] sm:$0xf]
  %v128 = vld [vmem:[%s1 + $0xc4] sm:$0xf]
  %v129 = vld [vmem:[%s1 + $0xc8] sm:$0xf]
  %v130 = vld [vmem:[%s1 + $0xcc] sm:$0xf]
  %v131 = vld [vmem:[%s1 + $0xd0] sm:$0xf]
  %v132 = vld [vmem:[%s1 + $0xd4] sm:$0xf]
  %v133 = vld [vmem:[%s1 + $0xd8] sm:$0xf]
  %v134 = vld [vmem:[%s1 + $0xdc] sm:$0xf]
  %v135 = vld [vmem:[%s1 + $0xe0] sm:$0xf]
  %v136 = vld [vmem:[%s1 + $0xe4] sm:$0xf]
  %v137 = vld [vmem:[%s1 + $0xe8] sm:$0xf]
  %v138 = vld [vmem:[%s1 + $0xec] sm:$0xf]
  %v139 = vld [vmem:[%s1 + $0xf0] sm:$0xf]
  %v140 = vld [vmem:[%s1 + $0xf4] sm:$0xf]
  %v141 = vld [vmem:[%s1 + $0xf8] sm:$0xf]
  %v142 = vld [vmem:[%s1 + $0xfc] sm:$0xf]
  %v143 = vld [vmem:[%s1 + $0x100] sm:$0xf]
  %v144 = vld [vmem:[%s1 + $0x104] sm:$0xf]
  %v145 = vld [vmem:[%s1 + $0x108] sm:$0xf]
  %v146 = vld [vmem:[%s1 + $0x10c] sm:$0xf]
  %v147 = vld [vmem:[%s1 + $0x110] sm:$0xf]
  %v148 = vld [vmem:[%s1 + $0x114] sm:$0xf]
  %v149 = vld [vmem:[%s1 + $0x118] sm:$0xf]
  %v150 = vld [vmem:[%s1 + $0x11c] sm:$0xf]
  %v151 = vld [vmem:[%s1 + $0x120] sm:$0xf]
  %v152 = vld [vmem:[%s1 + $0x124] sm:$0xf]
  %v153 = vld [vmem:[%s1 + $0x128] sm:$0xf]
  %v154 = vld [vmem:[%s1 + $0x12c] sm:$0xf]
  %v155 = vld [vmem:[%s1 + $0x130] sm:$0xf]
  %v156 = vld [vmem:[%s1 + $0x134] sm:$0xf]
  %v157 = vld [vmem:[%s1 + $0x138] sm:$0xf]
  %v158 = vld [vmem:[%s1 + $0x13c] sm:$0xf]
  %v159 = vld [vmem:[%s1 + $0x140] sm:$0xf]
  %v160 = vld [vmem:[%s1 + $0x144] sm:$0xf]
  %v161 = vld [vmem:[%s1 + $0x148] sm:$0xf]
  %v162 = vld [vmem:[%s1 + $0x14c] sm:$0xf]
  %v163 = vld [vmem:[%s1 + $0x150] sm:$0xf]
  %v164 = vld [vmem:[%s1 + $0x154] sm:$0xf]
  %v165 = vld [vmem:[%s1 + $0x158] sm:$0xf]
  %v166 = vld [vmem:[%s1 + $0x15c] sm:$0xf]
  %v167 = vld [vmem:[%s1 + $0x160] sm:$0xf]
  %v168 = vld [vmem:[%s1 + $0x164] sm:$0xf]
  %v169 = vld [vmem:[%s1 + $0x168] sm:$0xf]
  %v170 = vld [vmem:[%s1 + $0x16c] sm:$0xf]
  %v171 = vld [vmem:[%s1 + $0x170] sm:$0xf]
  %v172 = vld [vmem:[%s1 + $0x174] sm:$0xf]
  %v173 = vld [vmem:[%s1 + $0x178] sm:$0xf]
  %v174 = vld [vmem:[%s1 + $0x17c] sm:$0xf]
  %v175 = vld [vmem:[%s1 + $0x180] sm:$0xf]
  %v176 = vld [vmem:[%s1 + $0x184] sm:$0xf]
  %v177 = vld [vmem:[%s1 + $0x188] sm:$0xf]
  %v178 = vld [vmem:[%s1 + $0x18c] sm:$0xf]
  %v179 = vld [vmem:[%s1 + $0x190] sm:$0xf]
  %v180 = vld [vmem:[%s1 + $0x194] sm:$0xf]
  %v181 = vld [vmem:[%s1 + $0x198] sm:$0xf]
  %v182 = vld [vmem:[%s1 + $0x19c] sm:$0xf]
  %v183 = vld [vmem:[%s1 + $0x1a0] sm:$0xf]
  %v184 = vld [vmem:[%s1 + $0x1a4] sm:$0xf]
  %v185 = vld [vmem:[%s1 + $0x1a8] sm:$0xf]
  %v186 = vld [vmem:[%s1 + $0x1ac] sm:$0xf]
  %v251 = vunpack.c.l.b16 %v15
  %v252 = vunpack.c.h.b16 %v15
  %v253 = vunpack.c.l.b16 %v16
  %v254 = vunpack.c.h.b16 %v16
  %v255 = vunpack.c.l.b16 %v17
  %v256 = vunpack.c.h.b16 %v17
  %v257 = vunpack.c.l.b16 %v18
  %v258 = vunpack.c.l.b16 %v19
  %v259 = vunpack.c.h.b16 %v19
  %v260 = vunpack.c.l.b16 %v20
  %v261 = vunpack.c.h.b16 %v20
  %v262 = vunpack.c.l.b16 %v21
  %v263 = vunpack.c.h.b16 %v21
  %v264 = vunpack.c.l.b16 %v22
  %v265 = vunpack.c.l.b16 %v23
  %v266 = vunpack.c.h.b16 %v23
  %v267 = vunpack.c.l.b16 %v24
  %v268 = vunpack.c.h.b16 %v24
  %v269 = vunpack.c.l.b16 %v25
  %v270 = vunpack.c.h.b16 %v25
  %v271 = vunpack.c.l.b16 %v26
  %v272 = vunpack.c.l.b16 %v27
  %v273 = vunpack.c.h.b16 %v27
  %v274 = vunpack.c.l.b16 %v28
  %v275 = vunpack.c.h.b16 %v28
  %v276 = vunpack.c.l.b16 %v29
  %v277 = vunpack.c.h.b16 %v29
  %v278 = vunpack.c.l.b16 %v30
  %v279 = vunpack.c.l.b16 %v31
  %v280 = vunpack.c.h.b16 %v31
  %v281 = vunpack.c.l.b16 %v32
  %v282 = vunpack.c.h.b16 %v32
  %v283 = vunpack.c.l.b16 %v33
  %v284 = vunpack.c.h.b16 %v33
  %v285 = vunpack.c.l.b16 %v34
  %v286 = vunpack.c.l.b16 %v35
  %v287 = vunpack.c.h.b16 %v35
  %v288 = vunpack.c.l.b16 %v36
  %v289 = vunpack.c.h.b16 %v36
  %v290 = vunpack.c.l.b16 %v37
  %v291 = vunpack.c.h.b16 %v37
  %v292 = vunpack.c.l.b16 %v38
  %v293 = vunpack.c.l.b16 %v39
  %v294 = vunpack.c.h.b16 %v39
  %v295 = vunpack.c.l.b16 %v40
  %v296 = vunpack.c.h.b16 %v40
  %v297 = vunpack.c.l.b16 %v41
  %v298 = vunpack.c.h.b16 %v41
  %v299 = vunpack.c.l.b16 %v42
  %v300 = vunpack.c.l.b16 %v43
  %v301 = vunpack.c.h.b16 %v43
  %v302 = vunpack.c.l.b16 %v44
  %v303 = vunpack.c.h.b16 %v44
  %v304 = vunpack.c.l.b16 %v45
  %v305 = vunpack.c.h.b16 %v45
  %v306 = vunpack.c.l.b16 %v46
  %v307 = vunpack.c.l.b16 %v47
  %v308 = vunpack.c.h.b16 %v47
  %v309 = vunpack.c.l.b16 %v48
  %v310 = vunpack.c.h.b16 %v48
  %v311 = vunpack.c.l.b16 %v49
  %v312 = vunpack.c.h.b16 %v49
  %v313 = vunpack.c.l.b16 %v50
  %v314 = vunpack.c.l.b16 %v51
  %v315 = vunpack.c.h.b16 %v51
  %v316 = vunpack.c.l.b16 %v52
  %v317 = vunpack.c.h.b16 %v52
  %v318 = vunpack.c.l.b16 %v53
  %v319 = vunpack.c.h.b16 %v53
  %v320 = vunpack.c.l.b16 %v54
  %v321 = vunpack.c.l.b16 %v55
  %v322 = vunpack.c.h.b16 %v55
  %v323 = vunpack.c.l.b16 %v56
  %v324 = vunpack.c.h.b16 %v56
  %v325 = vunpack.c.l.b16 %v57
  %v326 = vunpack.c.h.b16 %v57
  %v327 = vunpack.c.l.b16 %v58
  %v328 = vunpack.c.l.b16 %v59
  %v329 = vunpack.c.h.b16 %v59
  %v330 = vunpack.c.l.b16 %v60
  %v331 = vunpack.c.h.b16 %v60
  %v332 = vunpack.c.l.b16 %v61
  %v333 = vunpack.c.h.b16 %v61
  %v334 = vunpack.c.l.b16 %v62
  %v335 = vunpack.c.l.b16 %v63
  %v336 = vunpack.c.h.b16 %v63
  %v337 = vunpack.c.l.b16 %v64
  %v338 = vunpack.c.h.b16 %v64
  %v339 = vunpack.c.l.b16 %v65
  %v340 = vunpack.c.h.b16 %v65
  %v341 = vunpack.c.l.b16 %v66
  %v342 = vunpack.c.l.b16 %v67
  %v343 = vunpack.c.h.b16 %v67
  %v344 = vunpack.c.l.b16 %v68
  %v345 = vunpack.c.h.b16 %v68
  %v346 = vunpack.c.l.b16 %v69
  %v347 = vunpack.c.h.b16 %v69
  %v348 = vunpack.c.l.b16 %v70
  %v349 = vunpack.c.l.b16 %v71
  %v350 = vunpack.c.h.b16 %v71
  %v351 = vunpack.c.l.b16 %v72
  %v352 = vunpack.c.h.b16 %v72
  %v353 = vunpack.c.l.b16 %v73
  %v354 = vunpack.c.h.b16 %v73
  %v355 = vunpack.c.l.b16 %v74
  %v356 = vunpack.c.l.b16 %v75
  %v357 = vunpack.c.h.b16 %v75
  %v358 = vunpack.c.l.b16 %v76
  %v359 = vunpack.c.h.b16 %v76
  %v360 = vunpack.c.l.b16 %v77
  %v361 = vunpack.c.h.b16 %v77
  %v362 = vunpack.c.l.b16 %v78
  %v363 = vpack.c.b16 %v258, %v251
  %v364 = vpack.c.b16 %v259, %v252
  %v365 = vpack.c.b16 %v260, %v253
  %v366 = vpack.c.b16 %v261, %v254
  %v367 = vpack.c.b16 %v262, %v255
  %v368 = vpack.c.b16 %v263, %v256
  %v369 = vpack.c.b16 %v264, %v257
  %v370 = vpack.c.b16 %v272, %v265
  %v371 = vpack.c.b16 %v273, %v266
  %v372 = vpack.c.b16 %v274, %v267
  %v373 = vpack.c.b16 %v275, %v268
  %v374 = vpack.c.b16 %v276, %v269
  %v375 = vpack.c.b16 %v277, %v270
  %v376 = vpack.c.b16 %v278, %v271
  %v377 = vpack.c.b16 %v286, %v279
  %v378 = vpack.c.b16 %v287, %v280
  %v379 = vpack.c.b16 %v288, %v281
  %v380 = vpack.c.b16 %v289, %v282
  %v381 = vpack.c.b16 %v290, %v283
  %v382 = vpack.c.b16 %v291, %v284
  %v383 = vpack.c.b16 %v292, %v285
  %v384 = vpack.c.b16 %v300, %v293
  %v385 = vpack.c.b16 %v301, %v294
  %v386 = vpack.c.b16 %v302, %v295
  %v387 = vpack.c.b16 %v303, %v296
  %v388 = vpack.c.b16 %v304, %v297
  %v389 = vpack.c.b16 %v305, %v298
  %v390 = vpack.c.b16 %v306, %v299
  %v391 = vpack.c.b16 %v314, %v307
  %v392 = vpack.c.b16 %v315, %v308
  %v393 = vpack.c.b16 %v316, %v309
  %v394 = vpack.c.b16 %v317, %v310
  %v395 = vpack.c.b16 %v318, %v311
  %v396 = vpack.c.b16 %v319, %v312
  %v397 = vpack.c.b16 %v320, %v313
  %v398 = vpack.c.b16 %v328, %v321
  %v399 = vpack.c.b16 %v329, %v322
  %v400 = vpack.c.b16 %v330, %v323
  %v401 = vpack.c.b16 %v331, %v324
  %v402 = vpack.c.b16 %v332, %v325
  %v403 = vpack.c.b16 %v333, %v326
  %v404 = vpack.c.b16 %v334, %v327
  %v405 = vpack.c.b16 %v342, %v335
  %v406 = vpack.c.b16 %v343, %v336
  %v407 = vpack.c.b16 %v344, %v337
  %v408 = vpack.c.b16 %v345, %v338
  %v409 = vpack.c.b16 %v346, %v339
  %v410 = vpack.c.b16 %v347, %v340
  %v411 = vpack.c.b16 %v348, %v341
  %v412 = vpack.c.b16 %v356, %v349
  %v413 = vpack.c.b16 %v357, %v350
  %v414 = vpack.c.b16 %v358, %v351
  %v415 = vpack.c.b16 %v359, %v352
  %v416 = vpack.c.b16 %v360, %v353
  %v417 = vpack.c.b16 %v361, %v354
  %v418 = vpack.c.b16 %v362, %v355
  %v575 = vunpack.c.l.b16 %v79
  %v576 = vunpack.c.l.b16 %v80
  %v577 = vunpack.c.l.b16 %v81
  %v578 = vunpack.c.l.b16 %v82
  %v579 = vunpack.c.l.b16 %v83
  %v580 = vunpack.c.l.b16 %v84
  %v581 = vunpack.c.l.b16 %v85
  %v582 = vunpack.c.l.b16 %v86
  %v583 = vunpack.c.l.b16 %v87
  %v584 = vunpack.c.l.b16 %v88
  %v585 = vunpack.c.l.b16 %v89
  %v586 = vunpack.c.l.b16 %v90
  %v587 = vunpack.c.l.b16 %v91
  %v588 = vunpack.c.l.b16 %v92
  %v589 = vunpack.c.l.b16 %v93
  %v590 = vunpack.c.l.b16 %v94
  %v591 = vunpack.c.l.b16 %v95
  %v592 = vunpack.c.l.b16 %v96
  %v593 = vunpack.c.l.b16 %v97
  %v594 = vunpack.c.l.b16 %v98
  %v595 = vunpack.c.l.b16 %v99
  %v596 = vunpack.c.l.b16 %v100
  %v597 = vunpack.c.l.b16 %v101
  %v598 = vunpack.c.l.b16 %v102
  %v599 = vunpack.c.l.b16 %v103
  %v600 = vunpack.c.l.b16 %v104
  %v601 = vunpack.c.l.b16 %v105
  %v602 = vunpack.c.l.b16 %v106
  %v603 = vunpack.c.l.b16 %v107
  %v604 = vunpack.c.l.b16 %v108
  %v605 = vunpack.c.l.b16 %v109
  %v606 = vunpack.c.l.b16 %v110
  %v607 = vunpack.c.l.b16 %v111
  %v608 = vunpack.c.l.b16 %v112
  %v609 = vunpack.c.l.b16 %v113
  %v610 = vunpack.c.l.b16 %v114
  %v611 = vunpack.c.l.b16 %v115
  %v612 = vunpack.c.l.b16 %v116
  %v613 = vunpack.c.l.b16 %v117
  %v614 = vunpack.c.l.b16 %v118
  %v615 = vunpack.c.l.b16 %v119
  %v616 = vunpack.c.l.b16 %v120
  %v617 = vunpack.c.l.b16 %v121
  %v618 = vunpack.c.l.b16 %v122
  %v619 = vunpack.c.l.b16 %v123
  %v620 = vunpack.c.l.b16 %v124
  %v621 = vunpack.c.l.b16 %v125
  %v622 = vunpack.c.l.b16 %v126
  %v623 = vunpack.c.l.b16 %v127
  %v624 = vunpack.c.l.b16 %v128
  %v625 = vunpack.c.l.b16 %v129
  %v626 = vunpack.c.l.b16 %v130
  %v627 = vunpack.c.l.b16 %v131
  %v628 = vunpack.c.l.b16 %v132
  %v629 = vunpack.c.l.b16 %v133
  %v630 = vunpack.c.l.b16 %v134
  %v631 = vunpack.c.l.b16 %v135
  %v632 = vunpack.c.l.b16 %v136
  %v633 = vunpack.c.l.b16 %v137
  %v634 = vunpack.c.l.b16 %v138
  %v635 = vunpack.c.l.b16 %v139
  %v636 = vunpack.c.l.b16 %v140
  %v637 = vunpack.c.l.b16 %v141
  %v638 = vunpack.c.l.b16 %v142
  %v639 = vunpack.c.l.b16 %v143
  %v640 = vunpack.c.l.b16 %v144
  %v641 = vunpack.c.l.b16 %v145
  %v642 = vunpack.c.l.b16 %v146
  %v643 = vunpack.c.l.b16 %v147
  %v644 = vunpack.c.l.b16 %v148
  %v645 = vunpack.c.l.b16 %v149
  %v646 = vunpack.c.l.b16 %v150
  %v647 = vunpack.c.l.b16 %v151
  %v648 = vunpack.c.l.b16 %v152
  %v649 = vunpack.c.l.b16 %v153
  %v650 = vunpack.c.l.b16 %v154
  %v651 = vunpack.c.l.b16 %v155
  %v652 = vunpack.c.l.b16 %v156
  %v653 = vunpack.c.l.b16 %v157
  %v654 = vunpack.c.l.b16 %v158
  %v655 = vunpack.c.l.b16 %v159
  %v656 = vunpack.c.l.b16 %v160
  %v657 = vunpack.c.l.b16 %v161
  %v658 = vunpack.c.l.b16 %v162
  %v659 = vunpack.c.l.b16 %v163
  %v660 = vunpack.c.l.b16 %v164
  %v661 = vunpack.c.l.b16 %v165
  %v662 = vunpack.c.l.b16 %v166
  %v663 = vunpack.c.l.b16 %v167
  %v664 = vunpack.c.l.b16 %v168
  %v665 = vunpack.c.l.b16 %v169
  %v666 = vunpack.c.l.b16 %v170
  %v667 = vunpack.c.l.b16 %v171
  %v668 = vunpack.c.l.b16 %v172
  %v669 = vunpack.c.l.b16 %v173
  %v670 = vunpack.c.l.b16 %v174
  %v671 = vunpack.c.l.b16 %v175
  %v672 = vunpack.c.l.b16 %v176
  %v673 = vunpack.c.l.b16 %v177
  %v674 = vunpack.c.l.b16 %v178
  %v675 = vunpack.c.l.b16 %v179
  %v676 = vunpack.c.l.b16 %v180
  %v677 = vunpack.c.l.b16 %v181
  %v678 = vunpack.c.l.b16 %v182
  %v679 = vunpack.c.l.b16 %v183
  %v680 = vunpack.c.l.b16 %v184
  %v681 = vunpack.c.l.b16 %v185
  %v682 = vunpack.c.l.b16 %v186
  %v683 = vpack.c.b16 %v576, %v575
  %v684 = vpack.c.b16 %v578, %v577
  %v685 = vpack.c.b16 %v580, %v579
  %v686 = vpack.c.b16 %v582, %v581
  %v687 = vpack.c.b16 %v584, %v583
  %v688 = vpack.c.b16 %v586, %v585
  %v689 = vpack.c.b16 %v588, %v587
  %v690 = vpack.c.b16 %v590, %v589
  %v691 = vpack.c.b16 %v592, %v591
  %v692 = vpack.c.b16 %v594, %v593
  %v693 = vpack.c.b16 %v596, %v595
  %v694 = vpack.c.b16 %v598, %v597
  %v695 = vpack.c.b16 %v600, %v599
  %v696 = vpack.c.b16 %v602, %v601
  %v697 = vpack.c.b16 %v604, %v603
  %v698 = vpack.c.b16 %v606, %v605
  %v699 = vpack.c.b16 %v608, %v607
  %v700 = vpack.c.b16 %v610, %v609
  %v701 = vpack.c.b16 %v612, %v611
  %v702 = vpack.c.b16 %v614, %v613
  %v703 = vpack.c.b16 %v616, %v615
  %v704 = vpack.c.b16 %v618, %v617
  %v705 = vpack.c.b16 %v620, %v619
  %v706 = vpack.c.b16 %v622, %v621
  %v707 = vpack.c.b16 %v624, %v623
  %v708 = vpack.c.b16 %v626, %v625
  %v709 = vpack.c.b16 %v628, %v627
  %v710 = vpack.c.b16 %v630, %v629
  %v711 = vpack.c.b16 %v632, %v631
  %v712 = vpack.c.b16 %v634, %v633
  %v713 = vpack.c.b16 %v636, %v635
  %v714 = vpack.c.b16 %v638, %v637
  %v715 = vpack.c.b16 %v640, %v639
  %v716 = vpack.c.b16 %v642, %v641
  %v717 = vpack.c.b16 %v644, %v643
  %v718 = vpack.c.b16 %v646, %v645
  %v719 = vpack.c.b16 %v648, %v647
  %v720 = vpack.c.b16 %v650, %v649
  %v721 = vpack.c.b16 %v652, %v651
  %v722 = vpack.c.b16 %v654, %v653
  %v723 = vpack.c.b16 %v656, %v655
  %v724 = vpack.c.b16 %v658, %v657
  %v725 = vpack.c.b16 %v660, %v659
  %v726 = vpack.c.b16 %v662, %v661
  %v727 = vpack.c.b16 %v664, %v663
  %v728 = vpack.c.b16 %v666, %v665
  %v729 = vpack.c.b16 %v668, %v667
  %v730 = vpack.c.b16 %v670, %v669
  %v731 = vpack.c.b16 %v672, %v671
  %v732 = vpack.c.b16 %v674, %v673
  %v733 = vpack.c.b16 %v676, %v675
  %v734 = vpack.c.b16 %v678, %v677
  %v735 = vpack.c.b16 %v680, %v679
  %v736 = vpack.c.b16 %v682, %v681
  %vm791 = vcmask 785408
  %v793 = vsel %vm791, %v369, 0
  %v796 = vsel %vm791, %v376, 0
  %v799 = vsel %vm791, %v383, 0
  %v802 = vsel %vm791, %v390, 0
  %v805 = vsel %vm791, %v397, 0
  %v808 = vsel %vm791, %v404, 0
  %v811 = vsel %vm791, %v411, 0
  %v814 = vsel %vm791, %v418, 0
  %816 = vmatprep.subr.bf16.mxu0 0
  %817 = vmatpush1.bf16.msra.mxu0 %v683
  %818 = vmatprep.subr.bf16.mxu0 0
  %819 = vmatpush1.bf16.msra.mxu0 %v684
  %820 = vmatprep.subr.bf16.mxu0 0
  %821 = vmatpush1.bf16.msra.mxu0 %v685
  %822 = vmatprep.subr.bf16.mxu0 0
  %823 = vmatpush1.bf16.msra.mxu0 %v686
  %824 = vmatprep.subr.bf16.mxu0 0
  %825 = vmatpush1.bf16.msra.mxu0 %v687
  %826 = vmatprep.subr.bf16.mxu0 0
  %827 = vmatpush1.bf16.msra.mxu0 %v688
  %828 = vmatprep.subr.bf16.mxu0 0
  %829 = vmatpush1.bf16.msra.mxu0 %v689
  %830 = vmatprep.subr.bf16.mxu0 0
  %831 = vmatpush1.bf16.msra.mxu0 %v690
  %832 = vmatprep.subr.bf16.mxu0 0
  %833 = vmatpush1.bf16.msra.mxu0 %v691
  %834 = vmatprep.subr.bf16.mxu0 0
  %835 = vmatpush1.bf16.msra.mxu0 %v692
  %836 = vmatprep.subr.bf16.mxu0 0
  %837 = vmatpush1.bf16.msra.mxu0 %v693
  %838 = vmatprep.subr.bf16.mxu0 0
  %839 = vmatpush1.bf16.msra.mxu0 %v694
  %840 = vmatprep.subr.bf16.mxu0 0
  %841 = vmatpush1.bf16.msra.mxu0 %v695
  %842 = vmatprep.subr.bf16.mxu0 0
  %843 = vmatpush1.bf16.msra.mxu0 %v696
  %844 = vmatprep.subr.bf16.mxu0 0
  %845 = vmatpush1.bf16.msra.mxu0 %v697
  %846 = vmatprep.subr.bf16.mxu0 0
  %847 = vmatpush1.bf16.msra.mxu0 %v698
  %848 = vmatprep.mubr.bf16.mxu0 %v364
  %849 = vmatmul.mubr.bf16.gmra.mrb[0].mxu0 %v363
  %v850 = vpop.f32.mrb[0].mxu0
  %v851 = vadd.f32 0.0, %v850
  %v852 = vpop.f32.mrb[0].mxu0
  %v853 = vpop.f32.mrb[0].mxu0
  %v854 = vadd.f32 0.0, %v853
  %v855 = vpop.f32.mrb[0].mxu0
  %856 = vmatprep.mubr.bf16.mxu0 %v371
  %857 = vmatmul.mubr.bf16.gmra.mrb[0].mxu0 %v370
  %v858 = vpop.f32.mrb[0].mxu0
  %v859 = vadd.f32 0.0, %v858
  %v860 = vpop.f32.mrb[0].mxu0
  %v861 = vpop.f32.mrb[0].mxu0
  %v862 = vadd.f32 0.0, %v861
  %v863 = vpop.f32.mrb[0].mxu0
  %864 = vmatprep.mubr.bf16.mxu0 %v378
  %865 = vmatmul.mubr.bf16.gmra.mrb[0].mxu0 %v377
  %v866 = vpop.f32.mrb[0].mxu0
  %v867 = vadd.f32 0.0, %v866
  %v868 = vpop.f32.mrb[0].mxu0
  %v869 = vpop.f32.mrb[0].mxu0
  %v870 = vadd.f32 0.0, %v869
  %v871 = vpop.f32.mrb[0].mxu0
  %872 = vmatprep.mubr.bf16.mxu0 %v385
  %873 = vmatmul.mubr.bf16.gmra.mrb[0].mxu0 %v384
  %v874 = vpop.f32.mrb[0].mxu0
  %v875 = vadd.f32 0.0, %v874
  %v876 = vpop.f32.mrb[0].mxu0
  %v877 = vpop.f32.mrb[0].mxu0
  %v878 = vadd.f32 0.0, %v877
  %v879 = vpop.f32.mrb[0].mxu0
  %880 = vmatprep.mubr.bf16.mxu0 %v392
  %881 = vmatmul.mubr.bf16.gmra.mrb[0].mxu0 %v391
  %v882 = vpop.f32.mrb[0].mxu0
  %v883 = vadd.f32 0.0, %v882
  %v884 = vpop.f32.mrb[0].mxu0
  %v885 = vpop.f32.mrb[0].mxu0
  %v886 = vadd.f32 0.0, %v885
  %v887 = vpop.f32.mrb[0].mxu0
  %888 = vmatprep.mubr.bf16.mxu0 %v399
  %889 = vmatmul.mubr.bf16.gmra.mrb[0].mxu0 %v398
  %v890 = vpop.f32.mrb[0].mxu0
  %v891 = vadd.f32 0.0, %v890
  %v892 = vpop.f32.mrb[0].mxu0
  %v893 = vpop.f32.mrb[0].mxu0
  %v894 = vadd.f32 0.0, %v893
  %v895 = vpop.f32.mrb[0].mxu0
  %896 = vmatprep.mubr.bf16.mxu0 %v406
  %897 = vmatmul.mubr.bf16.gmra.mrb[0].mxu0 %v405
  %v898 = vpop.f32.mrb[0].mxu0
  %v899 = vadd.f32 0.0, %v898
  %v900 = vpop.f32.mrb[0].mxu0
  %v901 = vpop.f32.mrb[0].mxu0
  %v902 = vadd.f32 0.0, %v901
  %v903 = vpop.f32.mrb[0].mxu0
  %904 = vmatprep.mubr.bf16.mxu0 %v413
  %905 = vmatmul.mubr.bf16.gmra.mrb[0].mxu0 %v412
  %v906 = vpop.f32.mrb[0].mxu0
  %v907 = vadd.f32 0.0, %v906
  %v908 = vpop.f32.mrb[0].mxu0
  %v909 = vpop.f32.mrb[0].mxu0
  %v910 = vadd.f32 0.0, %v909
  %v911 = vpop.f32.mrb[0].mxu0
  %912 = vdwg.mxu0
  %913 = vmatprep.subr.bf16.mxu0 0
  %914 = vmatpush1.bf16.msra.mxu0 %v699
  %915 = vmatprep.subr.bf16.mxu0 0
  %916 = vmatpush1.bf16.msra.mxu0 %v700
  %917 = vmatprep.subr.bf16.mxu0 0
  %918 = vmatpush1.bf16.msra.mxu0 %v701
  %919 = vmatprep.subr.bf16.mxu0 0
  %920 = vmatpush1.bf16.msra.mxu0 %v702
  %921 = vmatprep.subr.bf16.mxu0 0
  %922 = vmatpush1.bf16.msra.mxu0 %v703
  %923 = vmatprep.subr.bf16.mxu0 0
  %924 = vmatpush1.bf16.msra.mxu0 %v704
  %925 = vmatprep.subr.bf16.mxu0 0
  %926 = vmatpush1.bf16.msra.mxu0 %v705
  %927 = vmatprep.subr.bf16.mxu0 0
  %928 = vmatpush1.bf16.msra.mxu0 %v706
  %929 = vmatprep.subr.bf16.mxu0 0
  %930 = vmatpush1.bf16.msra.mxu0 %v707
  %931 = vmatprep.subr.bf16.mxu0 0
  %932 = vmatpush1.bf16.msra.mxu0 %v708
  %933 = vmatprep.subr.bf16.mxu0 0
  %934 = vmatpush1.bf16.msra.mxu0 %v709
  %935 = vmatprep.subr.bf16.mxu0 0
  %936 = vmatpush1.bf16.msra.mxu0 %v710
  %937 = vmatprep.subr.bf16.mxu0 0
  %938 = vmatpush1.bf16.msra.mxu0 %v711
  %939 = vmatprep.subr.bf16.mxu0 0
  %940 = vmatpush1.bf16.msra.mxu0 %v712
  %941 = vmatprep.subr.bf16.mxu0 0
  %942 = vmatpush1.bf16.msra.mxu0 %v713
  %943 = vmatprep.subr.bf16.mxu0 0
  %944 = vmatpush1.bf16.msra.mxu0 %v714
  %945 = vmatprep.mubr.bf16.mxu0 %v366
  %946 = vmatmul.mubr.bf16.gmra.mrb[0].mxu0 %v365
  %v947 = vpop.f32.mrb[0].mxu0
  %v948 = vadd.f32 %v851, %v947
  %v949 = vpop.f32.mrb[0].mxu0
  %v950 = vpop.f32.mrb[0].mxu0
  %v951 = vadd.f32 %v854, %v950
  %v952 = vpop.f32.mrb[0].mxu0
  %953 = vmatprep.mubr.bf16.mxu0 %v373
  %954 = vmatmul.mubr.bf16.gmra.mrb[0].mxu0 %v372
  %v955 = vpop.f32.mrb[0].mxu0
  %v956 = vadd.f32 %v859, %v955
  %v957 = vpop.f32.mrb[0].mxu0
  %v958 = vpop.f32.mrb[0].mxu0
  %v959 = vadd.f32 %v862, %v958
  %v960 = vpop.f32.mrb[0].mxu0
  %961 = vmatprep.mubr.bf16.mxu0 %v380
  %962 = vmatmul.mubr.bf16.gmra.mrb[0].mxu0 %v379
  %v963 = vpop.f32.mrb[0].mxu0
  %v964 = vadd.f32 %v867, %v963
  %v965 = vpop.f32.mrb[0].mxu0
  %v966 = vpop.f32.mrb[0].mxu0
  %v967 = vadd.f32 %v870, %v966
  %v968 = vpop.f32.mrb[0].mxu0
  %969 = vmatprep.mubr.bf16.mxu0 %v387
  %970 = vmatmul.mubr.bf16.gmra.mrb[0].mxu0 %v386
  %v971 = vpop.f32.mrb[0].mxu0
  %v972 = vadd.f32 %v875, %v971
  %v973 = vpop.f32.mrb[0].mxu0
  %v974 = vpop.f32.mrb[0].mxu0
  %v975 = vadd.f32 %v878, %v974
  %v976 = vpop.f32.mrb[0].mxu0
  %977 = vmatprep.mubr.bf16.mxu0 %v394
  %978 = vmatmul.mubr.bf16.gmra.mrb[0].mxu0 %v393
  %v979 = vpop.f32.mrb[0].mxu0
  %v980 = vadd.f32 %v883, %v979
  %v981 = vpop.f32.mrb[0].mxu0
  %v982 = vpop.f32.mrb[0].mxu0
  %v983 = vadd.f32 %v886, %v982
  %v984 = vpop.f32.mrb[0].mxu0
  %985 = vmatprep.mubr.bf16.mxu0 %v401
  %986 = vmatmul.mubr.bf16.gmra.mrb[0].mxu0 %v400
  %v987 = vpop.f32.mrb[0].mxu0
  %v988 = vadd.f32 %v891, %v987
  %v989 = vpop.f32.mrb[0].mxu0
  %v990 = vpop.f32.mrb[0].mxu0
  %v991 = vadd.f32 %v894, %v990
  %v992 = vpop.f32.mrb[0].mxu0
  %993 = vmatprep.mubr.bf16.mxu0 %v408
  %994 = vmatmul.mubr.bf16.gmra.mrb[0].mxu0 %v407
  %v995 = vpop.f32.mrb[0].mxu0
  %v996 = vadd.f32 %v899, %v995
  %v997 = vpop.f32.mrb[0].mxu0
  %v998 = vpop.f32.mrb[0].mxu0
  %v999 = vadd.f32 %v902, %v998
  %v1000 = vpop.f32.mrb[0].mxu0
  %1001 = vmatprep.mubr.bf16.mxu0 %v415
  %1002 = vmatmul.mubr.bf16.gmra.mrb[0].mxu0 %v414
  %v1003 = vpop.f32.mrb[0].mxu0
  %v1004 = vadd.f32 %v907, %v1003
  %v1005 = vpop.f32.mrb[0].mxu0
  %v1006 = vpop.f32.mrb[0].mxu0
  %v1007 = vadd.f32 %v910, %v1006
  %v1008 = vpop.f32.mrb[0].mxu0
  %1009 = vdwg.mxu0
  %1010 = vmatprep.subr.bf16.mxu0 0
  %1011 = vmatpush1.bf16.msra.mxu0 %v715
  %1012 = vmatprep.subr.bf16.mxu0 0
  %1013 = vmatpush1.bf16.msra.mxu0 %v716
  %1014 = vmatprep.subr.bf16.mxu0 0
  %1015 = vmatpush1.bf16.msra.mxu0 %v717
  %1016 = vmatprep.subr.bf16.mxu0 0
  %1017 = vmatpush1.bf16.msra.mxu0 %v718
  %1018 = vmatprep.subr.bf16.mxu0 0
  %1019 = vmatpush1.bf16.msra.mxu0 %v719
  %1020 = vmatprep.subr.bf16.mxu0 0
  %1021 = vmatpush1.bf16.msra.mxu0 %v720
  %1022 = vmatprep.subr.bf16.mxu0 0
  %1023 = vmatpush1.bf16.msra.mxu0 %v721
  %1024 = vmatprep.subr.bf16.mxu0 0
  %1025 = vmatpush1.bf16.msra.mxu0 %v722
  %1026 = vmatprep.subr.bf16.mxu0 0
  %1027 = vmatpush1.bf16.msra.mxu0 %v723
  %1028 = vmatprep.subr.bf16.mxu0 0
  %1029 = vmatpush1.bf16.msra.mxu0 %v724
  %1030 = vmatprep.subr.bf16.mxu0 0
  %1031 = vmatpush1.bf16.msra.mxu0 %v725
  %1032 = vmatprep.subr.bf16.mxu0 0
  %1033 = vmatpush1.bf16.msra.mxu0 %v726
  %1034 = vmatprep.subr.bf16.mxu0 0
  %1035 = vmatpush1.bf16.msra.mxu0 %v727
  %1036 = vmatprep.subr.bf16.mxu0 0
  %1037 = vmatpush1.bf16.msra.mxu0 %v728
  %1038 = vmatprep.subr.bf16.mxu0 0
  %1039 = vmatpush1.bf16.msra.mxu0 %v729
  %1040 = vmatprep.subr.bf16.mxu0 0
  %1041 = vmatpush1.bf16.msra.mxu0 %v730
  %1042 = vmatprep.mubr.bf16.mxu0 %v368
  %1043 = vmatmul.mubr.bf16.gmra.mrb[0].mxu0 %v367
  %v1044 = vpop.f32.mrb[0].mxu0
  %v1045 = vadd.f32 %v948, %v1044
  %v1046 = vpop.f32.mrb[0].mxu0
  %v1047 = vpop.f32.mrb[0].mxu0
  %v1048 = vadd.f32 %v951, %v1047
  %v1049 = vpop.f32.mrb[0].mxu0
  %1050 = vmatprep.mubr.bf16.mxu0 %v375
  %1051 = vmatmul.mubr.bf16.gmra.mrb[0].mxu0 %v374
  %v1052 = vpop.f32.mrb[0].mxu0
  %v1053 = vadd.f32 %v956, %v1052
  %v1054 = vpop.f32.mrb[0].mxu0
  %v1055 = vpop.f32.mrb[0].mxu0
  %v1056 = vadd.f32 %v959, %v1055
  %v1057 = vpop.f32.mrb[0].mxu0
  %1058 = vmatprep.mubr.bf16.mxu0 %v382
  %1059 = vmatmul.mubr.bf16.gmra.mrb[0].mxu0 %v381
  %v1060 = vpop.f32.mrb[0].mxu0
  %v1061 = vadd.f32 %v964, %v1060
  %v1062 = vpop.f32.mrb[0].mxu0
  %v1063 = vpop.f32.mrb[0].mxu0
  %v1064 = vadd.f32 %v967, %v1063
  %v1065 = vpop.f32.mrb[0].mxu0
  %1066 = vmatprep.mubr.bf16.mxu0 %v389
  %1067 = vmatmul.mubr.bf16.gmra.mrb[0].mxu0 %v388
  %v1068 = vpop.f32.mrb[0].mxu0
  %v1069 = vadd.f32 %v972, %v1068
  %v1070 = vpop.f32.mrb[0].mxu0
  %v1071 = vpop.f32.mrb[0].mxu0
  %v1072 = vadd.f32 %v975, %v1071
  %v1073 = vpop.f32.mrb[0].mxu0
  %1074 = vmatprep.mubr.bf16.mxu0 %v396
  %1075 = vmatmul.mubr.bf16.gmra.mrb[0].mxu0 %v395
  %v1076 = vpop.f32.mrb[0].mxu0
  %v1077 = vadd.f32 %v980, %v1076
  %v1078 = vpop.f32.mrb[0].mxu0
  %v1079 = vpop.f32.mrb[0].mxu0
  %v1080 = vadd.f32 %v983, %v1079
  %v1081 = vpop.f32.mrb[0].mxu0
  %1082 = vmatprep.mubr.bf16.mxu0 %v403
  %1083 = vmatmul.mubr.bf16.gmra.mrb[0].mxu0 %v402
  %v1084 = vpop.f32.mrb[0].mxu0
  %v1085 = vadd.f32 %v988, %v1084
  %v1086 = vpop.f32.mrb[0].mxu0
  %v1087 = vpop.f32.mrb[0].mxu0
  %v1088 = vadd.f32 %v991, %v1087
  %v1089 = vpop.f32.mrb[0].mxu0
  %1090 = vmatprep.mubr.bf16.mxu0 %v410
  %1091 = vmatmul.mubr.bf16.gmra.mrb[0].mxu0 %v409
  %v1092 = vpop.f32.mrb[0].mxu0
  %v1093 = vadd.f32 %v996, %v1092
  %v1094 = vpop.f32.mrb[0].mxu0
  %v1095 = vpop.f32.mrb[0].mxu0
  %v1096 = vadd.f32 %v999, %v1095
  %v1097 = vpop.f32.mrb[0].mxu0
  %1098 = vmatprep.mubr.bf16.mxu0 %v417
  %1099 = vmatmul.mubr.bf16.gmra.mrb[0].mxu0 %v416
  %v1100 = vpop.f32.mrb[0].mxu0
  %v1101 = vadd.f32 %v1004, %v1100
  %v1102 = vpop.f32.mrb[0].mxu0
  %v1103 = vpop.f32.mrb[0].mxu0
  %v1104 = vadd.f32 %v1007, %v1103
  %v1105 = vpop.f32.mrb[0].mxu0
  %1106 = vdwg.mxu0
  %1107 = vmatprep.subr.bf16.mxu0 0
  %1108 = vmatpush1.bf16.msra.mxu0 %v731
  %1109 = vmatprep.subr.bf16.mxu0 0
  %1110 = vmatpush1.bf16.msra.mxu0 %v732
  %1111 = vmatprep.subr.bf16.mxu0 0
  %1112 = vmatpush1.bf16.msra.mxu0 %v733
  %1113 = vmatprep.subr.bf16.mxu0 0
  %1114 = vmatpush1.bf16.msra.mxu0 %v734
  %1115 = vmatprep.subr.bf16.mxu0 0
  %1116 = vmatpush1.bf16.msra.mxu0 %v735
  %1117 = vmatprep.subr.bf16.mxu0 0
  %1118 = vmatpush1.bf16.msra.mxu0 %v736
  %1119 = vmatprep.subr.bf16.mxu0 0
  %1120 = vmatpush1.bf16.msra.mxu0 0
  %1121 = vmatprep.subr.bf16.mxu0 0
  %1122 = vmatpush1.bf16.msra.mxu0 0
  %1123 = vmatprep.subr.bf16.mxu0 0
  %1124 = vmatpush1.bf16.msra.mxu0 0
  %1125 = vmatprep.subr.bf16.mxu0 0
  %1126 = vmatpush1.bf16.msra.mxu0 0
  %1127 = vmatprep.subr.bf16.mxu0 0
  %1128 = vmatpush1.bf16.msra.mxu0 0
  %1129 = vmatprep.subr.bf16.mxu0 0
  %1130 = vmatpush1.bf16.msra.mxu0 0
  %1131 = vmatprep.subr.bf16.mxu0 0
  %1132 = vmatpush1.bf16.msra.mxu0 0
  %1133 = vmatprep.subr.bf16.mxu0 0
  %1134 = vmatpush1.bf16.msra.mxu0 0
  %1135 = vmatprep.subr.bf16.mxu0 0
  %1136 = vmatpush1.bf16.msra.mxu0 0
  %1137 = vmatprep.subr.bf16.mxu0 0
  %1138 = vmatpush1.bf16.msra.mxu0 0
  %1139 = vmatprep.mubr.bf16.mxu0 0
  %1140 = vmatmul.mubr.bf16.gmra.mrb[0].mxu0 %v793
  %v1141 = vpop.f32.mrb[0].mxu0
  %v1142 = vadd.f32 %v1045, %v1141
  %v1143 = vpop.f32.mrb[0].mxu0
  %v1144 = vpop.f32.mrb[0].mxu0
  %v1145 = vadd.f32 %v1048, %v1144
  %v1146 = vpop.f32.mrb[0].mxu0
  %1147 = vmatprep.mubr.bf16.mxu0 0
  %1148 = vmatmul.mubr.bf16.gmra.mrb[0].mxu0 %v796
  %v1149 = vpop.f32.mrb[0].mxu0
  %v1150 = vadd.f32 %v1053, %v1149
  %v1151 = vpop.f32.mrb[0].mxu0
  %v1152 = vpop.f32.mrb[0].mxu0
  %v1153 = vadd.f32 %v1056, %v1152
  %v1154 = vpop.f32.mrb[0].mxu0
  %1155 = vmatprep.mubr.bf16.mxu0 0
  %1156 = vmatmul.mubr.bf16.gmra.mrb[0].mxu0 %v799
  %v1157 = vpop.f32.mrb[0].mxu0
  %v1158 = vadd.f32 %v1061, %v1157
  %v1159 = vpop.f32.mrb[0].mxu0
  %v1160 = vpop.f32.mrb[0].mxu0
  %v1161 = vadd.f32 %v1064, %v1160
  %v1162 = vpop.f32.mrb[0].mxu0
  %1163 = vmatprep.mubr.bf16.mxu0 0
  %1164 = vmatmul.mubr.bf16.gmra.mrb[0].mxu0 %v802
  %v1165 = vpop.f32.mrb[0].mxu0
  %v1166 = vadd.f32 %v1069, %v1165
  %v1167 = vpop.f32.mrb[0].mxu0
  %v1168 = vpop.f32.mrb[0].mxu0
  %v1169 = vadd.f32 %v1072, %v1168
  %v1170 = vpop.f32.mrb[0].mxu0
  %1171 = vmatprep.mubr.bf16.mxu0 0
  %1172 = vmatmul.mubr.bf16.gmra.mrb[0].mxu0 %v805
  %v1173 = vpop.f32.mrb[0].mxu0
  %v1174 = vadd.f32 %v1077, %v1173
  %v1175 = vpop.f32.mrb[0].mxu0
  %v1176 = vpop.f32.mrb[0].mxu0
  %v1177 = vadd.f32 %v1080, %v1176
  %v1178 = vpop.f32.mrb[0].mxu0
  %1179 = vmatprep.mubr.bf16.mxu0 0
  %1180 = vmatmul.mubr.bf16.gmra.mrb[0].mxu0 %v808
  %v1181 = vpop.f32.mrb[0].mxu0
  %v1182 = vadd.f32 %v1085, %v1181
  %v1183 = vpop.f32.mrb[0].mxu0
  %v1184 = vpop.f32.mrb[0].mxu0
  %v1185 = vadd.f32 %v1088, %v1184
  %v1186 = vpop.f32.mrb[0].mxu0
  %1187 = vmatprep.mubr.bf16.mxu0 0
  %1188 = vmatmul.mubr.bf16.gmra.mrb[0].mxu0 %v811
  %v1189 = vpop.f32.mrb[0].mxu0
  %v1190 = vadd.f32 %v1093, %v1189
  %v1191 = vpop.f32.mrb[0].mxu0
  %v1192 = vpop.f32.mrb[0].mxu0
  %v1193 = vadd.f32 %v1096, %v1192
  %v1194 = vpop.f32.mrb[0].mxu0
  %1195 = vmatprep.mubr.bf16.mxu0 0
  %1196 = vmatmul.mubr.bf16.gmra.mrb[0].mxu0 %v814
  %v1197 = vpop.f32.mrb[0].mxu0
  %v1198 = vadd.f32 %v1101, %v1197
  %v1199 = vpop.f32.mrb[0].mxu0
  %v1200 = vpop.f32.mrb[0].mxu0
  %v1201 = vadd.f32 %v1104, %v1200
  %v1202 = vpop.f32.mrb[0].mxu0
  %1203 = vdwg.mxu0
  %1204 = vst [vmem:[%s2] sm:$0xff] %v1142
  %1205 = vst [vmem:[%s2 + $0x8] sm:$0xff] %v1145
  %1206 = vst [vmem:[%s2 + $0x10] sm:$0xff] %v1150
  %1207 = vst [vmem:[%s2 + $0x18] sm:$0xff] %v1153
  %1208 = vst [vmem:[%s2 + $0x20] sm:$0xff] %v1158
  %1209 = vst [vmem:[%s2 + $0x28] sm:$0xff] %v1161
  %1210 = vst [vmem:[%s2 + $0x30] sm:$0xff] %v1166
  %1211 = vst [vmem:[%s2 + $0x38] sm:$0xff] %v1169
  %1212 = vst [vmem:[%s2 + $0x40] sm:$0xff] %v1174
  %1213 = vst [vmem:[%s2 + $0x48] sm:$0xff] %v1177
  %1214 = vst [vmem:[%s2 + $0x50] sm:$0xff] %v1182
  %1215 = vst [vmem:[%s2 + $0x58] sm:$0xff] %v1185
  %1216 = vst [vmem:[%s2 + $0x60] sm:$0xff] %v1190
  %1217 = vst [vmem:[%s2 + $0x68] sm:$0xff] %v1193
  %1218 = vst [vmem:[%s2 + $0x70] sm:$0xff] %v1198
  %1219 = vst [vmem:[%s2 + $0x78] sm:$0xff] %v1201
  %p1220 = scmp.eq.s32.totalorder 0, 0
  // Predicated region
  $region10: #{inception_b_forward.15} parent=0 // pred_check
    %p1221 = pneg %p1220
  $region11: #{inception_b_forward.15} parent=0 // pred_check_branch
    %1223 = sbr.rel (%p1221) target = $region13
  $region12: #{inception_b_forward.15} parent=0 // pred_region
    %1224 = vst [vmem:[%s3] sm:$0x1] 0.0
    %1225 = vst [vmem:[%s4] sm:$0x1] 0.0
  $region13: #{inception_b_forward.15} parent=0 // pred_fallthru
    _
  %v1226 = vld [vmem:[%s3] sm:$0x1]
  %v1227 = vadd.f32 %v1142, %v1145
  %v1228 = vadd.f32 %v1227, %v1150
  %v1229 = vadd.f32 %v1228, %v1153
  %v1230 = vadd.f32 %v1229, %v1158
  %v1231 = vadd.f32 %v1230, %v1161
  %v1232 = vadd.f32 %v1231, %v1166
  %v1233 = vadd.f32 %v1232, %v1169
  %v1234 = vadd.f32 %v1233, %v1174
  %v1235 = vadd.f32 %v1234, %v1177
  %v1236 = vadd.f32 %v1235, %v1182
  %v1237 = vadd.f32 %v1236, %v1185
  %v1238 = vadd.f32 %v1237, %v1190
  %v1239 = vadd.f32 %v1238, %v1193
  %v1240 = vadd.f32 %v1239, %v1198
  %v1241 = vadd.f32 %v1240, %v1201
  %v1242 = vrot.slane %v1241, 4
  %v1243 = vadd.f32 %v1241, %v1242
  %v1244 = vrot.slane %v1243, 2
  %v1245 = vadd.f32 %v1243, %v1244
  %v1246 = vrot.slane %v1245, 1
  %v1247 = vadd.f32 %v1245, %v1246
  %v1248 = vadd.f32 %v1226, %v1247
  %1249 = vst [vmem:[%s3] sm:$0x1] %v1248
  %v1250 = vld [vmem:[%s4] sm:$0x1]
  %v1251 = vmul.f32 %v1142, %v1142
  %v1252 = vmul.f32 %v1145, %v1145
  %v1253 = vmul.f32 %v1150, %v1150
  %v1254 = vmul.f32 %v1153, %v1153
  %v1255 = vmul.f32 %v1158, %v1158
  %v1256 = vmul.f32 %v1161, %v1161
  %v1257 = vmul.f32 %v1166, %v1166
  %v1258 = vmul.f32 %v1169, %v1169
  %v1259 = vmul.f32 %v1174, %v1174
  %v1260 = vmul.f32 %v1177, %v1177
  %v1261 = vmul.f32 %v1182, %v1182
  %v1262 = vmul.f32 %v1185, %v1185
  %v1263 = vmul.f32 %v1190, %v1190
  %v1264 = vmul.f32 %v1193, %v1193
  %v1265 = vmul.f32 %v1198, %v1198
  %v1266 = vmul.f32 %v1201, %v1201
  %v1267 = vadd.f32 %v1251, %v1252
  %v1268 = vadd.f32 %v1267, %v1253
  %v1269 = vadd.f32 %v1268, %v1254
  %v1270 = vadd.f32 %v1269, %v1255
  %v1271 = vadd.f32 %v1270, %v1256
  %v1272 = vadd.f32 %v1271, %v1257
  %v1273 = vadd.f32 %v1272, %v1258
  %v1274 = vadd.f32 %v1273, %v1259
  %v1275 = vadd.f32 %v1274, %v1260
  %v1276 = vadd.f32 %v1275, %v1261
  %v1277 = vadd.f32 %v1276, %v1262
  %v1278 = vadd.f32 %v1277, %v1263
  %v1279 = vadd.f32 %v1278, %v1264
  %v1280 = vadd.f32 %v1279, %v1265
  %v1281 = vadd.f32 %v1280, %v1266
  %v1282 = vrot.slane %v1281, 4
  %v1283 = vadd.f32 %v1281, %v1282
  %v1284 = vrot.slane %v1283, 2
  %v1285 = vadd.f32 %v1283, %v1284
  %v1286 = vrot.slane %v1285, 1
  %v1287 = vadd.f32 %v1285, %v1286
  %v1288 = vadd.f32 %v1250, %v1287
  %1289 = vst [vmem:[%s4] sm:$0x1] %v1288
  // Predicated region
  $region14: #{inception_b_forward.15} parent=0 // pred_check
    _
  $region15: #{inception_b_forward.15} parent=0 // pred_check_branch
    %1291 = sbr.rel (0) target = $region17
  $region16: #{inception_b_forward.15} parent=0 // pred_region
    _
  $region17: #{inception_b_forward.15} parent=0 // pred_fallthru
    _
  // Predicated region
  $region18: #{inception_b_forward.15} parent=0 // pred_check
    _
  $region19: #{inception_b_forward.15} parent=0 // pred_check_branch
    %1293 = sbr.rel (0) target = $region21
  $region20: #{inception_b_forward.15} parent=0 // pred_region
    _
  $region21: #{inception_b_forward.15} parent=0 // pred_fallthru
    _
  // Predicated region
  $region22: #{inception_b_forward.15} parent=0 // pred_check
    _
  $region23: #{inception_b_forward.15} parent=0 // pred_check_branch
    %1295 = sbr.rel (0) target = $region25
  $region24: #{inception_b_forward.15} parent=0 // pred_region
    _
  $region25: #{inception_b_forward.15} parent=0 // pred_fallthru
    _
  // Predicated region
  $region26: #{inception_b_forward.15} parent=0 // pred_check
    _
  $region27: #{inception_b_forward.15} parent=0 // pred_check_branch
    %1297 = sbr.rel (0) target = $region29
  $region28: #{inception_b_forward.15} parent=0 // pred_region
    _
  $region29: #{inception_b_forward.15} parent=0 // pred_fallthru
    _
  // Predicated region
  $region30: #{inception_b_forward.15} parent=0 // pred_check
    _
  $region31: #{inception_b_forward.15} parent=0 // pred_check_branch
    %1299 = sbr.rel (0) target = $region33
  $region32: #{inception_b_forward.15} parent=0 // pred_region
    _
  $region33: #{inception_b_forward.15} parent=0 // pred_fallthru
    _
  // Predicated region
  $region34: #{inception_b_forward.15} parent=0 // pred_check
    _
  $region35: #{inception_b_forward.15} parent=0 // pred_check_branch
    %1301 = sbr.rel (0) target = $region37
  $region36: #{inception_b_forward.15} parent=0 // pred_region
    _
  $region37: #{inception_b_forward.15} parent=0 // pred_fallthru
    _

// kernel: inception_b_forward.9
$region0: #{inception_b_forward.9}
  #allocation0 [shape = 'u32[]', space=smem, size = 0x4, offset = 0x4, fixed_abs, tag = 'smem constant byte address 0x4 - core index']
  #allocation1 [shape = 'u32[144,128]{1,0:T(1,128)}', space=vmem, size = 0x12000, scoped, tag = 'internal scratch']
  %s0 = inlined_call_operand.vmem [shape: bf16[128,36], index: 0, kind: input, shape index: {}]
  %s1 = inlined_call_operand.vmem [shape: bf16[36,384], index: 1, kind: input, shape index: {}]
  %s2 = inlined_call_operand.vmem [shape: f32[128,384], index: 2, kind: output, shape index: {0}]
  %s3 = inlined_call_operand.vmem [shape: f32[1,384], index: 3, kind: output, shape index: {1}]
  %s4 = inlined_call_operand.vmem [shape: f32[1,384], index: 4, kind: output, shape index: {2}]
  %5 = xla_tuple %s2, %s3, %s4
  %s6 = sld [smem:[#allocation0]]
  $region38: #{inception_b_forward.9} parent=0
    _
  %s8 = ssub.s32 1, %s6
  %s9 = scalar_select 0, %s8, %s6
  // Predicated region
  $region2: #{inception_b_forward.9} parent=0 // pred_check
    _
  $region3: #{inception_b_forward.9} parent=0 // pred_check_branch
    %11 = sbr.rel (0) target = $region5
  $region4: #{inception_b_forward.9} parent=0 // pred_region
    _
  $region5: #{inception_b_forward.9} parent=0 // pred_fallthru
    _
  // Predicated region
  $region6: #{inception_b_forward.9} parent=0 // pred_check
    _
  $region7: #{inception_b_forward.9} parent=0 // pred_check_branch
    %13 = sbr.rel (0) target = $region9
  $region8: #{inception_b_forward.9} parent=0 // pred_region
    _
  $region9: #{inception_b_forward.9} parent=0 // pred_fallthru
    _
  %v15 = vld [vmem:[%s0] sm:$0xf]
  %v16 = vld [vmem:[%s0 + $0x4] sm:$0xf]
  %v17 = vld [vmem:[%s0 + $0x8] sm:$0xf]
  %v18 = vld [vmem:[%s0 + $0xc] sm:$0xf]
  %v19 = vld [vmem:[%s0 + $0x10] sm:$0xf]
  %v20 = vld [vmem:[%s0 + $0x14] sm:$0xf]
  %v21 = vld [vmem:[%s0 + $0x18] sm:$0xf]
  %v22 = vld [vmem:[%s0 + $0x1c] sm:$0xf]
  %v23 = vld [vmem:[%s0 + $0x20] sm:$0xf]
  %v24 = vld [vmem:[%s0 + $0x24] sm:$0xf]
  %v25 = vld [vmem:[%s0 + $0x28] sm:$0xf]
  %v26 = vld [vmem:[%s0 + $0x2c] sm:$0xf]
  %v27 = vld [vmem:[%s0 + $0x30] sm:$0xf]
  %v28 = vld [vmem:[%s0 + $0x34] sm:$0xf]
  %v29 = vld [vmem:[%s0 + $0x38] sm:$0xf]
  %v30 = vld [vmem:[%s0 + $0x3c] sm:$0xf]
  %v31 = vld [vmem:[%s1] sm:$0xff]
  %v32 = vld [vmem:[%s1 + $0x8] sm:$0xf]
  %v33 = vld [vmem:[%s1 + $0xc] sm:$0xff]
  %v34 = vld [vmem:[%s1 + $0x14] sm:$0xf]
  %v35 = vld [vmem:[%s1 + $0x18] sm:$0xff]
  %v36 = vld [vmem:[%s1 + $0x20] sm:$0xf]
  %v37 = vld [vmem:[%s1 + $0x24] sm:$0xff]
  %v38 = vld [vmem:[%s1 + $0x2c] sm:$0xf]
  %v39 = vld [vmem:[%s1 + $0x30] sm:$0x33]
  %v40 = vld [vmem:[%s1 + $0x38] sm:$0x3]
  %v57 = vunpack.c.l.b16 %v15
  %v58 = vunpack.c.l.b16 %v16
  %v59 = vunpack.c.l.b16 %v17
  %v60 = vunpack.c.l.b16 %v18
  %v61 = vunpack.c.l.b16 %v19
  %v62 = vunpack.c.l.b16 %v20
  %v63 = vunpack.c.l.b16 %v21
  %v64 = vunpack.c.l.b16 %v22
  %v65 = vunpack.c.l.b16 %v23
  %v66 = vunpack.c.l.b16 %v24
  %v67 = vunpack.c.l.b16 %v25
  %v68 = vunpack.c.l.b16 %v26
  %v69 = vunpack.c.l.b16 %v27
  %v70 = vunpack.c.l.b16 %v28
  %v71 = vunpack.c.l.b16 %v29
  %v72 = vunpack.c.l.b16 %v30
  %v73 = vpack.c.b16 %v58, %v57
  %v74 = vpack.c.b16 %v60, %v59
  %v75 = vpack.c.b16 %v62, %v61
  %v76 = vpack.c.b16 %v64, %v63
  %v77 = vpack.c.b16 %v66, %v65
  %v78 = vpack.c.b16 %v68, %v67
  %v79 = vpack.c.b16 %v70, %v69
  %v80 = vpack.c.b16 %v72, %v71
  %v91 = vunpack.c.l.b16 %v31
  %v92 = vunpack.c.h.b16 %v31
  %v93 = vunpack.c.l.b16 %v32
  %v94 = vunpack.c.l.b16 %v33
  %v95 = vunpack.c.h.b16 %v33
  %v96 = vunpack.c.l.b16 %v34
  %v97 = vunpack.c.l.b16 %v35
  %v98 = vunpack.c.h.b16 %v35
  %v99 = vunpack.c.l.b16 %v36
  %v100 = vunpack.c.l.b16 %v37
  %v101 = vunpack.c.h.b16 %v37
  %v102 = vunpack.c.l.b16 %v38
  %v103 = vunpack.c.l.b16 %v39
  %v104 = vunpack.c.h.b16 %v39
  %v105 = vunpack.c.l.b16 %v40
  %v106 = vpack.c.b16 %v94, %v91
  %v107 = vpack.c.b16 %v95, %v92
  %v108 = vpack.c.b16 %v96, %v93
  %v109 = vpack.c.b16 %v100, %v97
  %v110 = vpack.c.b16 %v101, %v98
  %v111 = vpack.c.b16 %v102, %v99
  %v112 = vpack.c.b16 %v103, %v103
  %v113 = vpack.c.b16 %v104, %v104
  %v114 = vpack.c.b16 %v105, %v105
  %vm121 = vcmask 293888
  %v123 = vsel %vm121, %v73, 0
  %v126 = vsel %vm121, %v74, 0
  %v129 = vsel %vm121, %v75, 0
  %v132 = vsel %vm121, %v76, 0
  %v135 = vsel %vm121, %v77, 0
  %v138 = vsel %vm121, %v78, 0
  %v141 = vsel %vm121, %v79, 0
  %v144 = vsel %vm121, %v80, 0
  %vm146 = vcmask 1041408
  %v148 = vsel %vm146, %v112, 0
  %v151 = vsel %vm146, %v113, 0
  %v154 = vsel %vm146, %v114, 0
  %156 = vmatprep.subr.bf16.mxu0 %v107
  %157 = vmatpush1.bf16.msra.mxu0 %v106
  %158 = vmatprep.subr.bf16.mxu0 %v110
  %159 = vmatpush1.bf16.msra.mxu0 %v109
  %160 = vmatprep.subr.bf16.mxu0 %v151
  %161 = vmatpush1.bf16.msra.mxu0 %v148
  %162 = vmatprep.subr.bf16.mxu0 0
  %163 = vmatpush1.bf16.msra.mxu0 0
  %164 = vmatprep.subr.bf16.mxu0 0
  %165 = vmatpush1.bf16.msra.mxu0 0
  %166 = vmatprep.subr.bf16.mxu0 0
  %167 = vmatpush1.bf16.msra.mxu0 0
  %168 = vmatprep.subr.bf16.mxu0 0
  %169 = vmatpush1.bf16.msra.mxu0 0
  %170 = vmatprep.subr.bf16.mxu0 0
  %171 = vmatpush1.bf16.msra.mxu0 0
  %172 = vmatprep.subr.bf16.mxu0 0
  %173 = vmatpush1.bf16.msra.mxu0 0
  %174 = vmatprep.subr.bf16.mxu0 0
  %175 = vmatpush1.bf16.msra.mxu0 0
  %176 = vmatprep.subr.bf16.mxu0 0
  %177 = vmatpush1.bf16.msra.mxu0 0
  %178 = vmatprep.subr.bf16.mxu0 0
  %179 = vmatpush1.bf16.msra.mxu0 0
  %180 = vmatprep.subr.bf16.mxu0 0
  %181 = vmatpush1.bf16.msra.mxu0 0
  %182 = vmatprep.subr.bf16.mxu0 0
  %183 = vmatpush1.bf16.msra.mxu0 0
  %184 = vmatprep.subr.bf16.mxu0 0
  %185 = vmatpush1.bf16.msra.mxu0 0
  %186 = vmatprep.subr.bf16.mxu0 0
  %187 = vmatpush1.bf16.msra.mxu0 0
  %188 = vmatprep.mubr.bf16.mxu0 0
  %189 = vmatmul.mubr.bf16.gmra.mrb[0].mxu0 %v123
  %v190 = vpop.f32.mrb[0].mxu0
  %v191 = vadd.f32 0.0, %v190
  %v192 = vpop.f32.mrb[0].mxu0
  %v193 = vadd.f32 0.0, %v192
  %v194 = vpop.f32.mrb[0].mxu0
  %v195 = vadd.f32 0.0, %v194
  %v196 = vpop.f32.mrb[0].mxu0
  %v197 = vadd.f32 0.0, %v196
  %198 = vmatprep.mubr.bf16.mxu0 0
  %199 = vmatmul.mubr.bf16.gmra.mrb[0].mxu0 %v126
  %v200 = vpop.f32.mrb[0].mxu0
  %v201 = vadd.f32 0.0, %v200
  %v202 = vpop.f32.mrb[0].mxu0
  %v203 = vadd.f32 0.0, %v202
  %v204 = vpop.f32.mrb[0].mxu0
  %v205 = vadd.f32 0.0, %v204
  %v206 = vpop.f32.mrb[0].mxu0
  %v207 = vadd.f32 0.0, %v206
  %208 = vmatprep.mubr.bf16.mxu0 0
  %209 = vmatmul.mubr.bf16.gmra.mrb[0].mxu0 %v129
  %v210 = vpop.f32.mrb[0].mxu0
  %v211 = vadd.f32 0.0, %v210
  %v212 = vpop.f32.mrb[0].mxu0
  %v213 = vadd.f32 0.0, %v212
  %v214 = vpop.f32.mrb[0].mxu0
  %v215 = vadd.f32 0.0, %v214
  %v216 = vpop.f32.mrb[0].mxu0
  %v217 = vadd.f32 0.0, %v216
  %218 = vmatprep.mubr.bf16.mxu0 0
  %219 = vmatmul.mubr.bf16.gmra.mrb[0].mxu0 %v132
  %v220 = vpop.f32.mrb[0].mxu0
  %v221 = vadd.f32 0.0, %v220
  %v222 = vpop.f32.mrb[0].mxu0
  %v223 = vadd.f32 0.0, %v222
  %v224 = vpop.f32.mrb[0].mxu0
  %v225 = vadd.f32 0.0, %v224
  %v226 = vpop.f32.mrb[0].mxu0
  %v227 = vadd.f32 0.0, %v226
  %228 = vmatprep.mubr.bf16.mxu0 0
  %229 = vmatmul.mubr.bf16.gmra.mrb[0].mxu0 %v135
  %v230 = vpop.f32.mrb[0].mxu0
  %v231 = vadd.f32 0.0, %v230
  %v232 = vpop.f32.mrb[0].mxu0
  %v233 = vadd.f32 0.0, %v232
  %v234 = vpop.f32.mrb[0].mxu0
  %v235 = vadd.f32 0.0, %v234
  %v236 = vpop.f32.mrb[0].mxu0
  %v237 = vadd.f32 0.0, %v236
  %238 = vmatprep.mubr.bf16.mxu0 0
  %239 = vmatmul.mubr.bf16.gmra.mrb[0].mxu0 %v138
  %v240 = vpop.f32.mrb[0].mxu0
  %v241 = vadd.f32 0.0, %v240
  %v242 = vpop.f32.mrb[0].mxu0
  %v243 = vadd.f32 0.0, %v242
  %v244 = vpop.f32.mrb[0].mxu0
  %v245 = vadd.f32 0.0, %v244
  %v246 = vpop.f32.mrb[0].mxu0
  %v247 = vadd.f32 0.0, %v246
  %248 = vmatprep.mubr.bf16.mxu0 0
  %249 = vmatmul.mubr.bf16.gmra.mrb[0].mxu0 %v141
  %v250 = vpop.f32.mrb[0].mxu0
  %v251 = vadd.f32 0.0, %v250
  %v252 = vpop.f32.mrb[0].mxu0
  %v253 = vadd.f32 0.0, %v252
  %v254 = vpop.f32.mrb[0].mxu0
  %v255 = vadd.f32 0.0, %v254
  %v256 = vpop.f32.mrb[0].mxu0
  %v257 = vadd.f32 0.0, %v256
  %258 = vmatprep.mubr.bf16.mxu0 0
  %259 = vmatmul.mubr.bf16.gmra.mrb[0].mxu0 %v144
  %v260 = vpop.f32.mrb[0].mxu0
  %v261 = vadd.f32 0.0, %v260
  %v262 = vpop.f32.mrb[0].mxu0
  %v263 = vadd.f32 0.0, %v262
  %v264 = vpop.f32.mrb[0].mxu0
  %v265 = vadd.f32 0.0, %v264
  %v266 = vpop.f32.mrb[0].mxu0
  %v267 = vadd.f32 0.0, %v266
  %268 = vdwg.mxu0
  %269 = vmatprep.subr.bf16.mxu0 0
  %270 = vmatpush1.bf16.msra.mxu0 %v108
  %271 = vmatprep.subr.bf16.mxu0 0
  %272 = vmatpush1.bf16.msra.mxu0 %v111
  %273 = vmatprep.subr.bf16.mxu0 0
  %274 = vmatpush1.bf16.msra.mxu0 %v154
  %275 = vmatprep.subr.bf16.mxu0 0
  %276 = vmatpush1.bf16.msra.mxu0 0
  %277 = vmatprep.subr.bf16.mxu0 0
  %278 = vmatpush1.bf16.msra.mxu0 0
  %279 = vmatprep.subr.bf16.mxu0 0
  %280 = vmatpush1.bf16.msra.mxu0 0
  %281 = vmatprep.subr.bf16.mxu0 0
  %282 = vmatpush1.bf16.msra.mxu0 0
  %283 = vmatprep.subr.bf16.mxu0 0
  %284 = vmatpush1.bf16.msra.mxu0 0
  %285 = vmatprep.subr.bf16.mxu0 0
  %286 = vmatpush1.bf16.msra.mxu0 0
  %287 = vmatprep.subr.bf16.mxu0 0
  %288 = vmatpush1.bf16.msra.mxu0 0
  %289 = vmatprep.subr.bf16.mxu0 0
  %290 = vmatpush1.bf16.msra.mxu0 0
  %291 = vmatprep.subr.bf16.mxu0 0
  %292 = vmatpush1.bf16.msra.mxu0 0
  %293 = vmatprep.subr.bf16.mxu0 0
  %294 = vmatpush1.bf16.msra.mxu0 0
  %295 = vmatprep.subr.bf16.mxu0 0
  %296 = vmatpush1.bf16.msra.mxu0 0
  %297 = vmatprep.subr.bf16.mxu0 0
  %298 = vmatpush1.bf16.msra.mxu0 0
  %299 = vmatprep.subr.bf16.mxu0 0
  %300 = vmatpush1.bf16.msra.mxu0 0
  %301 = vmatprep.mubr.bf16.mxu0 0
  %302 = vmatmul.mubr.bf16.gmra.mrb[0].mxu0 %v123
  %v303 = vpop.f32.mrb[0].mxu0
  %v304 = vadd.f32 0.0, %v303
  %v305 = vpop.f32.mrb[0].mxu0
  %v306 = vpop.f32.mrb[0].mxu0
  %v307 = vadd.f32 0.0, %v306
  %v308 = vpop.f32.mrb[0].mxu0
  %309 = vmatprep.mubr.bf16.mxu0 0
  %310 = vmatmul.mubr.bf16.gmra.mrb[0].mxu0 %v126
  %v311 = vpop.f32.mrb[0].mxu0
  %v312 = vadd.f32 0.0, %v311
  %v313 = vpop.f32.mrb[0].mxu0
  %v314 = vpop.f32.mrb[0].mxu0
  %v315 = vadd.f32 0.0, %v314
  %v316 = vpop.f32.mrb[0].mxu0
  %317 = vmatprep.mubr.bf16.mxu0 0
  %318 = vmatmul.mubr.bf16.gmra.mrb[0].mxu0 %v129
  %v319 = vpop.f32.mrb[0].mxu0
  %v320 = vadd.f32 0.0, %v319
  %v321 = vpop.f32.mrb[0].mxu0
  %v322 = vpop.f32.mrb[0].mxu0
  %v323 = vadd.f32 0.0, %v322
  %v324 = vpop.f32.mrb[0].mxu0
  %325 = vmatprep.mubr.bf16.mxu0 0
  %326 = vmatmul.mubr.bf16.gmra.mrb[0].mxu0 %v132
  %v327 = vpop.f32.mrb[0].mxu0
  %v328 = vadd.f32 0.0, %v327
  %v329 = vpop.f32.mrb[0].mxu0
  %v330 = vpop.f32.mrb[0].mxu0
  %v331 = vadd.f32 0.0, %v330
  %v332 = vpop.f32.mrb[0].mxu0
  %333 = vmatprep.mubr.bf16.mxu0 0
  %334 = vmatmul.mubr.bf16.gmra.mrb[0].mxu0 %v135
  %v335 = vpop.f32.mrb[0].mxu0
  %v336 = vadd.f32 0.0, %v335
  %v337 = vpop.f32.mrb[0].mxu0
  %v338 = vpop.f32.mrb[0].mxu0
  %v339 = vadd.f32 0.0, %v338
  %v340 = vpop.f32.mrb[0].mxu0
  %341 = vmatprep.mubr.bf16.mxu0 0
  %342 = vmatmul.mubr.bf16.gmra.mrb[0].mxu0 %v138
  %v343 = vpop.f32.mrb[0].mxu0
  %v344 = vadd.f32 0.0, %v343
  %v345 = vpop.f32.mrb[0].mxu0
  %v346 = vpop.f32.mrb[0].mxu0
  %v347 = vadd.f32 0.0, %v346
  %v348 = vpop.f32.mrb[0].mxu0
  %349 = vmatprep.mubr.bf16.mxu0 0
  %350 = vmatmul.mubr.bf16.gmra.mrb[0].mxu0 %v141
  %v351 = vpop.f32.mrb[0].mxu0
  %v352 = vadd.f32 0.0, %v351
  %v353 = vpop.f32.mrb[0].mxu0
  %v354 = vpop.f32.mrb[0].mxu0
  %v355 = vadd.f32 0.0, %v354
  %v356 = vpop.f32.mrb[0].mxu0
  %357 = vmatprep.mubr.bf16.mxu0 0
  %358 = vmatmul.mubr.bf16.gmra.mrb[0].mxu0 %v144
  %v359 = vpop.f32.mrb[0].mxu0
  %v360 = vadd.f32 0.0, %v359
  %v361 = vpop.f32.mrb[0].mxu0
  %v362 = vpop.f32.mrb[0].mxu0
  %v363 = vadd.f32 0.0, %v362
  %v364 = vpop.f32.mrb[0].mxu0
  %365 = vdwg.mxu0
  %366 = vst [vmem:[%s2] sm:$0xff] %v191
  %367 = vst [vmem:[%s2 + $0x8] sm:$0xff] %v193
  %368 = vst [vmem:[%s2 + $0x10] sm:$0xff] %v304
  %369 = vst [vmem:[%s2 + $0x18] sm:$0xff] %v195
  %370 = vst [vmem:[%s2 + $0x20] sm:$0xff] %v197
  %371 = vst [vmem:[%s2 + $0x28] sm:$0xff] %v307
  %372 = vst [vmem:[%s2 + $0x30] sm:$0xff] %v201
  %373 = vst [vmem:[%s2 + $0x38] sm:$0xff] %v203
  %374 = vst [vmem:[%s2 + $0x40] sm:$0xff] %v312
  %375 = vst [vmem:[%s2 + $0x48] sm:$0xff] %v205
  %376 = vst [vmem:[%s2 + $0x50] sm:$0xff] %v207
  %377 = vst [vmem:[%s2 + $0x58] sm:$0xff] %v315
  %378 = vst [vmem:[%s2 + $0x60] sm:$0xff] %v211
  %379 = vst [vmem:[%s2 + $0x68] sm:$0xff] %v213
  %380 = vst [vmem:[%s2 + $0x70] sm:$0xff] %v320
  %381 = vst [vmem:[%s2 + $0x78] sm:$0xff] %v215
  %382 = vst [vmem:[%s2 + $0x80] sm:$0xff] %v217
  %383 = vst [vmem:[%s2 + $0x88] sm:$0xff] %v323
  %384 = vst [vmem:[%s2 + $0x90] sm:$0xff] %v221
  %385 = vst [vmem:[%s2 + $0x98] sm:$0xff] %v223
  %386 = vst [vmem:[%s2 + $0xa0] sm:$0xff] %v328
  %387 = vst [vmem:[%s2 + $0xa8] sm:$0xff] %v225
  %388 = vst [vmem:[%s2 + $0xb0] sm:$0xff] %v227
  %389 = vst [vmem:[%s2 + $0xb8] sm:$0xff] %v331
  %390 = vst [vmem:[%s2 + $0xc0] sm:$0xff] %v231
  %391 = vst [vmem:[%s2 + $0xc8] sm:$0xff] %v233
  %392 = vst [vmem:[%s2 + $0xd0] sm:$0xff] %v336
  %393 = vst [vmem:[%s2 + $0xd8] sm:$0xff] %v235
  %394 = vst [vmem:[%s2 + $0xe0] sm:$0xff] %v237
  %395 = vst [vmem:[%s2 + $0xe8] sm:$0xff] %v339
  %396 = vst [vmem:[%s2 + $0xf0] sm:$0xff] %v241
  %397 = vst [vmem:[%s2 + $0xf8] sm:$0xff] %v243
  %398 = vst [vmem:[%s2 + $0x100] sm:$0xff] %v344
  %399 = vst [vmem:[%s2 + $0x108] sm:$0xff] %v245
  %400 = vst [vmem:[%s2 + $0x110] sm:$0xff] %v247
  %401 = vst [vmem:[%s2 + $0x118] sm:$0xff] %v347
  %402 = vst [vmem:[%s2 + $0x120] sm:$0xff] %v251
  %403 = vst [vmem:[%s2 + $0x128] sm:$0xff] %v253
  %404 = vst [vmem:[%s2 + $0x130] sm:$0xff] %v352
  %405 = vst [vmem:[%s2 + $0x138] sm:$0xff] %v255
  %406 = vst [vmem:[%s2 + $0x140] sm:$0xff] %v257
  %407 = vst [vmem:[%s2 + $0x148] sm:$0xff] %v355
  %408 = vst [vmem:[%s2 + $0x150] sm:$0xff] %v261
  %409 = vst [vmem:[%s2 + $0x158] sm:$0xff] %v263
  %410 = vst [vmem:[%s2 + $0x160] sm:$0xff] %v360
  %411 = vst [vmem:[%s2 + $0x168] sm:$0xff] %v265
  %412 = vst [vmem:[%s2 + $0x170] sm:$0xff] %v267
  %413 = vst [vmem:[%s2 + $0x178] sm:$0xff] %v363
  %p414 = scmp.eq.s32.totalorder 0, 0
  // Predicated region
  $region10: #{inception_b_forward.9} parent=0 // pred_check
    %p415 = pneg %p414
  $region11: #{inception_b_forward.9} parent=0 // pred_check_branch
    %417 = sbr.rel (%p415) target = $region13
  $region12: #{inception_b_forward.9} parent=0 // pred_region
    %v418 = vlaneseq
    %vm419 = vcmp.ge.s32.totalorder %v418, 0
    %vm420 = vcmp.lt.s32.totalorder %v418, 384
    %vm421 = vmand %vm419, %vm420
    %422 = vst.msk [vmem:[%s3] sm:$0x7] %vm421, 0.0
    %423 = vst.msk [vmem:[%s4] sm:$0x7] %vm421, 0.0
  $region13: #{inception_b_forward.9} parent=0 // pred_fallthru
    _
  %v424 = vld [vmem:[%s3] sm:$0x7]
  %v425 = vadd.f32 %v191, %v195
  %v426 = vadd.f32 %v425, %v201
  %v427 = vadd.f32 %v426, %v205
  %v428 = vadd.f32 %v427, %v211
  %v429 = vadd.f32 %v428, %v215
  %v430 = vadd.f32 %v429, %v221
  %v431 = vadd.f32 %v430, %v225
  %v432 = vadd.f32 %v431, %v231
  %v433 = vadd.f32 %v432, %v235
  %v434 = vadd.f32 %v433, %v241
  %v435 = vadd.f32 %v434, %v245
  %v436 = vadd.f32 %v435, %v251
  %v437 = vadd.f32 %v436, %v255
  %v438 = vadd.f32 %v437, %v261
  %v439 = vadd.f32 %v438, %v265
  %v440 = vrot.slane %v439, 4
  %v441 = vadd.f32 %v439, %v440
  %v442 = vrot.slane %v441, 2
  %v443 = vadd.f32 %v441, %v442
  %v444 = vrot.slane %v443, 1
  %v445 = vadd.f32 %v443, %v444
  %v446 = vadd.f32 %v193, %v197
  %v447 = vadd.f32 %v446, %v203
  %v448 = vadd.f32 %v447, %v207
  %v449 = vadd.f32 %v448, %v213
  %v450 = vadd.f32 %v449, %v217
  %v451 = vadd.f32 %v450, %v223
  %v452 = vadd.f32 %v451, %v227
  %v453 = vadd.f32 %v452, %v233
  %v454 = vadd.f32 %v453, %v237
  %v455 = vadd.f32 %v454, %v243
  %v456 = vadd.f32 %v455, %v247
  %v457 = vadd.f32 %v456, %v253
  %v458 = vadd.f32 %v457, %v257
  %v459 = vadd.f32 %v458, %v263
  %v460 = vadd.f32 %v459, %v267
  %v461 = vrot.slane %v460, 4
  %v462 = vadd.f32 %v460, %v461
  %v463 = vrot.slane %v462, 2
  %v464 = vadd.f32 %v462, %v463
  %v465 = vrot.slane %v464, 1
  %v466 = vadd.f32 %v464, %v465
  %v467 = vadd.f32 %v304, %v307
  %v468 = vadd.f32 %v467, %v312
  %v469 = vadd.f32 %v468, %v315
  %v470 = vadd.f32 %v469, %v320
  %v471 = vadd.f32 %v470, %v323
  %v472 = vadd.f32 %v471, %v328
  %v473 = vadd.f32 %v472, %v331
  %v474 = vadd.f32 %v473, %v336
  %v475 = vadd.f32 %v474, %v339
  %v476 = vadd.f32 %v475, %v344
  %v477 = vadd.f32 %v476, %v347
  %v478 = vadd.f32 %v477, %v352
  %v479 = vadd.f32 %v478, %v355
  %v480 = vadd.f32 %v479, %v360
  %v481 = vadd.f32 %v480, %v363
  %v482 = vrot.slane %v481, 4
  %v483 = vadd.f32 %v481, %v482
  %v484 = vrot.slane %v483, 2
  %v485 = vadd.f32 %v483, %v484
  %v486 = vrot.slane %v485, 1
  %v487 = vadd.f32 %v485, %v486
  %v491 = vcombine.low %v445, %v466
  %v493 = vunpack.c.l.s4 1966171168
  %v494 = vunpack.c.0.s8 %v493
  %v495 = vlaneseq
  %v496 = vshrl.u32 %v495, 7
  %v497 = vsub.s32 %v494, %v496
  %v498 = vrot.slane %v491, %v497
  %v500 = vunpack.c.l.s4 1966171168
  %v501 = vunpack.c.0.s8 %v500
  %v502 = vlaneseq
  %v503 = vshrl.u32 %v502, 7
  %v504 = vsub.s32 %v501, %v503
  %v505 = vrot.slane %v487, %v504
  %v506 = vcombine.low %v498, %v505
  %v508 = vunpack.c.l.s4 1966171168
  %v509 = vunpack.c.0.s8 %v508
  %v510 = vlaneseq
  %v511 = vshrl.u32 %v510, 7
  %v512 = vsub.s32 %v509, %v511
  %v513 = vrot.slane %v506, %v512
  %v515 = vadd.f32 %v424, %v513
  %v516 = vlaneseq
  %vm517 = vcmp.ge.s32.totalorder %v516, 0
  %vm518 = vcmp.lt.s32.totalorder %v516, 384
  %vm519 = vmand %vm517, %vm518
  %520 = vst.msk [vmem:[%s3] sm:$0x7] %vm519, %v515
  %v521 = vld [vmem:[%s4] sm:$0x7]
  %v522 = vmul.f32 %v191, %v191
  %v523 = vmul.f32 %v193, %v193
  %v524 = vmul.f32 %v304, %v304
  %v525 = vmul.f32 %v195, %v195
  %v526 = vmul.f32 %v197, %v197
  %v527 = vmul.f32 %v307, %v307
  %v528 = vmul.f32 %v201, %v201
  %v529 = vmul.f32 %v203, %v203
  %v530 = vmul.f32 %v312, %v312
  %v531 = vmul.f32 %v205, %v205
  %v532 = vmul.f32 %v207, %v207
  %v533 = vmul.f32 %v315, %v315
  %v534 = vmul.f32 %v211, %v211
  %v535 = vmul.f32 %v213, %v213
  %v536 = vmul.f32 %v320, %v320
  %v537 = vmul.f32 %v215, %v215
  %v538 = vmul.f32 %v217, %v217
  %v539 = vmul.f32 %v323, %v323
  %v540 = vmul.f32 %v221, %v221
  %v541 = vmul.f32 %v223, %v223
  %v542 = vmul.f32 %v328, %v328
  %v543 = vmul.f32 %v225, %v225
  %v544 = vmul.f32 %v227, %v227
  %v545 = vmul.f32 %v331, %v331
  %v546 = vmul.f32 %v231, %v231
  %v547 = vmul.f32 %v233, %v233
  %v548 = vmul.f32 %v336, %v336
  %v549 = vmul.f32 %v235, %v235
  %v550 = vmul.f32 %v237, %v237
  %v551 = vmul.f32 %v339, %v339
  %v552 = vmul.f32 %v241, %v241
  %v553 = vmul.f32 %v243, %v243
  %v554 = vmul.f32 %v344, %v344
  %v555 = vmul.f32 %v245, %v245
  %v556 = vmul.f32 %v247, %v247
  %v557 = vmul.f32 %v347, %v347
  %v558 = vmul.f32 %v251, %v251
  %v559 = vmul.f32 %v253, %v253
  %v560 = vmul.f32 %v352, %v352
  %v561 = vmul.f32 %v255, %v255
  %v562 = vmul.f32 %v257, %v257
  %v563 = vmul.f32 %v355, %v355
  %v564 = vmul.f32 %v261, %v261
  %v565 = vmul.f32 %v263, %v263
  %v566 = vmul.f32 %v360, %v360
  %v567 = vmul.f32 %v265, %v265
  %v568 = vmul.f32 %v267, %v267
  %v569 = vmul.f32 %v363, %v363
  %v570 = vadd.f32 %v522, %v525
  %v571 = vadd.f32 %v570, %v528
  %v572 = vadd.f32 %v571, %v531
  %v573 = vadd.f32 %v572, %v534
  %v574 = vadd.f32 %v573, %v537
  %v575 = vadd.f32 %v574, %v540
  %v576 = vadd.f32 %v575, %v543
  %v577 = vadd.f32 %v576, %v546
  %v578 = vadd.f32 %v577, %v549
  %v579 = vadd.f32 %v578, %v552
  %v580 = vadd.f32 %v579, %v555
  %v581 = vadd.f32 %v580, %v558
  %v582 = vadd.f32 %v581, %v561
  %v583 = vadd.f32 %v582, %v564
  %v584 = vadd.f32 %v583, %v567
  %v585 = vrot.slane %v584, 4
  %v586 = vadd.f32 %v584, %v585
  %v587 = vrot.slane %v586, 2
  %v588 = vadd.f32 %v586, %v587
  %v589 = vrot.slane %v588, 1
  %v590 = vadd.f32 %v588, %v589
  %v591 = vadd.f32 %v523, %v526
  %v592 = vadd.f32 %v591, %v529
  %v593 = vadd.f32 %v592, %v532
  %v594 = vadd.f32 %v593, %v535
  %v595 = vadd.f32 %v594, %v538
  %v596 = vadd.f32 %v595, %v541
  %v597 = vadd.f32 %v596, %v544
  %v598 = vadd.f32 %v597, %v547
  %v599 = vadd.f32 %v598, %v550
  %v600 = vadd.f32 %v599, %v553
  %v601 = vadd.f32 %v600, %v556
  %v602 = vadd.f32 %v601, %v559
  %v603 = vadd.f32 %v602, %v562
  %v604 = vadd.f32 %v603, %v565
  %v605 = vadd.f32 %v604, %v568
  %v606 = vrot.slane %v605, 4
  %v607 = vadd.f32 %v605, %v606
  %v608 = vrot.slane %v607, 2
  %v609 = vadd.f32 %v607, %v608
  %v610 = vrot.slane %v609, 1
  %v611 = vadd.f32 %v609, %v610
  %v612 = vadd.f32 %v524, %v527
  %v613 = vadd.f32 %v612, %v530
  %v614 = vadd.f32 %v613, %v533
  %v615 = vadd.f32 %v614, %v536
  %v616 = vadd.f32 %v615, %v539
  %v617 = vadd.f32 %v616, %v542
  %v618 = vadd.f32 %v617, %v545
  %v619 = vadd.f32 %v618, %v548
  %v620 = vadd.f32 %v619, %v551
  %v621 = vadd.f32 %v620, %v554
  %v622 = vadd.f32 %v621, %v557
  %v623 = vadd.f32 %v622, %v560
  %v624 = vadd.f32 %v623, %v563
  %v625 = vadd.f32 %v624, %v566
  %v626 = vadd.f32 %v625, %v569
  %v627 = vrot.slane %v626, 4
  %v628 = vadd.f32 %v626, %v627
  %v629 = vrot.slane %v628, 2
  %v630 = vadd.f32 %v628, %v629
  %v631 = vrot.slane %v630, 1
  %v632 = vadd.f32 %v630, %v631
  %v636 = vcombine.low %v590, %v611
  %v638 = vunpack.c.l.s4 1966171168
  %v639 = vunpack.c.0.s8 %v638
  %v640 = vlaneseq
  %v641 = vshrl.u32 %v640, 7
  %v642 = vsub.s32 %v639, %v641
  %v643 = vrot.slane %v636, %v642
  %v645 = vunpack.c.l.s4 1966171168
  %v646 = vunpack.c.0.s8 %v645
  %v647 = vlaneseq
  %v648 = vshrl.u32 %v647, 7
  %v649 = vsub.s32 %v646, %v648
  %v650 = vrot.slane %v632, %v649
  %v651 = vcombine.low %v643, %v650
  %v653 = vunpack.c.l.s4 1966171168
  %v654 = vunpack.c.0.s8 %v653
  %v655 = vlaneseq
  %v656 = vshrl.u32 %v655, 7
  %v657 = vsub.s32 %v654, %v656
  %v658 = vrot.slane %v651, %v657
  %v660 = vadd.f32 %v521, %v658
  %661 = vst.msk [vmem:[%s4] sm:$0x7] %vm519, %v660
  // Predicated region
  $region14: #{inception_b_forward.9} parent=0 // pred_check
    _
  $region15: #{inception_b_forward.9} parent=0 // pred_check_branch
    %663 = sbr.rel (0) target = $region17
  $region16: #{inception_b_forward.9} parent=0 // pred_region
    _
  $region17: #{inception_b_forward.9} parent=0 // pred_fallthru
    _
  // Predicated region
  $region18: #{inception_b_forward.9} parent=0 // pred_check
    _
  $region19: #{inception_b_forward.9} parent=0 // pred_check_branch
    %665 = sbr.rel (0) target = $region21
  $region20: #{inception_b_forward.9} parent=0 // pred_region
    _
  $region21: #{inception_b_forward.9} parent=0 // pred_fallthru
    _
  // Predicated region
  $region22: #{inception_b_forward.9} parent=0 // pred_check
    _
  $region23: #{inception_b_forward.9} parent=0 // pred_check_branch
    %667 = sbr.rel (0) target = $region25
  $region24: #{inception_b_forward.9} parent=0 // pred_region
    _
  $region25: #{inception_b_forward.9} parent=0 // pred_fallthru
    _
  // Predicated region
  $region26: #{inception_b_forward.9} parent=0 // pred_check
    _
  $region27: #{inception_b_forward.9} parent=0 // pred_check_branch
    %669 = sbr.rel (0) target = $region29
  $region28: #{inception_b_forward.9} parent=0 // pred_region
    _
  $region29: #{inception_b_forward.9} parent=0 // pred_fallthru
    _
  // Predicated region
  $region30: #{inception_b_forward.9} parent=0 // pred_check
    _
  $region31: #{inception_b_forward.9} parent=0 // pred_check_branch
    %671 = sbr.rel (0) target = $region33
  $region32: #{inception_b_forward.9} parent=0 // pred_region
    _
  $region33: #{inception_b_forward.9} parent=0 // pred_fallthru
    _
  // Predicated region
  $region34: #{inception_b_forward.9} parent=0 // pred_check
    _
  $region35: #{inception_b_forward.9} parent=0 // pred_check_branch
    %673 = sbr.rel (0) target = $region37
  $region36: #{inception_b_forward.9} parent=0 // pred_region
    _
  $region37: #{inception_b_forward.9} parent=0 // pred_fallthru
    _

// kernel: inception_b_forward.10
$region0: #{inception_b_forward.10}
  #allocation0 [shape = 'u32[]', space=smem, size = 0x4, offset = 0x4, fixed_abs, tag = 'smem constant byte address 0x4 - core index']
  #allocation1 [shape = 'u32[144,128]{1,0:T(1,128)}', space=vmem, size = 0x12000, scoped, tag = 'internal scratch']
  %s0 = inlined_call_operand.vmem [shape: f32[128,384], index: 0, kind: input, shape index: {}]
  %s1 = inlined_call_operand.vmem [shape: f32[1,384], index: 1, kind: input, shape index: {}]
  %s2 = inlined_call_operand.vmem [shape: f32[1,384], index: 2, kind: input, shape index: {}]
  %s3 = inlined_call_operand.vmem [shape: f32[128,384], index: 3, kind: output, shape index: {}]
  %s4 = sld [smem:[#allocation0]]
  $region22: #{inception_b_forward.10} parent=0
    _
  %s6 = ssub.s32 1, %s4
  %s7 = scalar_select 0, %s6, %s4
  // Predicated region
  $region2: #{inception_b_forward.10} parent=0 // pred_check
    _
  $region3: #{inception_b_forward.10} parent=0 // pred_check_branch
    %9 = sbr.rel (0) target = $region5
  $region4: #{inception_b_forward.10} parent=0 // pred_region
    _
  $region5: #{inception_b_forward.10} parent=0 // pred_fallthru
    _
  // Predicated region
  $region6: #{inception_b_forward.10} parent=0 // pred_check
    _
  $region7: #{inception_b_forward.10} parent=0 // pred_check_branch
    %11 = sbr.rel (0) target = $region9
  $region8: #{inception_b_forward.10} parent=0 // pred_region
    _
  $region9: #{inception_b_forward.10} parent=0 // pred_fallthru
    _
  // Predicated region
  $region10: #{inception_b_forward.10} parent=0 // pred_check
    _
  $region11: #{inception_b_forward.10} parent=0 // pred_check_branch
    %13 = sbr.rel (0) target = $region13
  $region12: #{inception_b_forward.10} parent=0 // pred_region
    _
  $region13: #{inception_b_forward.10} parent=0 // pred_fallthru
    _
  %v14 = vld [vmem:[%s0] sm:$0xff]
  %v15 = vld [vmem:[%s0 + $0x8] sm:$0xff]
  %v16 = vld [vmem:[%s0 + $0x10] sm:$0xff]
  %v17 = vld [vmem:[%s0 + $0x18] sm:$0xff]
  %v18 = vld [vmem:[%s0 + $0x20] sm:$0xff]
  %v19 = vld [vmem:[%s0 + $0x28] sm:$0xff]
  %v20 = vld [vmem:[%s0 + $0x30] sm:$0xff]
  %v21 = vld [vmem:[%s0 + $0x38] sm:$0xff]
  %v22 = vld [vmem:[%s0 + $0x40] sm:$0xff]
  %v23 = vld [vmem:[%s0 + $0x48] sm:$0xff]
  %v24 = vld [vmem:[%s0 + $0x50] sm:$0xff]
  %v25 = vld [vmem:[%s0 + $0x58] sm:$0xff]
  %v26 = vld [vmem:[%s0 + $0x60] sm:$0xff]
  %v27 = vld [vmem:[%s0 + $0x68] sm:$0xff]
  %v28 = vld [vmem:[%s0 + $0x70] sm:$0xff]
  %v29 = vld [vmem:[%s0 + $0x78] sm:$0xff]
  %v30 = vld [vmem:[%s0 + $0x80] sm:$0xff]
  %v31 = vld [vmem:[%s0 + $0x88] sm:$0xff]
  %v32 = vld [vmem:[%s0 + $0x90] sm:$0xff]
  %v33 = vld [vmem:[%s0 + $0x98] sm:$0xff]
  %v34 = vld [vmem:[%s0 + $0xa0] sm:$0xff]
  %v35 = vld [vmem:[%s0 + $0xa8] sm:$0xff]
  %v36 = vld [vmem:[%s0 + $0xb0] sm:$0xff]
  %v37 = vld [vmem:[%s0 + $0xb8] sm:$0xff]
  %v38 = vld [vmem:[%s0 + $0xc0] sm:$0xff]
  %v39 = vld [vmem:[%s0 + $0xc8] sm:$0xff]
  %v40 = vld [vmem:[%s0 + $0xd0] sm:$0xff]
  %v41 = vld [vmem:[%s0 + $0xd8] sm:$0xff]
  %v42 = vld [vmem:[%s0 + $0xe0] sm:$0xff]
  %v43 = vld [vmem:[%s0 + $0xe8] sm:$0xff]
  %v44 = vld [vmem:[%s0 + $0xf0] sm:$0xff]
  %v45 = vld [vmem:[%s0 + $0xf8] sm:$0xff]
  %v46 = vld [vmem:[%s0 + $0x100] sm:$0xff]
  %v47 = vld [vmem:[%s0 + $0x108] sm:$0xff]
  %v48 = vld [vmem:[%s0 + $0x110] sm:$0xff]
  %v49 = vld [vmem:[%s0 + $0x118] sm:$0xff]
  %v50 = vld [vmem:[%s0 + $0x120] sm:$0xff]
  %v51 = vld [vmem:[%s0 + $0x128] sm:$0xff]
  %v52 = vld [vmem:[%s0 + $0x130] sm:$0xff]
  %v53 = vld [vmem:[%s0 + $0x138] sm:$0xff]
  %v54 = vld [vmem:[%s0 + $0x140] sm:$0xff]
  %v55 = vld [vmem:[%s0 + $0x148] sm:$0xff]
  %v56 = vld [vmem:[%s0 + $0x150] sm:$0xff]
  %v57 = vld [vmem:[%s0 + $0x158] sm:$0xff]
  %v58 = vld [vmem:[%s0 + $0x160] sm:$0xff]
  %v59 = vld [vmem:[%s0 + $0x168] sm:$0xff]
  %v60 = vld [vmem:[%s0 + $0x170] sm:$0xff]
  %v61 = vld [vmem:[%s0 + $0x178] sm:$0xff]
  %v62 = vld [vmem:[%s1] sm:$0x7]
  %v64 = vlaneseq
  %v65 = vshrl.u32 %v64, 7
  %v66 = vsub.s32 0, %v65
  %v67 = vrot.slane %v62, %v66
  %v68 = vlaneseq
  %v69 = vshrl.u32 %v68, 7
  %v70 = vsub.s32 1, %v69
  %v71 = vrot.slane %v62, %v70
  %v72 = vlaneseq
  %v73 = vshrl.u32 %v72, 7
  %v74 = vsub.s32 2, %v73
  %v75 = vrot.slane %v62, %v74
  %v79 = vmul.f32 %v14, %v67
  %v80 = vmul.f32 %v15, %v71
  %v81 = vmul.f32 %v16, %v75
  %v82 = vmul.f32 %v17, %v67
  %v83 = vmul.f32 %v18, %v71
  %v84 = vmul.f32 %v19, %v75
  %v85 = vmul.f32 %v20, %v67
  %v86 = vmul.f32 %v21, %v71
  %v87 = vmul.f32 %v22, %v75
  %v88 = vmul.f32 %v23, %v67
  %v89 = vmul.f32 %v24, %v71
  %v90 = vmul.f32 %v25, %v75
  %v91 = vmul.f32 %v26, %v67
  %v92 = vmul.f32 %v27, %v71
  %v93 = vmul.f32 %v28, %v75
  %v94 = vmul.f32 %v29, %v67
  %v95 = vmul.f32 %v30, %v71
  %v96 = vmul.f32 %v31, %v75
  %v97 = vmul.f32 %v32, %v67
  %v98 = vmul.f32 %v33, %v71
  %v99 = vmul.f32 %v34, %v75
  %v100 = vmul.f32 %v35, %v67
  %v101 = vmul.f32 %v36, %v71
  %v102 = vmul.f32 %v37, %v75
  %v103 = vmul.f32 %v38, %v67
  %v104 = vmul.f32 %v39, %v71
  %v105 = vmul.f32 %v40, %v75
  %v106 = vmul.f32 %v41, %v67
  %v107 = vmul.f32 %v42, %v71
  %v108 = vmul.f32 %v43, %v75
  %v109 = vmul.f32 %v44, %v67
  %v110 = vmul.f32 %v45, %v71
  %v111 = vmul.f32 %v46, %v75
  %v112 = vmul.f32 %v47, %v67
  %v113 = vmul.f32 %v48, %v71
  %v114 = vmul.f32 %v49, %v75
  %v115 = vmul.f32 %v50, %v67
  %v116 = vmul.f32 %v51, %v71
  %v117 = vmul.f32 %v52, %v75
  %v118 = vmul.f32 %v53, %v67
  %v119 = vmul.f32 %v54, %v71
  %v120 = vmul.f32 %v55, %v75
  %v121 = vmul.f32 %v56, %v67
  %v122 = vmul.f32 %v57, %v71
  %v123 = vmul.f32 %v58, %v75
  %v124 = vmul.f32 %v59, %v67
  %v125 = vmul.f32 %v60, %v71
  %v126 = vmul.f32 %v61, %v75
  %v127 = vld [vmem:[%s2] sm:$0x7]
  %v129 = vlaneseq
  %v130 = vshrl.u32 %v129, 7
  %v131 = vsub.s32 0, %v130
  %v132 = vrot.slane %v127, %v131
  %v133 = vlaneseq
  %v134 = vshrl.u32 %v133, 7
  %v135 = vsub.s32 1, %v134
  %v136 = vrot.slane %v127, %v135
  %v137 = vlaneseq
  %v138 = vshrl.u32 %v137, 7
  %v139 = vsub.s32 2, %v138
  %v140 = vrot.slane %v127, %v139
  %v144 = vadd.f32 %v79, %v132
  %v145 = vadd.f32 %v80, %v136
  %v146 = vadd.f32 %v81, %v140
  %v147 = vadd.f32 %v82, %v132
  %v148 = vadd.f32 %v83, %v136
  %v149 = vadd.f32 %v84, %v140
  %v150 = vadd.f32 %v85, %v132
  %v151 = vadd.f32 %v86, %v136
  %v152 = vadd.f32 %v87, %v140
  %v153 = vadd.f32 %v88, %v132
  %v154 = vadd.f32 %v89, %v136
  %v155 = vadd.f32 %v90, %v140
  %v156 = vadd.f32 %v91, %v132
  %v157 = vadd.f32 %v92, %v136
  %v158 = vadd.f32 %v93, %v140
  %v159 = vadd.f32 %v94, %v132
  %v160 = vadd.f32 %v95, %v136
  %v161 = vadd.f32 %v96, %v140
  %v162 = vadd.f32 %v97, %v132
  %v163 = vadd.f32 %v98, %v136
  %v164 = vadd.f32 %v99, %v140
  %v165 = vadd.f32 %v100, %v132
  %v166 = vadd.f32 %v101, %v136
  %v167 = vadd.f32 %v102, %v140
  %v168 = vadd.f32 %v103, %v132
  %v169 = vadd.f32 %v104, %v136
  %v170 = vadd.f32 %v105, %v140
  %v171 = vadd.f32 %v106, %v132
  %v172 = vadd.f32 %v107, %v136
  %v173 = vadd.f32 %v108, %v140
  %v174 = vadd.f32 %v109, %v132
  %v175 = vadd.f32 %v110, %v136
  %v176 = vadd.f32 %v111, %v140
  %v177 = vadd.f32 %v112, %v132
  %v178 = vadd.f32 %v113, %v136
  %v179 = vadd.f32 %v114, %v140
  %v180 = vadd.f32 %v115, %v132
  %v181 = vadd.f32 %v116, %v136
  %v182 = vadd.f32 %v117, %v140
  %v183 = vadd.f32 %v118, %v132
  %v184 = vadd.f32 %v119, %v136
  %v185 = vadd.f32 %v120, %v140
  %v186 = vadd.f32 %v121, %v132
  %v187 = vadd.f32 %v122, %v136
  %v188 = vadd.f32 %v123, %v140
  %v189 = vadd.f32 %v124, %v132
  %v190 = vadd.f32 %v125, %v136
  %v191 = vadd.f32 %v126, %v140
  %v192 = vmax.f32 %v144, 0.0
  %v193 = vmax.f32 %v145, 0.0
  %v194 = vmax.f32 %v146, 0.0
  %v195 = vmax.f32 %v147, 0.0
  %v196 = vmax.f32 %v148, 0.0
  %v197 = vmax.f32 %v149, 0.0
  %v198 = vmax.f32 %v150, 0.0
  %v199 = vmax.f32 %v151, 0.0
  %v200 = vmax.f32 %v152, 0.0
  %v201 = vmax.f32 %v153, 0.0
  %v202 = vmax.f32 %v154, 0.0
  %v203 = vmax.f32 %v155, 0.0
  %v204 = vmax.f32 %v156, 0.0
  %v205 = vmax.f32 %v157, 0.0
  %v206 = vmax.f32 %v158, 0.0
  %v207 = vmax.f32 %v159, 0.0
  %v208 = vmax.f32 %v160, 0.0
  %v209 = vmax.f32 %v161, 0.0
  %v210 = vmax.f32 %v162, 0.0
  %v211 = vmax.f32 %v163, 0.0
  %v212 = vmax.f32 %v164, 0.0
  %v213 = vmax.f32 %v165, 0.0
  %v214 = vmax.f32 %v166, 0.0
  %v215 = vmax.f32 %v167, 0.0
  %v216 = vmax.f32 %v168, 0.0
  %v217 = vmax.f32 %v169, 0.0
  %v218 = vmax.f32 %v170, 0.0
  %v219 = vmax.f32 %v171, 0.0
  %v220 = vmax.f32 %v172, 0.0
  %v221 = vmax.f32 %v173, 0.0
  %v222 = vmax.f32 %v174, 0.0
  %v223 = vmax.f32 %v175, 0.0
  %v224 = vmax.f32 %v176, 0.0
  %v225 = vmax.f32 %v177, 0.0
  %v226 = vmax.f32 %v178, 0.0
  %v227 = vmax.f32 %v179, 0.0
  %v228 = vmax.f32 %v180, 0.0
  %v229 = vmax.f32 %v181, 0.0
  %v230 = vmax.f32 %v182, 0.0
  %v231 = vmax.f32 %v183, 0.0
  %v232 = vmax.f32 %v184, 0.0
  %v233 = vmax.f32 %v185, 0.0
  %v234 = vmax.f32 %v186, 0.0
  %v235 = vmax.f32 %v187, 0.0
  %v236 = vmax.f32 %v188, 0.0
  %v237 = vmax.f32 %v189, 0.0
  %v238 = vmax.f32 %v190, 0.0
  %v239 = vmax.f32 %v191, 0.0
  %240 = vst [vmem:[%s3] sm:$0xff] %v192
  %241 = vst [vmem:[%s3 + $0x8] sm:$0xff] %v193
  %242 = vst [vmem:[%s3 + $0x10] sm:$0xff] %v194
  %243 = vst [vmem:[%s3 + $0x18] sm:$0xff] %v195
  %244 = vst [vmem:[%s3 + $0x20] sm:$0xff] %v196
  %245 = vst [vmem:[%s3 + $0x28] sm:$0xff] %v197
  %246 = vst [vmem:[%s3 + $0x30] sm:$0xff] %v198
  %247 = vst [vmem:[%s3 + $0x38] sm:$0xff] %v199
  %248 = vst [vmem:[%s3 + $0x40] sm:$0xff] %v200
  %249 = vst [vmem:[%s3 + $0x48] sm:$0xff] %v201
  %250 = vst [vmem:[%s3 + $0x50] sm:$0xff] %v202
  %251 = vst [vmem:[%s3 + $0x58] sm:$0xff] %v203
  %252 = vst [vmem:[%s3 + $0x60] sm:$0xff] %v204
  %253 = vst [vmem:[%s3 + $0x68] sm:$0xff] %v205
  %254 = vst [vmem:[%s3 + $0x70] sm:$0xff] %v206
  %255 = vst [vmem:[%s3 + $0x78] sm:$0xff] %v207
  %256 = vst [vmem:[%s3 + $0x80] sm:$0xff] %v208
  %257 = vst [vmem:[%s3 + $0x88] sm:$0xff] %v209
  %258 = vst [vmem:[%s3 + $0x90] sm:$0xff] %v210
  %259 = vst [vmem:[%s3 + $0x98] sm:$0xff] %v211
  %260 = vst [vmem:[%s3 + $0xa0] sm:$0xff] %v212
  %261 = vst [vmem:[%s3 + $0xa8] sm:$0xff] %v213
  %262 = vst [vmem:[%s3 + $0xb0] sm:$0xff] %v214
  %263 = vst [vmem:[%s3 + $0xb8] sm:$0xff] %v215
  %264 = vst [vmem:[%s3 + $0xc0] sm:$0xff] %v216
  %265 = vst [vmem:[%s3 + $0xc8] sm:$0xff] %v217
  %266 = vst [vmem:[%s3 + $0xd0] sm:$0xff] %v218
  %267 = vst [vmem:[%s3 + $0xd8] sm:$0xff] %v219
  %268 = vst [vmem:[%s3 + $0xe0] sm:$0xff] %v220
  %269 = vst [vmem:[%s3 + $0xe8] sm:$0xff] %v221
  %270 = vst [vmem:[%s3 + $0xf0] sm:$0xff] %v222
  %271 = vst [vmem:[%s3 + $0xf8] sm:$0xff] %v223
  %272 = vst [vmem:[%s3 + $0x100] sm:$0xff] %v224
  %273 = vst [vmem:[%s3 + $0x108] sm:$0xff] %v225
  %274 = vst [vmem:[%s3 + $0x110] sm:$0xff] %v226
  %275 = vst [vmem:[%s3 + $0x118] sm:$0xff] %v227
  %276 = vst [vmem:[%s3 + $0x120] sm:$0xff] %v228
  %277 = vst [vmem:[%s3 + $0x128] sm:$0xff] %v229
  %278 = vst [vmem:[%s3 + $0x130] sm:$0xff] %v230
  %279 = vst [vmem:[%s3 + $0x138] sm:$0xff] %v231
  %280 = vst [vmem:[%s3 + $0x140] sm:$0xff] %v232
  %281 = vst [vmem:[%s3 + $0x148] sm:$0xff] %v233
  %282 = vst [vmem:[%s3 + $0x150] sm:$0xff] %v234
  %283 = vst [vmem:[%s3 + $0x158] sm:$0xff] %v235
  %284 = vst [vmem:[%s3 + $0x160] sm:$0xff] %v236
  %285 = vst [vmem:[%s3 + $0x168] sm:$0xff] %v237
  %286 = vst [vmem:[%s3 + $0x170] sm:$0xff] %v238
  %287 = vst [vmem:[%s3 + $0x178] sm:$0xff] %v239
  // Predicated region
  $region14: #{inception_b_forward.10} parent=0 // pred_check
    _
  $region15: #{inception_b_forward.10} parent=0 // pred_check_branch
    %289 = sbr.rel (0) target = $region17
  $region16: #{inception_b_forward.10} parent=0 // pred_region
    _
  $region17: #{inception_b_forward.10} parent=0 // pred_fallthru
    _
  // Predicated region
  $region18: #{inception_b_forward.10} parent=0 // pred_check
    _
  $region19: #{inception_b_forward.10} parent=0 // pred_check_branch
    %291 = sbr.rel (0) target = $region21
  $region20: #{inception_b_forward.10} parent=0 // pred_region
    _
  $region21: #{inception_b_forward.10} parent=0 // pred_fallthru
    _

</llo_original>
